<compile_context>
chip_gen: v7x
topology: tpu7x:2x2x1
jax: 0.10.0
libtpu: 0.0.40
codegen_flags: <defaults>
</compile_context>

<pallas_src>
import jax
import jax.numpy as jnp
from jax.experimental import pallas as pl
from jax.experimental.pallas import tpu as pltpu

# Fixed architecture constants (from the PyTorch Net).
CONV1_OC = 6
CONV2_OC = 16
KH = KW = 5
OC_PAD = 128          # lane-dense padded channel count for conv outputs
FC_PAD = 128          # lane-dense padded width for fc activations
NUM_CLASSES = 10
POOL_OUT_HW2 = 5      # spatial size after conv2 + pool (5x5)


def _round_up(x, m):
    return (x + m - 1) // m * m


def _row_tiling(m, target):
    """Row tile (multiple of 8, <= target) and the padded row count it implies."""
    tile = min(_round_up(m, 8), target)
    m_pad = _round_up(m, tile)
    return tile, m_pad, m_pad // tile


def _pad_rows(x, m_pad):
    m = x.shape[0]
    return x if m == m_pad else jnp.pad(x, ((0, m_pad - m), (0, 0)))


# ---------------------------------------------------------------------------
# Pallas kernels
# ---------------------------------------------------------------------------
def _conv_relu_pool_kernel(x0_ref, x1_ref, x2_ref, x3_ref, w_ref, b_ref, o_ref):
    """o = relu(max over the 4 pool corners of (x_corner @ w) + b).  Lane-dense."""
    w = w_ref[...]
    d0 = jnp.dot(x0_ref[...], w, preferred_element_type=jnp.float32)
    d1 = jnp.dot(x1_ref[...], w, preferred_element_type=jnp.float32)
    d2 = jnp.dot(x2_ref[...], w, preferred_element_type=jnp.float32)
    d3 = jnp.dot(x3_ref[...], w, preferred_element_type=jnp.float32)
    m = jnp.maximum(jnp.maximum(d0, d1), jnp.maximum(d2, d3))
    o_ref[...] = jnp.maximum(m + b_ref[...], 0.0).astype(o_ref.dtype)


def _fc_fused_kernel(x_ref, w1_ref, b1_ref, w2_ref, b2_ref, w3_ref, b3_ref, o_ref):
    """o = (relu(relu(x@w1+b1)@w2+b2))@w3+b3 with all weights VMEM-resident."""
    h = jnp.dot(x_ref[...], w1_ref[...], preferred_element_type=jnp.float32) + b1_ref[...]
    h = jnp.maximum(h, 0.0).astype(w2_ref.dtype)
    h = jnp.dot(h, w2_ref[...], preferred_element_type=jnp.float32) + b2_ref[...]
    h = jnp.maximum(h, 0.0).astype(w3_ref.dtype)
    y = jnp.dot(h, w3_ref[...], preferred_element_type=jnp.float32) + b3_ref[...]
    o_ref[...] = y.astype(o_ref.dtype)


# ---------------------------------------------------------------------------
# Wrappers around pallas_call
# ---------------------------------------------------------------------------
def conv_relu_pool(x_nhwc, w_kp_ocp, b_ocp, *, kh=KH, kw=KW, row_tile_target=512):
    """Fused valid conv (stride 1) + bias + ReLU + 2x2/2 max-pool.

    x_nhwc:   (N, H, W, C)
    w_kp_ocp: (K_pad, OC_pad)  prepared weight, rows ordered (kh, kw, c), zero-padded
    b_ocp:    (1, OC_pad) f32  prepared bias
    returns:  (N, OH//2, OW//2, OC_pad) in the weight's dtype
    """
    n, h, w_sz, c = x_nhwc.shape
    oh, ow = h - kh + 1, w_sz - kw + 1
    poh, pow_ = oh // 2, ow // 2
    k = kh * kw * c
    k_pad, oc_pad = w_kp_ocp.shape
    assert k <= k_pad

    x = x_nhwc.astype(w_kp_ocp.dtype)
    m_rows = n * poh * pow_
    tile, m_pad, ntiles = _row_tiling(m_rows, row_tile_target)

    # im2col: one disjoint patch matrix per 2x2 pooling-window corner (JAX glue,
    # fused by XLA into one gather per corner).  Feature order = (kh, kw, c),
    # zero-padded to k_pad so the kernel sees full 128-lane K blocks; rows
    # zero-padded to m_pad so every grid block is (8,128)-aligned.
    zpad = jnp.zeros((n, poh, pow_, k_pad - k), x.dtype) if k_pad > k else None
    corners = []
    for dh in range(2):
        for dw in range(2):
            slabs = [x[:, dh + i::2, dw + j::2, :][:, :poh, :pow_, :]
                     for i in range(kh) for j in range(kw)]
            if zpad is not None:
                slabs.append(zpad)
            patches = jnp.concatenate(slabs, axis=-1).reshape(m_rows, k_pad)
            corners.append(_pad_rows(patches, m_pad))

    row_spec = pl.BlockSpec((tile, k_pad), lambda i: (i, 0))
    out = pl.pallas_call(
        _conv_relu_pool_kernel,
        out_shape=jax.ShapeDtypeStruct((m_pad, oc_pad), w_kp_ocp.dtype),
        grid=(ntiles,),
        in_specs=[row_spec, row_spec, row_spec, row_spec,
                  pl.BlockSpec((k_pad, oc_pad), lambda i: (0, 0)),
                  pl.BlockSpec((1, oc_pad), lambda i: (0, 0))],
        out_specs=pl.BlockSpec((tile, oc_pad), lambda i: (i, 0)),
        compiler_params=pltpu.CompilerParams(dimension_semantics=("parallel",)),
    )(*corners, w_kp_ocp, b_ocp)
    return out[:m_rows].reshape(n, poh, pow_, oc_pad)


def fc_fused(x, w1, b1, w2, b2, w3, b3, *, row_tile_target=256):
    """Fused fc1(+relu) -> fc2(+relu) -> fc3 on padded, pre-transposed weights."""
    n, k1 = x.shape
    assert w1.shape[0] == k1
    x = x.astype(w1.dtype)
    tile, m_pad, ntiles = _row_tiling(n, row_tile_target)
    x = _pad_rows(x, m_pad)
    const = lambda i: (0, 0)
    out = pl.pallas_call(
        _fc_fused_kernel,
        out_shape=jax.ShapeDtypeStruct((m_pad, w3.shape[1]), jnp.float32),
        grid=(ntiles,),
        in_specs=[pl.BlockSpec((tile, k1), lambda i: (i, 0)),
                  pl.BlockSpec(w1.shape, const), pl.BlockSpec(b1.shape, const),
                  pl.BlockSpec(w2.shape, const), pl.BlockSpec(b2.shape, const),
                  pl.BlockSpec(w3.shape, const), pl.BlockSpec(b3.shape, const)],
        out_specs=pl.BlockSpec((tile, w3.shape[1]), lambda i: (i, 0)),
        compiler_params=pltpu.CompilerParams(dimension_semantics=("parallel",)),
    )(x, w1, b1, w2, b2, w3, b3)
    return out[:n]


# ---------------------------------------------------------------------------
# Parameters (PyTorch-style init) + one-time preparation
# ---------------------------------------------------------------------------
def init_params(key):
    ks = jax.random.split(key, 10)

    def u(k, shape, fan_in):
        bound = 1.0 / jnp.sqrt(fan_in)
        return jax.random.uniform(k, shape, jnp.float32, -bound, bound)

    return {
        "conv1_w": u(ks[0], (CONV1_OC, 3, KH, KW), 3 * KH * KW),
        "conv1_b": u(ks[1], (CONV1_OC,), 3 * KH * KW),
        "conv2_w": u(ks[2], (CONV2_OC, CONV1_OC, KH, KW), CONV1_OC * KH * KW),
        "conv2_b": u(ks[3], (CONV2_OC,), CONV1_OC * KH * KW),
        "fc1_w": u(ks[4], (120, CONV2_OC * 5 * 5), 400),
        "fc1_b": u(ks[5], (120,), 400),
        "fc2_w": u(ks[6], (84, 120), 120),
        "fc2_b": u(ks[7], (84,), 120),
        "fc3_w": u(ks[8], (10, 84), 84),
        "fc3_b": u(ks[9], (10,), 84),
    }


def prepare_params(params, dtype=jnp.bfloat16):
    """One-time weight prep: transpose/permute/zero-pad to lane-dense layouts."""

    def prep_conv(w, b):
        oc, ic, kh, kw = w.shape
        k = kh * kw * ic
        k_pad = _round_up(k, 128)
        wk = jnp.transpose(w, (2, 3, 1, 0)).reshape(k, oc)          # rows = (kh,kw,ic)
        wk = jnp.pad(wk, ((0, k_pad - k), (0, OC_PAD - oc))).astype(dtype)
        bp = jnp.pad(b, (0, OC_PAD - oc)).astype(jnp.float32).reshape(1, OC_PAD)
        return wk, bp

    def prep_fc1(w, b):
        # Fold (a) torch's NCHW flatten order and (b) conv2's channel padding into
        # the weight so the NHWC, channel-padded activations can be used directly.
        out_f = w.shape[0]                                           # 120
        w = w.reshape(out_f, CONV2_OC, POOL_OUT_HW2, POOL_OUT_HW2)   # (o,c,h,w)
        w = jnp.transpose(w, (2, 3, 1, 0))                           # (h,w,c,o)
        w = jnp.pad(w, ((0, 0), (0, 0), (0, OC_PAD - CONV2_OC), (0, FC_PAD - out_f)))
        w = w.reshape(POOL_OUT_HW2 * POOL_OUT_HW2 * OC_PAD, FC_PAD).astype(dtype)
        bp = jnp.pad(b, (0, FC_PAD - out_f)).astype(jnp.float32).reshape(1, FC_PAD)
        return w, bp

    def prep_fc(w, b):
        out_f, in_f = w.shape
        wt = jnp.pad(w.T, ((0, FC_PAD - in_f), (0, FC_PAD - out_f))).astype(dtype)
        bp = jnp.pad(b, (0, FC_PAD - out_f)).astype(jnp.float32).reshape(1, FC_PAD)
        return wt, bp

    c1w, c1b = prep_conv(params["conv1_w"], params["conv1_b"])
    c2w, c2b = prep_conv(params["conv2_w"], params["conv2_b"])
    f1w, f1b = prep_fc1(params["fc1_w"], params["fc1_b"])
    f2w, f2b = prep_fc(params["fc2_w"], params["fc2_b"])
    f3w, f3b = prep_fc(params["fc3_w"], params["fc3_b"])
    return {"c1w": c1w, "c1b": c1b, "c2w": c2w, "c2b": c2b,
            "f1w": f1w, "f1b": f1b, "f2w": f2w, "f2b": f2b,
            "f3w": f3w, "f3b": f3b}


# ---------------------------------------------------------------------------
# Net forward (mirrors the PyTorch module) + plain-JAX reference
# ---------------------------------------------------------------------------
def net_forward(prepared, x_nchw):
    x = jnp.transpose(x_nchw, (0, 2, 3, 1))                              # NHWC once
    x = conv_relu_pool(x, prepared["c1w"], prepared["c1b"])              # (N,14,14,128)
    x = conv_relu_pool(x[..., :CONV1_OC], prepared["c2w"], prepared["c2b"])  # (N,5,5,128)
    n = x.shape[0]
    x = x.reshape(n, POOL_OUT_HW2 * POOL_OUT_HW2 * OC_PAD)               # NHWC flatten
    y = fc_fused(x, prepared["f1w"], prepared["f1b"],
                 prepared["f2w"], prepared["f2b"],
                 prepared["f3w"], prepared["f3b"])                       # (N,128) f32
    return y[:, :NUM_CLASSES]


def reference_forward(params, x_nchw):
    def conv(x, w, b):
        y = jax.lax.conv_general_dilated(
            x, w, window_strides=(1, 1), padding="VALID",
            dimension_numbers=("NCHW", "OIHW", "NCHW"))
        return jax.nn.relu(y + b[None, :, None, None])

    def pool(x):
        return jax.lax.reduce_window(x, -jnp.inf, jax.lax.max,
                                     (1, 1, 2, 2), (1, 1, 2, 2), "VALID")

    x = pool(conv(x_nchw, params["conv1_w"], params["conv1_b"]))
    x = pool(conv(x, params["conv2_w"], params["conv2_b"]))
    x = x.reshape(x.shape[0], -1)
    x = jax.nn.relu(x @ params["fc1_w"].T + params["fc1_b"])
    x = jax.nn.relu(x @ params["fc2_w"].T + params["fc2_b"])
    return x @ params["fc3_w"].T + params["fc3_b"]


if __name__ == "__main__":
    key = jax.random.PRNGKey(0)
    pkey, xkey = jax.random.split(key)
    params = init_params(pkey)
    prepared = prepare_params(params, dtype=jnp.bfloat16)

    # fc1 = Linear(16*5*5, 120) pins the input to 3x32x32 (CIFAR-10); batch = 2.
    x = jax.random.normal(xkey, (2, 3, 32, 32), jnp.float32)

    out = jax.block_until_ready(jax.jit(net_forward)(prepared, x))
    assert out.shape == (2, NUM_CLASSES), out.shape
    assert out.dtype == jnp.float32
    assert bool(jnp.all(jnp.isfinite(out)))

    # correctness vs. plain-JAX f32 reference (bf16 matmul inputs -> loose tol)
    ref = jax.block_until_ready(jax.jit(reference_forward)(params, x))
    max_err = float(jnp.max(jnp.abs(out - ref)))
    assert max_err < 5e-2, f"kernel/reference mismatch: max abs err = {max_err}"

    print("KERNEL_OK")
</pallas_src>

<mosaic_0001>
module attributes {stable_mosaic.version = 11 : i64} {
  func.func @_conv_relu_pool_kernel(%arg0: i32, %arg1: memref<392x128xbf16, #tpu.memory_space<vmem>>, %arg2: memref<392x128xbf16, #tpu.memory_space<vmem>>, %arg3: memref<392x128xbf16, #tpu.memory_space<vmem>>, %arg4: memref<392x128xbf16, #tpu.memory_space<vmem>>, %arg5: memref<128x128xbf16, #tpu.memory_space<vmem>>, %arg6: memref<1x128xf32, #tpu.memory_space<vmem>>, %arg7: memref<392x128xbf16, #tpu.memory_space<vmem>>) attributes {dimension_semantics = [#tpu.dimension_semantics<parallel>], iteration_bounds = array<i64: 1>, scalar_prefetch = 0 : i64, scratch_operands = 0 : i64, tpu.core_type = #tpu.core_type<tc>, window_params = [{transform_indices = @transform_0, window_bounds = array<i64: 392, 128>}, {transform_indices = @transform_1, window_bounds = array<i64: 392, 128>}, {transform_indices = @transform_2, window_bounds = array<i64: 392, 128>}, {transform_indices = @transform_3, window_bounds = array<i64: 392, 128>}, {pipeline_mode = #tpu.pipeline_mode<synchronous>, transform_indices = @transform_4, window_bounds = array<i64: 128, 128>}, {pipeline_mode = #tpu.pipeline_mode<synchronous>, transform_indices = @transform_5, window_bounds = array<i64: 1, 128>}, {transform_indices = @transform_6, window_bounds = array<i64: 392, 128>}]} {
    %c0 = arith.constant 0 : index
    %c0_0 = arith.constant 0 : index
    %0 = vector.load %arg5[%c0, %c0_0] : memref<128x128xbf16, #tpu.memory_space<vmem>>, vector<128x128xbf16>
    %c0_1 = arith.constant 0 : index
    %c0_2 = arith.constant 0 : index
    %1 = vector.load %arg1[%c0_1, %c0_2] : memref<392x128xbf16, #tpu.memory_space<vmem>>, vector<392x128xbf16>
    %cst = arith.constant dense<0.000000e+00> : vector<392x128xf32>
    %2 = tpu.matmul %1, %0, %cst {dimension_numbers = #tpu.dot_dimension_numbers<[1], [0], [0], [1], [0, 0, 1, 1], [], []>} : vector<392x128xbf16>, vector<128x128xbf16>, vector<392x128xf32> -> vector<392x128xf32>
    %c0_3 = arith.constant 0 : index
    %c0_4 = arith.constant 0 : index
    %3 = vector.load %arg2[%c0_3, %c0_4] : memref<392x128xbf16, #tpu.memory_space<vmem>>, vector<392x128xbf16>
    %cst_5 = arith.constant dense<0.000000e+00> : vector<392x128xf32>
    %4 = tpu.matmul %3, %0, %cst_5 {dimension_numbers = #tpu.dot_dimension_numbers<[1], [0], [0], [1], [0, 0, 1, 1], [], []>} : vector<392x128xbf16>, vector<128x128xbf16>, vector<392x128xf32> -> vector<392x128xf32>
    %c0_6 = arith.constant 0 : index
    %c0_7 = arith.constant 0 : index
    %5 = vector.load %arg3[%c0_6, %c0_7] : memref<392x128xbf16, #tpu.memory_space<vmem>>, vector<392x128xbf16>
    %cst_8 = arith.constant dense<0.000000e+00> : vector<392x128xf32>
    %6 = tpu.matmul %5, %0, %cst_8 {dimension_numbers = #tpu.dot_dimension_numbers<[1], [0], [0], [1], [0, 0, 1, 1], [], []>} : vector<392x128xbf16>, vector<128x128xbf16>, vector<392x128xf32> -> vector<392x128xf32>
    %c0_9 = arith.constant 0 : index
    %c0_10 = arith.constant 0 : index
    %7 = vector.load %arg4[%c0_9, %c0_10] : memref<392x128xbf16, #tpu.memory_space<vmem>>, vector<392x128xbf16>
    %cst_11 = arith.constant dense<0.000000e+00> : vector<392x128xf32>
    %8 = tpu.matmul %7, %0, %cst_11 {dimension_numbers = #tpu.dot_dimension_numbers<[1], [0], [0], [1], [0, 0, 1, 1], [], []>} : vector<392x128xbf16>, vector<128x128xbf16>, vector<392x128xf32> -> vector<392x128xf32>
    %9 = arith.maximumf %2, %4 : vector<392x128xf32>
    %10 = arith.maximumf %6, %8 : vector<392x128xf32>
    %11 = arith.maximumf %9, %10 : vector<392x128xf32>
    %c0_12 = arith.constant 0 : index
    %c0_13 = arith.constant 0 : index
    %12 = vector.load %arg6[%c0_12, %c0_13] : memref<1x128xf32, #tpu.memory_space<vmem>>, vector<1x128xf32>
    %13 = vector.broadcast %12 : vector<1x128xf32> to vector<392x128xf32>
    %14 = arith.addf %11, %13 : vector<392x128xf32>
    %cst_14 = arith.constant 0.000000e+00 : f32
    %15 = vector.broadcast %cst_14 : f32 to vector<392x128xf32>
    %16 = arith.maximumf %14, %15 : vector<392x128xf32>
    %17 = arith.truncf %16 : vector<392x128xf32> to vector<392x128xbf16>
    %c0_15 = arith.constant 0 : index
    %c0_16 = arith.constant 0 : index
    %18 = vector.load %arg7[%c0_15, %c0_16] : memref<392x128xbf16, #tpu.memory_space<vmem>>, vector<392x128xbf16>
    tpu.vector_store %arg7[%c0_15, %c0_16], %17 {strides = array<i32>} : memref<392x128xbf16, #tpu.memory_space<vmem>>, vector<392x128xbf16>,
    return
  }
  func.func @transform_0(%arg0: i32) -> (i32, i32) {
    %c0_i32 = arith.constant 0 : i32
    %c0_i32_0 = arith.constant 0 : i32
    return %arg0, %c0_i32 : i32, i32
  }
  func.func @transform_1(%arg0: i32) -> (i32, i32) {
    %c0_i32 = arith.constant 0 : i32
    %c0_i32_0 = arith.constant 0 : i32
    return %arg0, %c0_i32 : i32, i32
  }
  func.func @transform_2(%arg0: i32) -> (i32, i32) {
    %c0_i32 = arith.constant 0 : i32
    %c0_i32_0 = arith.constant 0 : i32
    return %arg0, %c0_i32 : i32, i32
  }
  func.func @transform_3(%arg0: i32) -> (i32, i32) {
    %c0_i32 = arith.constant 0 : i32
    %c0_i32_0 = arith.constant 0 : i32
    return %arg0, %c0_i32 : i32, i32
  }
  func.func @transform_4(%arg0: i32) -> (i32, i32) {
    %c0_i32 = arith.constant 0 : i32
    %c0_i32_0 = arith.constant 0 : i32
    %c0_i32_1 = arith.constant 0 : i32
    return %c0_i32, %c0_i32_0 : i32, i32
  }
  func.func @transform_5(%arg0: i32) -> (i32, i32) {
    %c0_i32 = arith.constant 0 : i32
    %c0_i32_0 = arith.constant 0 : i32
    %c0_i32_1 = arith.constant 0 : i32
    return %c0_i32, %c0_i32_0 : i32, i32
  }
  func.func @transform_6(%arg0: i32) -> (i32, i32) {
    %c0_i32 = arith.constant 0 : i32
    %c0_i32_0 = arith.constant 0 : i32
    return %arg0, %c0_i32 : i32, i32
  }
}

module attributes {stable_mosaic.version = 11 : i64} {
  func.func @_conv_relu_pool_kernel(%arg0: i32, %arg1: memref<56x256xbf16, #tpu.memory_space<vmem>>, %arg2: memref<56x256xbf16, #tpu.memory_space<vmem>>, %arg3: memref<56x256xbf16, #tpu.memory_space<vmem>>, %arg4: memref<56x256xbf16, #tpu.memory_space<vmem>>, %arg5: memref<256x128xbf16, #tpu.memory_space<vmem>>, %arg6: memref<1x128xf32, #tpu.memory_space<vmem>>, %arg7: memref<56x128xbf16, #tpu.memory_space<vmem>>) attributes {dimension_semantics = [#tpu.dimension_semantics<parallel>], iteration_bounds = array<i64: 1>, scalar_prefetch = 0 : i64, scratch_operands = 0 : i64, tpu.core_type = #tpu.core_type<tc>, window_params = [{transform_indices = @transform_0, window_bounds = array<i64: 56, 256>}, {transform_indices = @transform_1, window_bounds = array<i64: 56, 256>}, {transform_indices = @transform_2, window_bounds = array<i64: 56, 256>}, {transform_indices = @transform_3, window_bounds = array<i64: 56, 256>}, {pipeline_mode = #tpu.pipeline_mode<synchronous>, transform_indices = @transform_4, window_bounds = array<i64: 256, 128>}, {pipeline_mode = #tpu.pipeline_mode<synchronous>, transform_indices = @transform_5, window_bounds = array<i64: 1, 128>}, {transform_indices = @transform_6, window_bounds = array<i64: 56, 128>}]} {
    %c0 = arith.constant 0 : index
    %c0_0 = arith.constant 0 : index
    %0 = vector.load %arg5[%c0, %c0_0] : memref<256x128xbf16, #tpu.memory_space<vmem>>, vector<256x128xbf16>
    %c0_1 = arith.constant 0 : index
    %c0_2 = arith.constant 0 : index
    %1 = vector.load %arg1[%c0_1, %c0_2] : memref<56x256xbf16, #tpu.memory_space<vmem>>, vector<56x256xbf16>
    %cst = arith.constant dense<0.000000e+00> : vector<56x128xf32>
    %2 = tpu.matmul %1, %0, %cst {dimension_numbers = #tpu.dot_dimension_numbers<[1], [0], [0], [1], [0, 0, 1, 1], [], []>} : vector<56x256xbf16>, vector<256x128xbf16>, vector<56x128xf32> -> vector<56x128xf32>
    %c0_3 = arith.constant 0 : index
    %c0_4 = arith.constant 0 : index
    %3 = vector.load %arg2[%c0_3, %c0_4] : memref<56x256xbf16, #tpu.memory_space<vmem>>, vector<56x256xbf16>
    %cst_5 = arith.constant dense<0.000000e+00> : vector<56x128xf32>
    %4 = tpu.matmul %3, %0, %cst_5 {dimension_numbers = #tpu.dot_dimension_numbers<[1], [0], [0], [1], [0, 0, 1, 1], [], []>} : vector<56x256xbf16>, vector<256x128xbf16>, vector<56x128xf32> -> vector<56x128xf32>
    %c0_6 = arith.constant 0 : index
    %c0_7 = arith.constant 0 : index
    %5 = vector.load %arg3[%c0_6, %c0_7] : memref<56x256xbf16, #tpu.memory_space<vmem>>, vector<56x256xbf16>
    %cst_8 = arith.constant dense<0.000000e+00> : vector<56x128xf32>
    %6 = tpu.matmul %5, %0, %cst_8 {dimension_numbers = #tpu.dot_dimension_numbers<[1], [0], [0], [1], [0, 0, 1, 1], [], []>} : vector<56x256xbf16>, vector<256x128xbf16>, vector<56x128xf32> -> vector<56x128xf32>
    %c0_9 = arith.constant 0 : index
    %c0_10 = arith.constant 0 : index
    %7 = vector.load %arg4[%c0_9, %c0_10] : memref<56x256xbf16, #tpu.memory_space<vmem>>, vector<56x256xbf16>
    %cst_11 = arith.constant dense<0.000000e+00> : vector<56x128xf32>
    %8 = tpu.matmul %7, %0, %cst_11 {dimension_numbers = #tpu.dot_dimension_numbers<[1], [0], [0], [1], [0, 0, 1, 1], [], []>} : vector<56x256xbf16>, vector<256x128xbf16>, vector<56x128xf32> -> vector<56x128xf32>
    %9 = arith.maximumf %2, %4 : vector<56x128xf32>
    %10 = arith.maximumf %6, %8 : vector<56x128xf32>
    %11 = arith.maximumf %9, %10 : vector<56x128xf32>
    %c0_12 = arith.constant 0 : index
    %c0_13 = arith.constant 0 : index
    %12 = vector.load %arg6[%c0_12, %c0_13] : memref<1x128xf32, #tpu.memory_space<vmem>>, vector<1x128xf32>
    %13 = vector.broadcast %12 : vector<1x128xf32> to vector<56x128xf32>
    %14 = arith.addf %11, %13 : vector<56x128xf32>
    %cst_14 = arith.constant 0.000000e+00 : f32
    %15 = vector.broadcast %cst_14 : f32 to vector<56x128xf32>
    %16 = arith.maximumf %14, %15 : vector<56x128xf32>
    %17 = arith.truncf %16 : vector<56x128xf32> to vector<56x128xbf16>
    %c0_15 = arith.constant 0 : index
    %c0_16 = arith.constant 0 : index
    %18 = vector.load %arg7[%c0_15, %c0_16] : memref<56x128xbf16, #tpu.memory_space<vmem>>, vector<56x128xbf16>
    tpu.vector_store %arg7[%c0_15, %c0_16], %17 {strides = array<i32>} : memref<56x128xbf16, #tpu.memory_space<vmem>>, vector<56x128xbf16>,
    return
  }
  func.func @transform_0(%arg0: i32) -> (i32, i32) {
    %c0_i32 = arith.constant 0 : i32
    %c0_i32_0 = arith.constant 0 : i32
    return %arg0, %c0_i32 : i32, i32
  }
  func.func @transform_1(%arg0: i32) -> (i32, i32) {
    %c0_i32 = arith.constant 0 : i32
    %c0_i32_0 = arith.constant 0 : i32
    return %arg0, %c0_i32 : i32, i32
  }
  func.func @transform_2(%arg0: i32) -> (i32, i32) {
    %c0_i32 = arith.constant 0 : i32
    %c0_i32_0 = arith.constant 0 : i32
    return %arg0, %c0_i32 : i32, i32
  }
  func.func @transform_3(%arg0: i32) -> (i32, i32) {
    %c0_i32 = arith.constant 0 : i32
    %c0_i32_0 = arith.constant 0 : i32
    return %arg0, %c0_i32 : i32, i32
  }
  func.func @transform_4(%arg0: i32) -> (i32, i32) {
    %c0_i32 = arith.constant 0 : i32
    %c0_i32_0 = arith.constant 0 : i32
    %c0_i32_1 = arith.constant 0 : i32
    return %c0_i32, %c0_i32_0 : i32, i32
  }
  func.func @transform_5(%arg0: i32) -> (i32, i32) {
    %c0_i32 = arith.constant 0 : i32
    %c0_i32_0 = arith.constant 0 : i32
    %c0_i32_1 = arith.constant 0 : i32
    return %c0_i32, %c0_i32_0 : i32, i32
  }
  func.func @transform_6(%arg0: i32) -> (i32, i32) {
    %c0_i32 = arith.constant 0 : i32
    %c0_i32_0 = arith.constant 0 : i32
    return %arg0, %c0_i32 : i32, i32
  }
}

module attributes {stable_mosaic.version = 11 : i64} {
  func.func @_fc_fused_kernel(%arg0: i32, %arg1: memref<8x3200xbf16, #tpu.memory_space<vmem>>, %arg2: memref<3200x128xbf16, #tpu.memory_space<vmem>>, %arg3: memref<1x128xf32, #tpu.memory_space<vmem>>, %arg4: memref<128x128xbf16, #tpu.memory_space<vmem>>, %arg5: memref<1x128xf32, #tpu.memory_space<vmem>>, %arg6: memref<128x128xbf16, #tpu.memory_space<vmem>>, %arg7: memref<1x128xf32, #tpu.memory_space<vmem>>, %arg8: memref<8x128xf32, #tpu.memory_space<vmem>>) attributes {dimension_semantics = [#tpu.dimension_semantics<parallel>], iteration_bounds = array<i64: 1>, scalar_prefetch = 0 : i64, scratch_operands = 0 : i64, tpu.core_type = #tpu.core_type<tc>, window_params = [{transform_indices = @transform_0, window_bounds = array<i64: 8, 3200>}, {pipeline_mode = #tpu.pipeline_mode<synchronous>, transform_indices = @transform_1, window_bounds = array<i64: 3200, 128>}, {pipeline_mode = #tpu.pipeline_mode<synchronous>, transform_indices = @transform_2, window_bounds = array<i64: 1, 128>}, {pipeline_mode = #tpu.pipeline_mode<synchronous>, transform_indices = @transform_3, window_bounds = array<i64: 128, 128>}, {pipeline_mode = #tpu.pipeline_mode<synchronous>, transform_indices = @transform_4, window_bounds = array<i64: 1, 128>}, {pipeline_mode = #tpu.pipeline_mode<synchronous>, transform_indices = @transform_5, window_bounds = array<i64: 128, 128>}, {pipeline_mode = #tpu.pipeline_mode<synchronous>, transform_indices = @transform_6, window_bounds = array<i64: 1, 128>}, {transform_indices = @transform_7, window_bounds = array<i64: 8, 128>}]} {
    %c0 = arith.constant 0 : index
    %c0_0 = arith.constant 0 : index
    %0 = vector.load %arg1[%c0, %c0_0] : memref<8x3200xbf16, #tpu.memory_space<vmem>>, vector<8x3200xbf16>
    %c0_1 = arith.constant 0 : index
    %c0_2 = arith.constant 0 : index
    %1 = vector.load %arg2[%c0_1, %c0_2] : memref<3200x128xbf16, #tpu.memory_space<vmem>>, vector<3200x128xbf16>
    %cst = arith.constant dense<0.000000e+00> : vector<8x128xf32>
    %2 = tpu.matmul %0, %1, %cst {dimension_numbers = #tpu.dot_dimension_numbers<[1], [0], [0], [1], [0, 0, 1, 1], [], []>} : vector<8x3200xbf16>, vector<3200x128xbf16>, vector<8x128xf32> -> vector<8x128xf32>
    %c0_3 = arith.constant 0 : index
    %c0_4 = arith.constant 0 : index
    %3 = vector.load %arg3[%c0_3, %c0_4] : memref<1x128xf32, #tpu.memory_space<vmem>>, vector<1x128xf32>
    %4 = vector.broadcast %3 : vector<1x128xf32> to vector<8x128xf32>
    %5 = arith.addf %2, %4 : vector<8x128xf32>
    %cst_5 = arith.constant 0.000000e+00 : f32
    %6 = vector.broadcast %cst_5 : f32 to vector<8x128xf32>
    %7 = arith.maximumf %5, %6 : vector<8x128xf32>
    %8 = arith.truncf %7 : vector<8x128xf32> to vector<8x128xbf16>
    %c0_6 = arith.constant 0 : index
    %c0_7 = arith.constant 0 : index
    %9 = vector.load %arg4[%c0_6, %c0_7] : memref<128x128xbf16, #tpu.memory_space<vmem>>, vector<128x128xbf16>
    %cst_8 = arith.constant dense<0.000000e+00> : vector<8x128xf32>
    %10 = tpu.matmul %8, %9, %cst_8 {dimension_numbers = #tpu.dot_dimension_numbers<[1], [0], [0], [1], [0, 0, 1, 1], [], []>} : vector<8x128xbf16>, vector<128x128xbf16>, vector<8x128xf32> -> vector<8x128xf32>
    %c0_9 = arith.constant 0 : index
    %c0_10 = arith.constant 0 : index
    %11 = vector.load %arg5[%c0_9, %c0_10] : memref<1x128xf32, #tpu.memory_space<vmem>>, vector<1x128xf32>
    %12 = vector.broadcast %11 : vector<1x128xf32> to vector<8x128xf32>
    %13 = arith.addf %10, %12 : vector<8x128xf32>
    %cst_11 = arith.constant 0.000000e+00 : f32
    %14 = vector.broadcast %cst_11 : f32 to vector<8x128xf32>
    %15 = arith.maximumf %13, %14 : vector<8x128xf32>
    %16 = arith.truncf %15 : vector<8x128xf32> to vector<8x128xbf16>
    %c0_12 = arith.constant 0 : index
    %c0_13 = arith.constant 0 : index
    %17 = vector.load %arg6[%c0_12, %c0_13] : memref<128x128xbf16, #tpu.memory_space<vmem>>, vector<128x128xbf16>
    %cst_14 = arith.constant dense<0.000000e+00> : vector<8x128xf32>
    %18 = tpu.matmul %16, %17, %cst_14 {dimension_numbers = #tpu.dot_dimension_numbers<[1], [0], [0], [1], [0, 0, 1, 1], [], []>} : vector<8x128xbf16>, vector<128x128xbf16>, vector<8x128xf32> -> vector<8x128xf32>
    %c0_15 = arith.constant 0 : index
    %c0_16 = arith.constant 0 : index
    %19 = vector.load %arg7[%c0_15, %c0_16] : memref<1x128xf32, #tpu.memory_space<vmem>>, vector<1x128xf32>
    %20 = vector.broadcast %19 : vector<1x128xf32> to vector<8x128xf32>
    %21 = arith.addf %18, %20 : vector<8x128xf32>
    %c0_17 = arith.constant 0 : index
    %c0_18 = arith.constant 0 : index
    %22 = vector.load %arg8[%c0_17, %c0_18] : memref<8x128xf32, #tpu.memory_space<vmem>>, vector<8x128xf32>
    tpu.vector_store %arg8[%c0_17, %c0_18], %21 {strides = array<i32>} : memref<8x128xf32, #tpu.memory_space<vmem>>, vector<8x128xf32>,
    return
  }
  func.func @transform_0(%arg0: i32) -> (i32, i32) {
    %c0_i32 = arith.constant 0 : i32
    %c0_i32_0 = arith.constant 0 : i32
    return %arg0, %c0_i32 : i32, i32
  }
  func.func @transform_1(%arg0: i32) -> (i32, i32) {
    %c0_i32 = arith.constant 0 : i32
    %c0_i32_0 = arith.constant 0 : i32
    %c0_i32_1 = arith.constant 0 : i32
    return %c0_i32, %c0_i32_0 : i32, i32
  }
  func.func @transform_2(%arg0: i32) -> (i32, i32) {
    %c0_i32 = arith.constant 0 : i32
    %c0_i32_0 = arith.constant 0 : i32
    %c0_i32_1 = arith.constant 0 : i32
    return %c0_i32, %c0_i32_0 : i32, i32
  }
  func.func @transform_3(%arg0: i32) -> (i32, i32) {
    %c0_i32 = arith.constant 0 : i32
    %c0_i32_0 = arith.constant 0 : i32
    %c0_i32_1 = arith.constant 0 : i32
    return %c0_i32, %c0_i32_0 : i32, i32
  }
  func.func @transform_4(%arg0: i32) -> (i32, i32) {
    %c0_i32 = arith.constant 0 : i32
    %c0_i32_0 = arith.constant 0 : i32
    %c0_i32_1 = arith.constant 0 : i32
    return %c0_i32, %c0_i32_0 : i32, i32
  }
  func.func @transform_5(%arg0: i32) -> (i32, i32) {
    %c0_i32 = arith.constant 0 : i32
    %c0_i32_0 = arith.constant 0 : i32
    %c0_i32_1 = arith.constant 0 : i32
    return %c0_i32, %c0_i32_0 : i32, i32
  }
  func.func @transform_6(%arg0: i32) -> (i32, i32) {
    %c0_i32 = arith.constant 0 : i32
    %c0_i32_0 = arith.constant 0 : i32
    %c0_i32_1 = arith.constant 0 : i32
    return %c0_i32, %c0_i32_0 : i32, i32
  }
  func.func @transform_7(%arg0: i32) -> (i32, i32) {
    %c0_i32 = arith.constant 0 : i32
    %c0_i32_0 = arith.constant 0 : i32
    return %arg0, %c0_i32 : i32, i32
  }
}

</mosaic_0001>

<llo_original>
// kernel: net_forward.3
$region0: #{net_forward.3}
  #allocation0 [shape = 'u32[]', space=smem, size = 0x4, offset = 0x4, fixed_abs, tag = 'smem constant byte address 0x4 - core index']
  #allocation1 [shape = 'u32[144,128]{1,0:T(1,128)}', space=vmem, size = 0x12000, scoped, tag = 'internal scratch']
  %s0 = inlined_call_operand.vmem [shape: bf16[392,128], index: 0, kind: input, shape index: {}]
  %s1 = inlined_call_operand.vmem [shape: bf16[392,128], index: 1, kind: input, shape index: {}]
  %s2 = inlined_call_operand.vmem [shape: bf16[392,128], index: 2, kind: input, shape index: {}]
  %s3 = inlined_call_operand.vmem [shape: bf16[392,128], index: 3, kind: input, shape index: {}]
  %s4 = inlined_call_operand.vmem [shape: bf16[128,128], index: 4, kind: input, shape index: {}]
  %s5 = inlined_call_operand.vmem [shape: f32[1,128], index: 5, kind: input, shape index: {}]
  %s6 = inlined_call_operand.vmem [shape: bf16[392,128], index: 6, kind: output, shape index: {}]
  %s7 = sld [smem:[#allocation0]]
  $region34: #{net_forward.3} parent=0
    _
  %s9 = ssub.s32 1, %s7
  %s10 = scalar_select 0, %s9, %s7
  // Predicated region
  $region2: #{net_forward.3} parent=0 // pred_check
    _
  $region3: #{net_forward.3} parent=0 // pred_check_branch
    %12 = sbr.rel (0) target = $region5
  $region4: #{net_forward.3} parent=0 // pred_region
    _
  $region5: #{net_forward.3} parent=0 // pred_fallthru
    _
  // Predicated region
  $region6: #{net_forward.3} parent=0 // pred_check
    _
  $region7: #{net_forward.3} parent=0 // pred_check_branch
    %14 = sbr.rel (0) target = $region9
  $region8: #{net_forward.3} parent=0 // pred_region
    _
  $region9: #{net_forward.3} parent=0 // pred_fallthru
    _
  // Predicated region
  $region10: #{net_forward.3} parent=0 // pred_check
    _
  $region11: #{net_forward.3} parent=0 // pred_check_branch
    %16 = sbr.rel (0) target = $region13
  $region12: #{net_forward.3} parent=0 // pred_region
    _
  $region13: #{net_forward.3} parent=0 // pred_fallthru
    _
  // Predicated region
  $region14: #{net_forward.3} parent=0 // pred_check
    _
  $region15: #{net_forward.3} parent=0 // pred_check_branch
    %18 = sbr.rel (0) target = $region17
  $region16: #{net_forward.3} parent=0 // pred_region
    _
  $region17: #{net_forward.3} parent=0 // pred_fallthru
    _
  // Predicated region
  $region18: #{net_forward.3} parent=0 // pred_check
    _
  $region19: #{net_forward.3} parent=0 // pred_check_branch
    %20 = sbr.rel (0) target = $region21
  $region20: #{net_forward.3} parent=0 // pred_region
    _
  $region21: #{net_forward.3} parent=0 // pred_fallthru
    _
  // Predicated region
  $region22: #{net_forward.3} parent=0 // pred_check
    _
  $region23: #{net_forward.3} parent=0 // pred_check_branch
    %22 = sbr.rel (0) target = $region25
  $region24: #{net_forward.3} parent=0 // pred_region
    _
  $region25: #{net_forward.3} parent=0 // pred_fallthru
    _
  %v24 = vld [vmem:[%s4] sm:$0xf]
  %v25 = vld [vmem:[%s4 + $0x4] sm:$0xf]
  %v26 = vld [vmem:[%s4 + $0x8] sm:$0xf]
  %v27 = vld [vmem:[%s4 + $0xc] sm:$0xf]
  %v28 = vld [vmem:[%s4 + $0x10] sm:$0xf]
  %v29 = vld [vmem:[%s4 + $0x14] sm:$0xf]
  %v30 = vld [vmem:[%s4 + $0x18] sm:$0xf]
  %v31 = vld [vmem:[%s4 + $0x1c] sm:$0xf]
  %v32 = vld [vmem:[%s4 + $0x20] sm:$0xf]
  %v33 = vld [vmem:[%s4 + $0x24] sm:$0xf]
  %v34 = vld [vmem:[%s4 + $0x28] sm:$0xf]
  %v35 = vld [vmem:[%s4 + $0x2c] sm:$0xf]
  %v36 = vld [vmem:[%s4 + $0x30] sm:$0xf]
  %v37 = vld [vmem:[%s4 + $0x34] sm:$0xf]
  %v38 = vld [vmem:[%s4 + $0x38] sm:$0xf]
  %v39 = vld [vmem:[%s4 + $0x3c] sm:$0xf]
  %v40 = vld [vmem:[%s0] sm:$0xf]
  %v41 = vld [vmem:[%s0 + $0x4] sm:$0xf]
  %v42 = vld [vmem:[%s0 + $0x8] sm:$0xf]
  %v43 = vld [vmem:[%s0 + $0xc] sm:$0xf]
  %v44 = vld [vmem:[%s0 + $0x10] sm:$0xf]
  %v45 = vld [vmem:[%s0 + $0x14] sm:$0xf]
  %v46 = vld [vmem:[%s0 + $0x18] sm:$0xf]
  %v47 = vld [vmem:[%s0 + $0x1c] sm:$0xf]
  %v48 = vld [vmem:[%s0 + $0x20] sm:$0xf]
  %v49 = vld [vmem:[%s0 + $0x24] sm:$0xf]
  %v50 = vld [vmem:[%s0 + $0x28] sm:$0xf]
  %v51 = vld [vmem:[%s0 + $0x2c] sm:$0xf]
  %v52 = vld [vmem:[%s0 + $0x30] sm:$0xf]
  %v53 = vld [vmem:[%s0 + $0x34] sm:$0xf]
  %v54 = vld [vmem:[%s0 + $0x38] sm:$0xf]
  %v55 = vld [vmem:[%s0 + $0x3c] sm:$0xf]
  %v56 = vld [vmem:[%s0 + $0x40] sm:$0xf]
  %v57 = vld [vmem:[%s0 + $0x44] sm:$0xf]
  %v58 = vld [vmem:[%s0 + $0x48] sm:$0xf]
  %v59 = vld [vmem:[%s0 + $0x4c] sm:$0xf]
  %v60 = vld [vmem:[%s0 + $0x50] sm:$0xf]
  %v61 = vld [vmem:[%s0 + $0x54] sm:$0xf]
  %v62 = vld [vmem:[%s0 + $0x58] sm:$0xf]
  %v63 = vld [vmem:[%s0 + $0x5c] sm:$0xf]
  %v64 = vld [vmem:[%s0 + $0x60] sm:$0xf]
  %v65 = vld [vmem:[%s0 + $0x64] sm:$0xf]
  %v66 = vld [vmem:[%s0 + $0x68] sm:$0xf]
  %v67 = vld [vmem:[%s0 + $0x6c] sm:$0xf]
  %v68 = vld [vmem:[%s0 + $0x70] sm:$0xf]
  %v69 = vld [vmem:[%s0 + $0x74] sm:$0xf]
  %v70 = vld [vmem:[%s0 + $0x78] sm:$0xf]
  %v71 = vld [vmem:[%s0 + $0x7c] sm:$0xf]
  %v72 = vld [vmem:[%s0 + $0x80] sm:$0xf]
  %v73 = vld [vmem:[%s0 + $0x84] sm:$0xf]
  %v74 = vld [vmem:[%s0 + $0x88] sm:$0xf]
  %v75 = vld [vmem:[%s0 + $0x8c] sm:$0xf]
  %v76 = vld [vmem:[%s0 + $0x90] sm:$0xf]
  %v77 = vld [vmem:[%s0 + $0x94] sm:$0xf]
  %v78 = vld [vmem:[%s0 + $0x98] sm:$0xf]
  %v79 = vld [vmem:[%s0 + $0x9c] sm:$0xf]
  %v80 = vld [vmem:[%s0 + $0xa0] sm:$0xf]
  %v81 = vld [vmem:[%s0 + $0xa4] sm:$0xf]
  %v82 = vld [vmem:[%s0 + $0xa8] sm:$0xf]
  %v83 = vld [vmem:[%s0 + $0xac] sm:$0xf]
  %v84 = vld [vmem:[%s0 + $0xb0] sm:$0xf]
  %v85 = vld [vmem:[%s0 + $0xb4] sm:$0xf]
  %v86 = vld [vmem:[%s0 + $0xb8] sm:$0xf]
  %v87 = vld [vmem:[%s0 + $0xbc] sm:$0xf]
  %v88 = vld [vmem:[%s0 + $0xc0] sm:$0xf]
  %v138 = vunpack.c.l.b16 %v40
  %v139 = vunpack.c.l.b16 %v41
  %v140 = vunpack.c.l.b16 %v42
  %v141 = vunpack.c.l.b16 %v43
  %v142 = vunpack.c.l.b16 %v44
  %v143 = vunpack.c.l.b16 %v45
  %v144 = vunpack.c.l.b16 %v46
  %v145 = vunpack.c.l.b16 %v47
  %v146 = vunpack.c.l.b16 %v48
  %v147 = vunpack.c.l.b16 %v49
  %v148 = vunpack.c.l.b16 %v50
  %v149 = vunpack.c.l.b16 %v51
  %v150 = vunpack.c.l.b16 %v52
  %v151 = vunpack.c.l.b16 %v53
  %v152 = vunpack.c.l.b16 %v54
  %v153 = vunpack.c.l.b16 %v55
  %v154 = vunpack.c.l.b16 %v56
  %v155 = vunpack.c.l.b16 %v57
  %v156 = vunpack.c.l.b16 %v58
  %v157 = vunpack.c.l.b16 %v59
  %v158 = vunpack.c.l.b16 %v60
  %v159 = vunpack.c.l.b16 %v61
  %v160 = vunpack.c.l.b16 %v62
  %v161 = vunpack.c.l.b16 %v63
  %v162 = vunpack.c.l.b16 %v64
  %v163 = vunpack.c.l.b16 %v65
  %v164 = vunpack.c.l.b16 %v66
  %v165 = vunpack.c.l.b16 %v67
  %v166 = vunpack.c.l.b16 %v68
  %v167 = vunpack.c.l.b16 %v69
  %v168 = vunpack.c.l.b16 %v70
  %v169 = vunpack.c.l.b16 %v71
  %v170 = vunpack.c.l.b16 %v72
  %v171 = vunpack.c.l.b16 %v73
  %v172 = vunpack.c.l.b16 %v74
  %v173 = vunpack.c.l.b16 %v75
  %v174 = vunpack.c.l.b16 %v76
  %v175 = vunpack.c.l.b16 %v77
  %v176 = vunpack.c.l.b16 %v78
  %v177 = vunpack.c.l.b16 %v79
  %v178 = vunpack.c.l.b16 %v80
  %v179 = vunpack.c.l.b16 %v81
  %v180 = vunpack.c.l.b16 %v82
  %v181 = vunpack.c.l.b16 %v83
  %v182 = vunpack.c.l.b16 %v84
  %v183 = vunpack.c.l.b16 %v85
  %v184 = vunpack.c.l.b16 %v86
  %v185 = vunpack.c.l.b16 %v87
  %v186 = vunpack.c.l.b16 %v88
  %v187 = vpack.c.b16 %v139, %v138
  %v188 = vpack.c.b16 %v141, %v140
  %v189 = vpack.c.b16 %v143, %v142
  %v190 = vpack.c.b16 %v145, %v144
  %v191 = vpack.c.b16 %v147, %v146
  %v192 = vpack.c.b16 %v149, %v148
  %v193 = vpack.c.b16 %v151, %v150
  %v194 = vpack.c.b16 %v153, %v152
  %v195 = vpack.c.b16 %v155, %v154
  %v196 = vpack.c.b16 %v157, %v156
  %v197 = vpack.c.b16 %v159, %v158
  %v198 = vpack.c.b16 %v161, %v160
  %v199 = vpack.c.b16 %v163, %v162
  %v200 = vpack.c.b16 %v165, %v164
  %v201 = vpack.c.b16 %v167, %v166
  %v202 = vpack.c.b16 %v169, %v168
  %v203 = vpack.c.b16 %v171, %v170
  %v204 = vpack.c.b16 %v173, %v172
  %v205 = vpack.c.b16 %v175, %v174
  %v206 = vpack.c.b16 %v177, %v176
  %v207 = vpack.c.b16 %v179, %v178
  %v208 = vpack.c.b16 %v181, %v180
  %v209 = vpack.c.b16 %v183, %v182
  %v210 = vpack.c.b16 %v185, %v184
  %v211 = vpack.c.b16 %v186, %v186
  %v253 = vunpack.c.l.b16 %v24
  %v254 = vunpack.c.l.b16 %v25
  %v255 = vunpack.c.l.b16 %v26
  %v256 = vunpack.c.l.b16 %v27
  %v257 = vunpack.c.l.b16 %v28
  %v258 = vunpack.c.l.b16 %v29
  %v259 = vunpack.c.l.b16 %v30
  %v260 = vunpack.c.l.b16 %v31
  %v261 = vunpack.c.l.b16 %v32
  %v262 = vunpack.c.l.b16 %v33
  %v263 = vunpack.c.l.b16 %v34
  %v264 = vunpack.c.l.b16 %v35
  %v265 = vunpack.c.l.b16 %v36
  %v266 = vunpack.c.l.b16 %v37
  %v267 = vunpack.c.l.b16 %v38
  %v268 = vunpack.c.l.b16 %v39
  %v269 = vpack.c.b16 %v254, %v253
  %v270 = vpack.c.b16 %v256, %v255
  %v271 = vpack.c.b16 %v258, %v257
  %v272 = vpack.c.b16 %v260, %v259
  %v273 = vpack.c.b16 %v262, %v261
  %v274 = vpack.c.b16 %v264, %v263
  %v275 = vpack.c.b16 %v266, %v265
  %v276 = vpack.c.b16 %v268, %v267
  %285 = vmatprep.subr.bf16.mxu0 0
  %286 = vmatpush1.bf16.msra.mxu0 %v269
  %287 = vmatprep.subr.bf16.mxu0 0
  %288 = vmatpush1.bf16.msra.mxu0 %v270
  %289 = vmatprep.subr.bf16.mxu0 0
  %290 = vmatpush1.bf16.msra.mxu0 %v271
  %291 = vmatprep.subr.bf16.mxu0 0
  %292 = vmatpush1.bf16.msra.mxu0 %v272
  %293 = vmatprep.subr.bf16.mxu0 0
  %294 = vmatpush1.bf16.msra.mxu0 %v273
  %295 = vmatprep.subr.bf16.mxu0 0
  %296 = vmatpush1.bf16.msra.mxu0 %v274
  %297 = vmatprep.subr.bf16.mxu0 0
  %298 = vmatpush1.bf16.msra.mxu0 %v275
  %299 = vmatprep.subr.bf16.mxu0 0
  %300 = vmatpush1.bf16.msra.mxu0 %v276
  %301 = vmatprep.subr.bf16.mxu0 0
  %302 = vmatpush1.bf16.msra.mxu0 0
  %303 = vmatprep.subr.bf16.mxu0 0
  %304 = vmatpush1.bf16.msra.mxu0 0
  %305 = vmatprep.subr.bf16.mxu0 0
  %306 = vmatpush1.bf16.msra.mxu0 0
  %307 = vmatprep.subr.bf16.mxu0 0
  %308 = vmatpush1.bf16.msra.mxu0 0
  %309 = vmatprep.subr.bf16.mxu0 0
  %310 = vmatpush1.bf16.msra.mxu0 0
  %311 = vmatprep.subr.bf16.mxu0 0
  %312 = vmatpush1.bf16.msra.mxu0 0
  %313 = vmatprep.subr.bf16.mxu0 0
  %314 = vmatpush1.bf16.msra.mxu0 0
  %315 = vmatprep.subr.bf16.mxu0 0
  %316 = vmatpush1.bf16.msra.mxu0 0
  %317 = vmatprep.mubr.bf16.mxu0 0
  %318 = vmatmul.mubr.bf16.gmra.mrb[0].mxu0 %v187
  %v319 = vpop.f32.mrb[0].mxu0
  %v320 = vadd.f32 0.0, %v319
  %v321 = vpop.f32.mrb[0].mxu0
  %v322 = vpop.f32.mrb[0].mxu0
  %v323 = vadd.f32 0.0, %v322
  %v324 = vpop.f32.mrb[0].mxu0
  %325 = vmatprep.mubr.bf16.mxu0 0
  %326 = vmatmul.mubr.bf16.gmra.mrb[0].mxu0 %v188
  %v327 = vpop.f32.mrb[0].mxu0
  %v328 = vadd.f32 0.0, %v327
  %v329 = vpop.f32.mrb[0].mxu0
  %v330 = vpop.f32.mrb[0].mxu0
  %v331 = vadd.f32 0.0, %v330
  %v332 = vpop.f32.mrb[0].mxu0
  %333 = vmatprep.mubr.bf16.mxu0 0
  %334 = vmatmul.mubr.bf16.gmra.mrb[0].mxu0 %v189
  %v335 = vpop.f32.mrb[0].mxu0
  %v336 = vadd.f32 0.0, %v335
  %v337 = vpop.f32.mrb[0].mxu0
  %v338 = vpop.f32.mrb[0].mxu0
  %v339 = vadd.f32 0.0, %v338
  %v340 = vpop.f32.mrb[0].mxu0
  %341 = vmatprep.mubr.bf16.mxu0 0
  %342 = vmatmul.mubr.bf16.gmra.mrb[0].mxu0 %v190
  %v343 = vpop.f32.mrb[0].mxu0
  %v344 = vadd.f32 0.0, %v343
  %v345 = vpop.f32.mrb[0].mxu0
  %v346 = vpop.f32.mrb[0].mxu0
  %v347 = vadd.f32 0.0, %v346
  %v348 = vpop.f32.mrb[0].mxu0
  %349 = vmatprep.mubr.bf16.mxu0 0
  %350 = vmatmul.mubr.bf16.gmra.mrb[0].mxu0 %v191
  %v351 = vpop.f32.mrb[0].mxu0
  %v352 = vadd.f32 0.0, %v351
  %v353 = vpop.f32.mrb[0].mxu0
  %v354 = vpop.f32.mrb[0].mxu0
  %v355 = vadd.f32 0.0, %v354
  %v356 = vpop.f32.mrb[0].mxu0
  %357 = vmatprep.mubr.bf16.mxu0 0
  %358 = vmatmul.mubr.bf16.gmra.mrb[0].mxu0 %v192
  %v359 = vpop.f32.mrb[0].mxu0
  %v360 = vadd.f32 0.0, %v359
  %v361 = vpop.f32.mrb[0].mxu0
  %v362 = vpop.f32.mrb[0].mxu0
  %v363 = vadd.f32 0.0, %v362
  %v364 = vpop.f32.mrb[0].mxu0
  %365 = vmatprep.mubr.bf16.mxu0 0
  %366 = vmatmul.mubr.bf16.gmra.mrb[0].mxu0 %v193
  %v367 = vpop.f32.mrb[0].mxu0
  %v368 = vadd.f32 0.0, %v367
  %v369 = vpop.f32.mrb[0].mxu0
  %v370 = vpop.f32.mrb[0].mxu0
  %v371 = vadd.f32 0.0, %v370
  %v372 = vpop.f32.mrb[0].mxu0
  %373 = vmatprep.mubr.bf16.mxu0 0
  %374 = vmatmul.mubr.bf16.gmra.mrb[0].mxu0 %v194
  %v375 = vpop.f32.mrb[0].mxu0
  %v376 = vadd.f32 0.0, %v375
  %v377 = vpop.f32.mrb[0].mxu0
  %v378 = vpop.f32.mrb[0].mxu0
  %v379 = vadd.f32 0.0, %v378
  %v380 = vpop.f32.mrb[0].mxu0
  %381 = vmatprep.mubr.bf16.mxu0 0
  %382 = vmatmul.mubr.bf16.gmra.mrb[0].mxu0 %v195
  %v383 = vpop.f32.mrb[0].mxu0
  %v384 = vadd.f32 0.0, %v383
  %v385 = vpop.f32.mrb[0].mxu0
  %v386 = vpop.f32.mrb[0].mxu0
  %v387 = vadd.f32 0.0, %v386
  %v388 = vpop.f32.mrb[0].mxu0
  %389 = vmatprep.mubr.bf16.mxu0 0
  %390 = vmatmul.mubr.bf16.gmra.mrb[0].mxu0 %v196
  %v391 = vpop.f32.mrb[0].mxu0
  %v392 = vadd.f32 0.0, %v391
  %v393 = vpop.f32.mrb[0].mxu0
  %v394 = vpop.f32.mrb[0].mxu0
  %v395 = vadd.f32 0.0, %v394
  %v396 = vpop.f32.mrb[0].mxu0
  %397 = vmatprep.mubr.bf16.mxu0 0
  %398 = vmatmul.mubr.bf16.gmra.mrb[0].mxu0 %v197
  %v399 = vpop.f32.mrb[0].mxu0
  %v400 = vadd.f32 0.0, %v399
  %v401 = vpop.f32.mrb[0].mxu0
  %v402 = vpop.f32.mrb[0].mxu0
  %v403 = vadd.f32 0.0, %v402
  %v404 = vpop.f32.mrb[0].mxu0
  %405 = vmatprep.mubr.bf16.mxu0 0
  %406 = vmatmul.mubr.bf16.gmra.mrb[0].mxu0 %v198
  %v407 = vpop.f32.mrb[0].mxu0
  %v408 = vadd.f32 0.0, %v407
  %v409 = vpop.f32.mrb[0].mxu0
  %v410 = vpop.f32.mrb[0].mxu0
  %v411 = vadd.f32 0.0, %v410
  %v412 = vpop.f32.mrb[0].mxu0
  %413 = vmatprep.mubr.bf16.mxu0 0
  %414 = vmatmul.mubr.bf16.gmra.mrb[0].mxu0 %v199
  %v415 = vpop.f32.mrb[0].mxu0
  %v416 = vadd.f32 0.0, %v415
  %v417 = vpop.f32.mrb[0].mxu0
  %v418 = vpop.f32.mrb[0].mxu0
  %v419 = vadd.f32 0.0, %v418
  %v420 = vpop.f32.mrb[0].mxu0
  %421 = vmatprep.mubr.bf16.mxu0 0
  %422 = vmatmul.mubr.bf16.gmra.mrb[0].mxu0 %v200
  %v423 = vpop.f32.mrb[0].mxu0
  %v424 = vadd.f32 0.0, %v423
  %v425 = vpop.f32.mrb[0].mxu0
  %v426 = vpop.f32.mrb[0].mxu0
  %v427 = vadd.f32 0.0, %v426
  %v428 = vpop.f32.mrb[0].mxu0
  %429 = vmatprep.mubr.bf16.mxu0 0
  %430 = vmatmul.mubr.bf16.gmra.mrb[0].mxu0 %v201
  %v431 = vpop.f32.mrb[0].mxu0
  %v432 = vadd.f32 0.0, %v431
  %v433 = vpop.f32.mrb[0].mxu0
  %v434 = vpop.f32.mrb[0].mxu0
  %v435 = vadd.f32 0.0, %v434
  %v436 = vpop.f32.mrb[0].mxu0
  %437 = vmatprep.mubr.bf16.mxu0 0
  %438 = vmatmul.mubr.bf16.gmra.mrb[0].mxu0 %v202
  %v439 = vpop.f32.mrb[0].mxu0
  %v440 = vadd.f32 0.0, %v439
  %v441 = vpop.f32.mrb[0].mxu0
  %v442 = vpop.f32.mrb[0].mxu0
  %v443 = vadd.f32 0.0, %v442
  %v444 = vpop.f32.mrb[0].mxu0
  %445 = vmatprep.mubr.bf16.mxu0 0
  %446 = vmatmul.mubr.bf16.gmra.mrb[0].mxu0 %v203
  %v447 = vpop.f32.mrb[0].mxu0
  %v448 = vadd.f32 0.0, %v447
  %v449 = vpop.f32.mrb[0].mxu0
  %v450 = vpop.f32.mrb[0].mxu0
  %v451 = vadd.f32 0.0, %v450
  %v452 = vpop.f32.mrb[0].mxu0
  %453 = vmatprep.mubr.bf16.mxu0 0
  %454 = vmatmul.mubr.bf16.gmra.mrb[0].mxu0 %v204
  %v455 = vpop.f32.mrb[0].mxu0
  %v456 = vadd.f32 0.0, %v455
  %v457 = vpop.f32.mrb[0].mxu0
  %v458 = vpop.f32.mrb[0].mxu0
  %v459 = vadd.f32 0.0, %v458
  %v460 = vpop.f32.mrb[0].mxu0
  %461 = vmatprep.mubr.bf16.mxu0 0
  %462 = vmatmul.mubr.bf16.gmra.mrb[0].mxu0 %v205
  %v463 = vpop.f32.mrb[0].mxu0
  %v464 = vadd.f32 0.0, %v463
  %v465 = vpop.f32.mrb[0].mxu0
  %v466 = vpop.f32.mrb[0].mxu0
  %v467 = vadd.f32 0.0, %v466
  %v468 = vpop.f32.mrb[0].mxu0
  %469 = vmatprep.mubr.bf16.mxu0 0
  %470 = vmatmul.mubr.bf16.gmra.mrb[0].mxu0 %v206
  %v471 = vpop.f32.mrb[0].mxu0
  %v472 = vadd.f32 0.0, %v471
  %v473 = vpop.f32.mrb[0].mxu0
  %v474 = vpop.f32.mrb[0].mxu0
  %v475 = vadd.f32 0.0, %v474
  %v476 = vpop.f32.mrb[0].mxu0
  %477 = vmatprep.mubr.bf16.mxu0 0
  %478 = vmatmul.mubr.bf16.gmra.mrb[0].mxu0 %v207
  %v479 = vpop.f32.mrb[0].mxu0
  %v480 = vadd.f32 0.0, %v479
  %v481 = vpop.f32.mrb[0].mxu0
  %v482 = vpop.f32.mrb[0].mxu0
  %v483 = vadd.f32 0.0, %v482
  %v484 = vpop.f32.mrb[0].mxu0
  %485 = vmatprep.mubr.bf16.mxu0 0
  %486 = vmatmul.mubr.bf16.gmra.mrb[0].mxu0 %v208
  %v487 = vpop.f32.mrb[0].mxu0
  %v488 = vadd.f32 0.0, %v487
  %v489 = vpop.f32.mrb[0].mxu0
  %v490 = vpop.f32.mrb[0].mxu0
  %v491 = vadd.f32 0.0, %v490
  %v492 = vpop.f32.mrb[0].mxu0
  %493 = vmatprep.mubr.bf16.mxu0 0
  %494 = vmatmul.mubr.bf16.gmra.mrb[0].mxu0 %v209
  %v495 = vpop.f32.mrb[0].mxu0
  %v496 = vadd.f32 0.0, %v495
  %v497 = vpop.f32.mrb[0].mxu0
  %v498 = vpop.f32.mrb[0].mxu0
  %v499 = vadd.f32 0.0, %v498
  %v500 = vpop.f32.mrb[0].mxu0
  %501 = vmatprep.mubr.bf16.mxu0 0
  %502 = vmatmul.mubr.bf16.gmra.mrb[0].mxu0 %v210
  %v503 = vpop.f32.mrb[0].mxu0
  %v504 = vadd.f32 0.0, %v503
  %v505 = vpop.f32.mrb[0].mxu0
  %v506 = vpop.f32.mrb[0].mxu0
  %v507 = vadd.f32 0.0, %v506
  %v508 = vpop.f32.mrb[0].mxu0
  %509 = vmatprep.mubr.bf16.mxu0 0
  %510 = vmatmul.mubr.bf16.gmra.mrb[0].mxu0 %v211
  %v511 = vpop.f32.mrb[0].mxu0
  %v512 = vadd.f32 0.0, %v511
  %v513 = vpop.f32.mrb[0].mxu0
  %v514 = vpop.f32.mrb[0].mxu0
  %v515 = vpop.f32.mrb[0].mxu0
  %516 = vdwg.mxu0
  %v517 = vld [vmem:[%s1] sm:$0xf]
  %v518 = vld [vmem:[%s1 + $0x4] sm:$0xf]
  %v519 = vld [vmem:[%s1 + $0x8] sm:$0xf]
  %v520 = vld [vmem:[%s1 + $0xc] sm:$0xf]
  %v521 = vld [vmem:[%s1 + $0x10] sm:$0xf]
  %v522 = vld [vmem:[%s1 + $0x14] sm:$0xf]
  %v523 = vld [vmem:[%s1 + $0x18] sm:$0xf]
  %v524 = vld [vmem:[%s1 + $0x1c] sm:$0xf]
  %v525 = vld [vmem:[%s1 + $0x20] sm:$0xf]
  %v526 = vld [vmem:[%s1 + $0x24] sm:$0xf]
  %v527 = vld [vmem:[%s1 + $0x28] sm:$0xf]
  %v528 = vld [vmem:[%s1 + $0x2c] sm:$0xf]
  %v529 = vld [vmem:[%s1 + $0x30] sm:$0xf]
  %v530 = vld [vmem:[%s1 + $0x34] sm:$0xf]
  %v531 = vld [vmem:[%s1 + $0x38] sm:$0xf]
  %v532 = vld [vmem:[%s1 + $0x3c] sm:$0xf]
  %v533 = vld [vmem:[%s1 + $0x40] sm:$0xf]
  %v534 = vld [vmem:[%s1 + $0x44] sm:$0xf]
  %v535 = vld [vmem:[%s1 + $0x48] sm:$0xf]
  %v536 = vld [vmem:[%s1 + $0x4c] sm:$0xf]
  %v537 = vld [vmem:[%s1 + $0x50] sm:$0xf]
  %v538 = vld [vmem:[%s1 + $0x54] sm:$0xf]
  %v539 = vld [vmem:[%s1 + $0x58] sm:$0xf]
  %v540 = vld [vmem:[%s1 + $0x5c] sm:$0xf]
  %v541 = vld [vmem:[%s1 + $0x60] sm:$0xf]
  %v542 = vld [vmem:[%s1 + $0x64] sm:$0xf]
  %v543 = vld [vmem:[%s1 + $0x68] sm:$0xf]
  %v544 = vld [vmem:[%s1 + $0x6c] sm:$0xf]
  %v545 = vld [vmem:[%s1 + $0x70] sm:$0xf]
  %v546 = vld [vmem:[%s1 + $0x74] sm:$0xf]
  %v547 = vld [vmem:[%s1 + $0x78] sm:$0xf]
  %v548 = vld [vmem:[%s1 + $0x7c] sm:$0xf]
  %v549 = vld [vmem:[%s1 + $0x80] sm:$0xf]
  %v550 = vld [vmem:[%s1 + $0x84] sm:$0xf]
  %v551 = vld [vmem:[%s1 + $0x88] sm:$0xf]
  %v552 = vld [vmem:[%s1 + $0x8c] sm:$0xf]
  %v553 = vld [vmem:[%s1 + $0x90] sm:$0xf]
  %v554 = vld [vmem:[%s1 + $0x94] sm:$0xf]
  %v555 = vld [vmem:[%s1 + $0x98] sm:$0xf]
  %v556 = vld [vmem:[%s1 + $0x9c] sm:$0xf]
  %v557 = vld [vmem:[%s1 + $0xa0] sm:$0xf]
  %v558 = vld [vmem:[%s1 + $0xa4] sm:$0xf]
  %v559 = vld [vmem:[%s1 + $0xa8] sm:$0xf]
  %v560 = vld [vmem:[%s1 + $0xac] sm:$0xf]
  %v561 = vld [vmem:[%s1 + $0xb0] sm:$0xf]
  %v562 = vld [vmem:[%s1 + $0xb4] sm:$0xf]
  %v563 = vld [vmem:[%s1 + $0xb8] sm:$0xf]
  %v564 = vld [vmem:[%s1 + $0xbc] sm:$0xf]
  %v565 = vld [vmem:[%s1 + $0xc0] sm:$0xf]
  %v615 = vunpack.c.l.b16 %v517
  %v616 = vunpack.c.l.b16 %v518
  %v617 = vunpack.c.l.b16 %v519
  %v618 = vunpack.c.l.b16 %v520
  %v619 = vunpack.c.l.b16 %v521
  %v620 = vunpack.c.l.b16 %v522
  %v621 = vunpack.c.l.b16 %v523
  %v622 = vunpack.c.l.b16 %v524
  %v623 = vunpack.c.l.b16 %v525
  %v624 = vunpack.c.l.b16 %v526
  %v625 = vunpack.c.l.b16 %v527
  %v626 = vunpack.c.l.b16 %v528
  %v627 = vunpack.c.l.b16 %v529
  %v628 = vunpack.c.l.b16 %v530
  %v629 = vunpack.c.l.b16 %v531
  %v630 = vunpack.c.l.b16 %v532
  %v631 = vunpack.c.l.b16 %v533
  %v632 = vunpack.c.l.b16 %v534
  %v633 = vunpack.c.l.b16 %v535
  %v634 = vunpack.c.l.b16 %v536
  %v635 = vunpack.c.l.b16 %v537
  %v636 = vunpack.c.l.b16 %v538
  %v637 = vunpack.c.l.b16 %v539
  %v638 = vunpack.c.l.b16 %v540
  %v639 = vunpack.c.l.b16 %v541
  %v640 = vunpack.c.l.b16 %v542
  %v641 = vunpack.c.l.b16 %v543
  %v642 = vunpack.c.l.b16 %v544
  %v643 = vunpack.c.l.b16 %v545
  %v644 = vunpack.c.l.b16 %v546
  %v645 = vunpack.c.l.b16 %v547
  %v646 = vunpack.c.l.b16 %v548
  %v647 = vunpack.c.l.b16 %v549
  %v648 = vunpack.c.l.b16 %v550
  %v649 = vunpack.c.l.b16 %v551
  %v650 = vunpack.c.l.b16 %v552
  %v651 = vunpack.c.l.b16 %v553
  %v652 = vunpack.c.l.b16 %v554
  %v653 = vunpack.c.l.b16 %v555
  %v654 = vunpack.c.l.b16 %v556
  %v655 = vunpack.c.l.b16 %v557
  %v656 = vunpack.c.l.b16 %v558
  %v657 = vunpack.c.l.b16 %v559
  %v658 = vunpack.c.l.b16 %v560
  %v659 = vunpack.c.l.b16 %v561
  %v660 = vunpack.c.l.b16 %v562
  %v661 = vunpack.c.l.b16 %v563
  %v662 = vunpack.c.l.b16 %v564
  %v663 = vunpack.c.l.b16 %v565
  %v664 = vpack.c.b16 %v616, %v615
  %v665 = vpack.c.b16 %v618, %v617
  %v666 = vpack.c.b16 %v620, %v619
  %v667 = vpack.c.b16 %v622, %v621
  %v668 = vpack.c.b16 %v624, %v623
  %v669 = vpack.c.b16 %v626, %v625
  %v670 = vpack.c.b16 %v628, %v627
  %v671 = vpack.c.b16 %v630, %v629
  %v672 = vpack.c.b16 %v632, %v631
  %v673 = vpack.c.b16 %v634, %v633
  %v674 = vpack.c.b16 %v636, %v635
  %v675 = vpack.c.b16 %v638, %v637
  %v676 = vpack.c.b16 %v640, %v639
  %v677 = vpack.c.b16 %v642, %v641
  %v678 = vpack.c.b16 %v644, %v643
  %v679 = vpack.c.b16 %v646, %v645
  %v680 = vpack.c.b16 %v648, %v647
  %v681 = vpack.c.b16 %v650, %v649
  %v682 = vpack.c.b16 %v652, %v651
  %v683 = vpack.c.b16 %v654, %v653
  %v684 = vpack.c.b16 %v656, %v655
  %v685 = vpack.c.b16 %v658, %v657
  %v686 = vpack.c.b16 %v660, %v659
  %v687 = vpack.c.b16 %v662, %v661
  %v688 = vpack.c.b16 %v663, %v663
  %714 = vmatprep.subr.bf16.mxu0 0
  %715 = vmatpush1.bf16.msra.mxu0 %v269
  %716 = vmatprep.subr.bf16.mxu0 0
  %717 = vmatpush1.bf16.msra.mxu0 %v270
  %718 = vmatprep.subr.bf16.mxu0 0
  %719 = vmatpush1.bf16.msra.mxu0 %v271
  %720 = vmatprep.subr.bf16.mxu0 0
  %721 = vmatpush1.bf16.msra.mxu0 %v272
  %722 = vmatprep.subr.bf16.mxu0 0
  %723 = vmatpush1.bf16.msra.mxu0 %v273
  %724 = vmatprep.subr.bf16.mxu0 0
  %725 = vmatpush1.bf16.msra.mxu0 %v274
  %726 = vmatprep.subr.bf16.mxu0 0
  %727 = vmatpush1.bf16.msra.mxu0 %v275
  %728 = vmatprep.subr.bf16.mxu0 0
  %729 = vmatpush1.bf16.msra.mxu0 %v276
  %730 = vmatprep.subr.bf16.mxu0 0
  %731 = vmatpush1.bf16.msra.mxu0 0
  %732 = vmatprep.subr.bf16.mxu0 0
  %733 = vmatpush1.bf16.msra.mxu0 0
  %734 = vmatprep.subr.bf16.mxu0 0
  %735 = vmatpush1.bf16.msra.mxu0 0
  %736 = vmatprep.subr.bf16.mxu0 0
  %737 = vmatpush1.bf16.msra.mxu0 0
  %738 = vmatprep.subr.bf16.mxu0 0
  %739 = vmatpush1.bf16.msra.mxu0 0
  %740 = vmatprep.subr.bf16.mxu0 0
  %741 = vmatpush1.bf16.msra.mxu0 0
  %742 = vmatprep.subr.bf16.mxu0 0
  %743 = vmatpush1.bf16.msra.mxu0 0
  %744 = vmatprep.subr.bf16.mxu0 0
  %745 = vmatpush1.bf16.msra.mxu0 0
  %746 = vmatprep.mubr.bf16.mxu0 0
  %747 = vmatmul.mubr.bf16.gmra.mrb[0].mxu0 %v664
  %v748 = vpop.f32.mrb[0].mxu0
  %v749 = vadd.f32 0.0, %v748
  %v750 = vpop.f32.mrb[0].mxu0
  %v751 = vpop.f32.mrb[0].mxu0
  %v752 = vadd.f32 0.0, %v751
  %v753 = vpop.f32.mrb[0].mxu0
  %754 = vmatprep.mubr.bf16.mxu0 0
  %755 = vmatmul.mubr.bf16.gmra.mrb[0].mxu0 %v665
  %v756 = vpop.f32.mrb[0].mxu0
  %v757 = vadd.f32 0.0, %v756
  %v758 = vpop.f32.mrb[0].mxu0
  %v759 = vpop.f32.mrb[0].mxu0
  %v760 = vadd.f32 0.0, %v759
  %v761 = vpop.f32.mrb[0].mxu0
  %762 = vmatprep.mubr.bf16.mxu0 0
  %763 = vmatmul.mubr.bf16.gmra.mrb[0].mxu0 %v666
  %v764 = vpop.f32.mrb[0].mxu0
  %v765 = vadd.f32 0.0, %v764
  %v766 = vpop.f32.mrb[0].mxu0
  %v767 = vpop.f32.mrb[0].mxu0
  %v768 = vadd.f32 0.0, %v767
  %v769 = vpop.f32.mrb[0].mxu0
  %770 = vmatprep.mubr.bf16.mxu0 0
  %771 = vmatmul.mubr.bf16.gmra.mrb[0].mxu0 %v667
  %v772 = vpop.f32.mrb[0].mxu0
  %v773 = vadd.f32 0.0, %v772
  %v774 = vpop.f32.mrb[0].mxu0
  %v775 = vpop.f32.mrb[0].mxu0
  %v776 = vadd.f32 0.0, %v775
  %v777 = vpop.f32.mrb[0].mxu0
  %778 = vmatprep.mubr.bf16.mxu0 0
  %779 = vmatmul.mubr.bf16.gmra.mrb[0].mxu0 %v668
  %v780 = vpop.f32.mrb[0].mxu0
  %v781 = vadd.f32 0.0, %v780
  %v782 = vpop.f32.mrb[0].mxu0
  %v783 = vpop.f32.mrb[0].mxu0
  %v784 = vadd.f32 0.0, %v783
  %v785 = vpop.f32.mrb[0].mxu0
  %786 = vmatprep.mubr.bf16.mxu0 0
  %787 = vmatmul.mubr.bf16.gmra.mrb[0].mxu0 %v669
  %v788 = vpop.f32.mrb[0].mxu0
  %v789 = vadd.f32 0.0, %v788
  %v790 = vpop.f32.mrb[0].mxu0
  %v791 = vpop.f32.mrb[0].mxu0
  %v792 = vadd.f32 0.0, %v791
  %v793 = vpop.f32.mrb[0].mxu0
  %794 = vmatprep.mubr.bf16.mxu0 0
  %795 = vmatmul.mubr.bf16.gmra.mrb[0].mxu0 %v670
  %v796 = vpop.f32.mrb[0].mxu0
  %v797 = vadd.f32 0.0, %v796
  %v798 = vpop.f32.mrb[0].mxu0
  %v799 = vpop.f32.mrb[0].mxu0
  %v800 = vadd.f32 0.0, %v799
  %v801 = vpop.f32.mrb[0].mxu0
  %802 = vmatprep.mubr.bf16.mxu0 0
  %803 = vmatmul.mubr.bf16.gmra.mrb[0].mxu0 %v671
  %v804 = vpop.f32.mrb[0].mxu0
  %v805 = vadd.f32 0.0, %v804
  %v806 = vpop.f32.mrb[0].mxu0
  %v807 = vpop.f32.mrb[0].mxu0
  %v808 = vadd.f32 0.0, %v807
  %v809 = vpop.f32.mrb[0].mxu0
  %810 = vmatprep.mubr.bf16.mxu0 0
  %811 = vmatmul.mubr.bf16.gmra.mrb[0].mxu0 %v672
  %v812 = vpop.f32.mrb[0].mxu0
  %v813 = vadd.f32 0.0, %v812
  %v814 = vpop.f32.mrb[0].mxu0
  %v815 = vpop.f32.mrb[0].mxu0
  %v816 = vadd.f32 0.0, %v815
  %v817 = vpop.f32.mrb[0].mxu0
  %818 = vmatprep.mubr.bf16.mxu0 0
  %819 = vmatmul.mubr.bf16.gmra.mrb[0].mxu0 %v673
  %v820 = vpop.f32.mrb[0].mxu0
  %v821 = vadd.f32 0.0, %v820
  %v822 = vpop.f32.mrb[0].mxu0
  %v823 = vpop.f32.mrb[0].mxu0
  %v824 = vadd.f32 0.0, %v823
  %v825 = vpop.f32.mrb[0].mxu0
  %826 = vmatprep.mubr.bf16.mxu0 0
  %827 = vmatmul.mubr.bf16.gmra.mrb[0].mxu0 %v674
  %v828 = vpop.f32.mrb[0].mxu0
  %v829 = vadd.f32 0.0, %v828
  %v830 = vpop.f32.mrb[0].mxu0
  %v831 = vpop.f32.mrb[0].mxu0
  %v832 = vadd.f32 0.0, %v831
  %v833 = vpop.f32.mrb[0].mxu0
  %834 = vmatprep.mubr.bf16.mxu0 0
  %835 = vmatmul.mubr.bf16.gmra.mrb[0].mxu0 %v675
  %v836 = vpop.f32.mrb[0].mxu0
  %v837 = vadd.f32 0.0, %v836
  %v838 = vpop.f32.mrb[0].mxu0
  %v839 = vpop.f32.mrb[0].mxu0
  %v840 = vadd.f32 0.0, %v839
  %v841 = vpop.f32.mrb[0].mxu0
  %842 = vmatprep.mubr.bf16.mxu0 0
  %843 = vmatmul.mubr.bf16.gmra.mrb[0].mxu0 %v676
  %v844 = vpop.f32.mrb[0].mxu0
  %v845 = vadd.f32 0.0, %v844
  %v846 = vpop.f32.mrb[0].mxu0
  %v847 = vpop.f32.mrb[0].mxu0
  %v848 = vadd.f32 0.0, %v847
  %v849 = vpop.f32.mrb[0].mxu0
  %850 = vmatprep.mubr.bf16.mxu0 0
  %851 = vmatmul.mubr.bf16.gmra.mrb[0].mxu0 %v677
  %v852 = vpop.f32.mrb[0].mxu0
  %v853 = vadd.f32 0.0, %v852
  %v854 = vpop.f32.mrb[0].mxu0
  %v855 = vpop.f32.mrb[0].mxu0
  %v856 = vadd.f32 0.0, %v855
  %v857 = vpop.f32.mrb[0].mxu0
  %858 = vmatprep.mubr.bf16.mxu0 0
  %859 = vmatmul.mubr.bf16.gmra.mrb[0].mxu0 %v678
  %v860 = vpop.f32.mrb[0].mxu0
  %v861 = vadd.f32 0.0, %v860
  %v862 = vpop.f32.mrb[0].mxu0
  %v863 = vpop.f32.mrb[0].mxu0
  %v864 = vadd.f32 0.0, %v863
  %v865 = vpop.f32.mrb[0].mxu0
  %866 = vmatprep.mubr.bf16.mxu0 0
  %867 = vmatmul.mubr.bf16.gmra.mrb[0].mxu0 %v679
  %v868 = vpop.f32.mrb[0].mxu0
  %v869 = vadd.f32 0.0, %v868
  %v870 = vpop.f32.mrb[0].mxu0
  %v871 = vpop.f32.mrb[0].mxu0
  %v872 = vadd.f32 0.0, %v871
  %v873 = vpop.f32.mrb[0].mxu0
  %874 = vmatprep.mubr.bf16.mxu0 0
  %875 = vmatmul.mubr.bf16.gmra.mrb[0].mxu0 %v680
  %v876 = vpop.f32.mrb[0].mxu0
  %v877 = vadd.f32 0.0, %v876
  %v878 = vpop.f32.mrb[0].mxu0
  %v879 = vpop.f32.mrb[0].mxu0
  %v880 = vadd.f32 0.0, %v879
  %v881 = vpop.f32.mrb[0].mxu0
  %882 = vmatprep.mubr.bf16.mxu0 0
  %883 = vmatmul.mubr.bf16.gmra.mrb[0].mxu0 %v681
  %v884 = vpop.f32.mrb[0].mxu0
  %v885 = vadd.f32 0.0, %v884
  %v886 = vpop.f32.mrb[0].mxu0
  %v887 = vpop.f32.mrb[0].mxu0
  %v888 = vadd.f32 0.0, %v887
  %v889 = vpop.f32.mrb[0].mxu0
  %890 = vmatprep.mubr.bf16.mxu0 0
  %891 = vmatmul.mubr.bf16.gmra.mrb[0].mxu0 %v682
  %v892 = vpop.f32.mrb[0].mxu0
  %v893 = vadd.f32 0.0, %v892
  %v894 = vpop.f32.mrb[0].mxu0
  %v895 = vpop.f32.mrb[0].mxu0
  %v896 = vadd.f32 0.0, %v895
  %v897 = vpop.f32.mrb[0].mxu0
  %898 = vmatprep.mubr.bf16.mxu0 0
  %899 = vmatmul.mubr.bf16.gmra.mrb[0].mxu0 %v683
  %v900 = vpop.f32.mrb[0].mxu0
  %v901 = vadd.f32 0.0, %v900
  %v902 = vpop.f32.mrb[0].mxu0
  %v903 = vpop.f32.mrb[0].mxu0
  %v904 = vadd.f32 0.0, %v903
  %v905 = vpop.f32.mrb[0].mxu0
  %906 = vmatprep.mubr.bf16.mxu0 0
  %907 = vmatmul.mubr.bf16.gmra.mrb[0].mxu0 %v684
  %v908 = vpop.f32.mrb[0].mxu0
  %v909 = vadd.f32 0.0, %v908
  %v910 = vpop.f32.mrb[0].mxu0
  %v911 = vpop.f32.mrb[0].mxu0
  %v912 = vadd.f32 0.0, %v911
  %v913 = vpop.f32.mrb[0].mxu0
  %914 = vmatprep.mubr.bf16.mxu0 0
  %915 = vmatmul.mubr.bf16.gmra.mrb[0].mxu0 %v685
  %v916 = vpop.f32.mrb[0].mxu0
  %v917 = vadd.f32 0.0, %v916
  %v918 = vpop.f32.mrb[0].mxu0
  %v919 = vpop.f32.mrb[0].mxu0
  %v920 = vadd.f32 0.0, %v919
  %v921 = vpop.f32.mrb[0].mxu0
  %922 = vmatprep.mubr.bf16.mxu0 0
  %923 = vmatmul.mubr.bf16.gmra.mrb[0].mxu0 %v686
  %v924 = vpop.f32.mrb[0].mxu0
  %v925 = vadd.f32 0.0, %v924
  %v926 = vpop.f32.mrb[0].mxu0
  %v927 = vpop.f32.mrb[0].mxu0
  %v928 = vadd.f32 0.0, %v927
  %v929 = vpop.f32.mrb[0].mxu0
  %930 = vmatprep.mubr.bf16.mxu0 0
  %931 = vmatmul.mubr.bf16.gmra.mrb[0].mxu0 %v687
  %v932 = vpop.f32.mrb[0].mxu0
  %v933 = vadd.f32 0.0, %v932
  %v934 = vpop.f32.mrb[0].mxu0
  %v935 = vpop.f32.mrb[0].mxu0
  %v936 = vadd.f32 0.0, %v935
  %v937 = vpop.f32.mrb[0].mxu0
  %938 = vmatprep.mubr.bf16.mxu0 0
  %939 = vmatmul.mubr.bf16.gmra.mrb[0].mxu0 %v688
  %v940 = vpop.f32.mrb[0].mxu0
  %v941 = vadd.f32 0.0, %v940
  %v942 = vpop.f32.mrb[0].mxu0
  %v943 = vpop.f32.mrb[0].mxu0
  %v944 = vpop.f32.mrb[0].mxu0
  %945 = vdwg.mxu0
  %v946 = vld [vmem:[%s2] sm:$0xf]
  %v947 = vld [vmem:[%s2 + $0x4] sm:$0xf]
  %v948 = vld [vmem:[%s2 + $0x8] sm:$0xf]
  %v949 = vld [vmem:[%s2 + $0xc] sm:$0xf]
  %v950 = vld [vmem:[%s2 + $0x10] sm:$0xf]
  %v951 = vld [vmem:[%s2 + $0x14] sm:$0xf]
  %v952 = vld [vmem:[%s2 + $0x18] sm:$0xf]
  %v953 = vld [vmem:[%s2 + $0x1c] sm:$0xf]
  %v954 = vld [vmem:[%s2 + $0x20] sm:$0xf]
  %v955 = vld [vmem:[%s2 + $0x24] sm:$0xf]
  %v956 = vld [vmem:[%s2 + $0x28] sm:$0xf]
  %v957 = vld [vmem:[%s2 + $0x2c] sm:$0xf]
  %v958 = vld [vmem:[%s2 + $0x30] sm:$0xf]
  %v959 = vld [vmem:[%s2 + $0x34] sm:$0xf]
  %v960 = vld [vmem:[%s2 + $0x38] sm:$0xf]
  %v961 = vld [vmem:[%s2 + $0x3c] sm:$0xf]
  %v962 = vld [vmem:[%s2 + $0x40] sm:$0xf]
  %v963 = vld [vmem:[%s2 + $0x44] sm:$0xf]
  %v964 = vld [vmem:[%s2 + $0x48] sm:$0xf]
  %v965 = vld [vmem:[%s2 + $0x4c] sm:$0xf]
  %v966 = vld [vmem:[%s2 + $0x50] sm:$0xf]
  %v967 = vld [vmem:[%s2 + $0x54] sm:$0xf]
  %v968 = vld [vmem:[%s2 + $0x58] sm:$0xf]
  %v969 = vld [vmem:[%s2 + $0x5c] sm:$0xf]
  %v970 = vld [vmem:[%s2 + $0x60] sm:$0xf]
  %v971 = vld [vmem:[%s2 + $0x64] sm:$0xf]
  %v972 = vld [vmem:[%s2 + $0x68] sm:$0xf]
  %v973 = vld [vmem:[%s2 + $0x6c] sm:$0xf]
  %v974 = vld [vmem:[%s2 + $0x70] sm:$0xf]
  %v975 = vld [vmem:[%s2 + $0x74] sm:$0xf]
  %v976 = vld [vmem:[%s2 + $0x78] sm:$0xf]
  %v977 = vld [vmem:[%s2 + $0x7c] sm:$0xf]
  %v978 = vld [vmem:[%s2 + $0x80] sm:$0xf]
  %v979 = vld [vmem:[%s2 + $0x84] sm:$0xf]
  %v980 = vld [vmem:[%s2 + $0x88] sm:$0xf]
  %v981 = vld [vmem:[%s2 + $0x8c] sm:$0xf]
  %v982 = vld [vmem:[%s2 + $0x90] sm:$0xf]
  %v983 = vld [vmem:[%s2 + $0x94] sm:$0xf]
  %v984 = vld [vmem:[%s2 + $0x98] sm:$0xf]
  %v985 = vld [vmem:[%s2 + $0x9c] sm:$0xf]
  %v986 = vld [vmem:[%s2 + $0xa0] sm:$0xf]
  %v987 = vld [vmem:[%s2 + $0xa4] sm:$0xf]
  %v988 = vld [vmem:[%s2 + $0xa8] sm:$0xf]
  %v989 = vld [vmem:[%s2 + $0xac] sm:$0xf]
  %v990 = vld [vmem:[%s2 + $0xb0] sm:$0xf]
  %v991 = vld [vmem:[%s2 + $0xb4] sm:$0xf]
  %v992 = vld [vmem:[%s2 + $0xb8] sm:$0xf]
  %v993 = vld [vmem:[%s2 + $0xbc] sm:$0xf]
  %v994 = vld [vmem:[%s2 + $0xc0] sm:$0xf]
  %v1044 = vunpack.c.l.b16 %v946
  %v1045 = vunpack.c.l.b16 %v947
  %v1046 = vunpack.c.l.b16 %v948
  %v1047 = vunpack.c.l.b16 %v949
  %v1048 = vunpack.c.l.b16 %v950
  %v1049 = vunpack.c.l.b16 %v951
  %v1050 = vunpack.c.l.b16 %v952
  %v1051 = vunpack.c.l.b16 %v953
  %v1052 = vunpack.c.l.b16 %v954
  %v1053 = vunpack.c.l.b16 %v955
  %v1054 = vunpack.c.l.b16 %v956
  %v1055 = vunpack.c.l.b16 %v957
  %v1056 = vunpack.c.l.b16 %v958
  %v1057 = vunpack.c.l.b16 %v959
  %v1058 = vunpack.c.l.b16 %v960
  %v1059 = vunpack.c.l.b16 %v961
  %v1060 = vunpack.c.l.b16 %v962
  %v1061 = vunpack.c.l.b16 %v963
  %v1062 = vunpack.c.l.b16 %v964
  %v1063 = vunpack.c.l.b16 %v965
  %v1064 = vunpack.c.l.b16 %v966
  %v1065 = vunpack.c.l.b16 %v967
  %v1066 = vunpack.c.l.b16 %v968
  %v1067 = vunpack.c.l.b16 %v969
  %v1068 = vunpack.c.l.b16 %v970
  %v1069 = vunpack.c.l.b16 %v971
  %v1070 = vunpack.c.l.b16 %v972
  %v1071 = vunpack.c.l.b16 %v973
  %v1072 = vunpack.c.l.b16 %v974
  %v1073 = vunpack.c.l.b16 %v975
  %v1074 = vunpack.c.l.b16 %v976
  %v1075 = vunpack.c.l.b16 %v977
  %v1076 = vunpack.c.l.b16 %v978
  %v1077 = vunpack.c.l.b16 %v979
  %v1078 = vunpack.c.l.b16 %v980
  %v1079 = vunpack.c.l.b16 %v981
  %v1080 = vunpack.c.l.b16 %v982
  %v1081 = vunpack.c.l.b16 %v983
  %v1082 = vunpack.c.l.b16 %v984
  %v1083 = vunpack.c.l.b16 %v985
  %v1084 = vunpack.c.l.b16 %v986
  %v1085 = vunpack.c.l.b16 %v987
  %v1086 = vunpack.c.l.b16 %v988
  %v1087 = vunpack.c.l.b16 %v989
  %v1088 = vunpack.c.l.b16 %v990
  %v1089 = vunpack.c.l.b16 %v991
  %v1090 = vunpack.c.l.b16 %v992
  %v1091 = vunpack.c.l.b16 %v993
  %v1092 = vunpack.c.l.b16 %v994
  %v1093 = vpack.c.b16 %v1045, %v1044
  %v1094 = vpack.c.b16 %v1047, %v1046
  %v1095 = vpack.c.b16 %v1049, %v1048
  %v1096 = vpack.c.b16 %v1051, %v1050
  %v1097 = vpack.c.b16 %v1053, %v1052
  %v1098 = vpack.c.b16 %v1055, %v1054
  %v1099 = vpack.c.b16 %v1057, %v1056
  %v1100 = vpack.c.b16 %v1059, %v1058
  %v1101 = vpack.c.b16 %v1061, %v1060
  %v1102 = vpack.c.b16 %v1063, %v1062
  %v1103 = vpack.c.b16 %v1065, %v1064
  %v1104 = vpack.c.b16 %v1067, %v1066
  %v1105 = vpack.c.b16 %v1069, %v1068
  %v1106 = vpack.c.b16 %v1071, %v1070
  %v1107 = vpack.c.b16 %v1073, %v1072
  %v1108 = vpack.c.b16 %v1075, %v1074
  %v1109 = vpack.c.b16 %v1077, %v1076
  %v1110 = vpack.c.b16 %v1079, %v1078
  %v1111 = vpack.c.b16 %v1081, %v1080
  %v1112 = vpack.c.b16 %v1083, %v1082
  %v1113 = vpack.c.b16 %v1085, %v1084
  %v1114 = vpack.c.b16 %v1087, %v1086
  %v1115 = vpack.c.b16 %v1089, %v1088
  %v1116 = vpack.c.b16 %v1091, %v1090
  %v1117 = vpack.c.b16 %v1092, %v1092
  %1143 = vmatprep.subr.bf16.mxu0 0
  %1144 = vmatpush1.bf16.msra.mxu0 %v269
  %1145 = vmatprep.subr.bf16.mxu0 0
  %1146 = vmatpush1.bf16.msra.mxu0 %v270
  %1147 = vmatprep.subr.bf16.mxu0 0
  %1148 = vmatpush1.bf16.msra.mxu0 %v271
  %1149 = vmatprep.subr.bf16.mxu0 0
  %1150 = vmatpush1.bf16.msra.mxu0 %v272
  %1151 = vmatprep.subr.bf16.mxu0 0
  %1152 = vmatpush1.bf16.msra.mxu0 %v273
  %1153 = vmatprep.subr.bf16.mxu0 0
  %1154 = vmatpush1.bf16.msra.mxu0 %v274
  %1155 = vmatprep.subr.bf16.mxu0 0
  %1156 = vmatpush1.bf16.msra.mxu0 %v275
  %1157 = vmatprep.subr.bf16.mxu0 0
  %1158 = vmatpush1.bf16.msra.mxu0 %v276
  %1159 = vmatprep.subr.bf16.mxu0 0
  %1160 = vmatpush1.bf16.msra.mxu0 0
  %1161 = vmatprep.subr.bf16.mxu0 0
  %1162 = vmatpush1.bf16.msra.mxu0 0
  %1163 = vmatprep.subr.bf16.mxu0 0
  %1164 = vmatpush1.bf16.msra.mxu0 0
  %1165 = vmatprep.subr.bf16.mxu0 0
  %1166 = vmatpush1.bf16.msra.mxu0 0
  %1167 = vmatprep.subr.bf16.mxu0 0
  %1168 = vmatpush1.bf16.msra.mxu0 0
  %1169 = vmatprep.subr.bf16.mxu0 0
  %1170 = vmatpush1.bf16.msra.mxu0 0
  %1171 = vmatprep.subr.bf16.mxu0 0
  %1172 = vmatpush1.bf16.msra.mxu0 0
  %1173 = vmatprep.subr.bf16.mxu0 0
  %1174 = vmatpush1.bf16.msra.mxu0 0
  %1175 = vmatprep.mubr.bf16.mxu0 0
  %1176 = vmatmul.mubr.bf16.gmra.mrb[0].mxu0 %v1093
  %v1177 = vpop.f32.mrb[0].mxu0
  %v1178 = vadd.f32 0.0, %v1177
  %v1179 = vpop.f32.mrb[0].mxu0
  %v1180 = vpop.f32.mrb[0].mxu0
  %v1181 = vadd.f32 0.0, %v1180
  %v1182 = vpop.f32.mrb[0].mxu0
  %1183 = vmatprep.mubr.bf16.mxu0 0
  %1184 = vmatmul.mubr.bf16.gmra.mrb[0].mxu0 %v1094
  %v1185 = vpop.f32.mrb[0].mxu0
  %v1186 = vadd.f32 0.0, %v1185
  %v1187 = vpop.f32.mrb[0].mxu0
  %v1188 = vpop.f32.mrb[0].mxu0
  %v1189 = vadd.f32 0.0, %v1188
  %v1190 = vpop.f32.mrb[0].mxu0
  %1191 = vmatprep.mubr.bf16.mxu0 0
  %1192 = vmatmul.mubr.bf16.gmra.mrb[0].mxu0 %v1095
  %v1193 = vpop.f32.mrb[0].mxu0
  %v1194 = vadd.f32 0.0, %v1193
  %v1195 = vpop.f32.mrb[0].mxu0
  %v1196 = vpop.f32.mrb[0].mxu0
  %v1197 = vadd.f32 0.0, %v1196
  %v1198 = vpop.f32.mrb[0].mxu0
  %1199 = vmatprep.mubr.bf16.mxu0 0
  %1200 = vmatmul.mubr.bf16.gmra.mrb[0].mxu0 %v1096
  %v1201 = vpop.f32.mrb[0].mxu0
  %v1202 = vadd.f32 0.0, %v1201
  %v1203 = vpop.f32.mrb[0].mxu0
  %v1204 = vpop.f32.mrb[0].mxu0
  %v1205 = vadd.f32 0.0, %v1204
  %v1206 = vpop.f32.mrb[0].mxu0
  %1207 = vmatprep.mubr.bf16.mxu0 0
  %1208 = vmatmul.mubr.bf16.gmra.mrb[0].mxu0 %v1097
  %v1209 = vpop.f32.mrb[0].mxu0
  %v1210 = vadd.f32 0.0, %v1209
  %v1211 = vpop.f32.mrb[0].mxu0
  %v1212 = vpop.f32.mrb[0].mxu0
  %v1213 = vadd.f32 0.0, %v1212
  %v1214 = vpop.f32.mrb[0].mxu0
  %1215 = vmatprep.mubr.bf16.mxu0 0
  %1216 = vmatmul.mubr.bf16.gmra.mrb[0].mxu0 %v1098
  %v1217 = vpop.f32.mrb[0].mxu0
  %v1218 = vadd.f32 0.0, %v1217
  %v1219 = vpop.f32.mrb[0].mxu0
  %v1220 = vpop.f32.mrb[0].mxu0
  %v1221 = vadd.f32 0.0, %v1220
  %v1222 = vpop.f32.mrb[0].mxu0
  %1223 = vmatprep.mubr.bf16.mxu0 0
  %1224 = vmatmul.mubr.bf16.gmra.mrb[0].mxu0 %v1099
  %v1225 = vpop.f32.mrb[0].mxu0
  %v1226 = vadd.f32 0.0, %v1225
  %v1227 = vpop.f32.mrb[0].mxu0
  %v1228 = vpop.f32.mrb[0].mxu0
  %v1229 = vadd.f32 0.0, %v1228
  %v1230 = vpop.f32.mrb[0].mxu0
  %1231 = vmatprep.mubr.bf16.mxu0 0
  %1232 = vmatmul.mubr.bf16.gmra.mrb[0].mxu0 %v1100
  %v1233 = vpop.f32.mrb[0].mxu0
  %v1234 = vadd.f32 0.0, %v1233
  %v1235 = vpop.f32.mrb[0].mxu0
  %v1236 = vpop.f32.mrb[0].mxu0
  %v1237 = vadd.f32 0.0, %v1236
  %v1238 = vpop.f32.mrb[0].mxu0
  %1239 = vmatprep.mubr.bf16.mxu0 0
  %1240 = vmatmul.mubr.bf16.gmra.mrb[0].mxu0 %v1101
  %v1241 = vpop.f32.mrb[0].mxu0
  %v1242 = vadd.f32 0.0, %v1241
  %v1243 = vpop.f32.mrb[0].mxu0
  %v1244 = vpop.f32.mrb[0].mxu0
  %v1245 = vadd.f32 0.0, %v1244
  %v1246 = vpop.f32.mrb[0].mxu0
  %1247 = vmatprep.mubr.bf16.mxu0 0
  %1248 = vmatmul.mubr.bf16.gmra.mrb[0].mxu0 %v1102
  %v1249 = vpop.f32.mrb[0].mxu0
  %v1250 = vadd.f32 0.0, %v1249
  %v1251 = vpop.f32.mrb[0].mxu0
  %v1252 = vpop.f32.mrb[0].mxu0
  %v1253 = vadd.f32 0.0, %v1252
  %v1254 = vpop.f32.mrb[0].mxu0
  %1255 = vmatprep.mubr.bf16.mxu0 0
  %1256 = vmatmul.mubr.bf16.gmra.mrb[0].mxu0 %v1103
  %v1257 = vpop.f32.mrb[0].mxu0
  %v1258 = vadd.f32 0.0, %v1257
  %v1259 = vpop.f32.mrb[0].mxu0
  %v1260 = vpop.f32.mrb[0].mxu0
  %v1261 = vadd.f32 0.0, %v1260
  %v1262 = vpop.f32.mrb[0].mxu0
  %1263 = vmatprep.mubr.bf16.mxu0 0
  %1264 = vmatmul.mubr.bf16.gmra.mrb[0].mxu0 %v1104
  %v1265 = vpop.f32.mrb[0].mxu0
  %v1266 = vadd.f32 0.0, %v1265
  %v1267 = vpop.f32.mrb[0].mxu0
  %v1268 = vpop.f32.mrb[0].mxu0
  %v1269 = vadd.f32 0.0, %v1268
  %v1270 = vpop.f32.mrb[0].mxu0
  %1271 = vmatprep.mubr.bf16.mxu0 0
  %1272 = vmatmul.mubr.bf16.gmra.mrb[0].mxu0 %v1105
  %v1273 = vpop.f32.mrb[0].mxu0
  %v1274 = vadd.f32 0.0, %v1273
  %v1275 = vpop.f32.mrb[0].mxu0
  %v1276 = vpop.f32.mrb[0].mxu0
  %v1277 = vadd.f32 0.0, %v1276
  %v1278 = vpop.f32.mrb[0].mxu0
  %1279 = vmatprep.mubr.bf16.mxu0 0
  %1280 = vmatmul.mubr.bf16.gmra.mrb[0].mxu0 %v1106
  %v1281 = vpop.f32.mrb[0].mxu0
  %v1282 = vadd.f32 0.0, %v1281
  %v1283 = vpop.f32.mrb[0].mxu0
  %v1284 = vpop.f32.mrb[0].mxu0
  %v1285 = vadd.f32 0.0, %v1284
  %v1286 = vpop.f32.mrb[0].mxu0
  %1287 = vmatprep.mubr.bf16.mxu0 0
  %1288 = vmatmul.mubr.bf16.gmra.mrb[0].mxu0 %v1107
  %v1289 = vpop.f32.mrb[0].mxu0
  %v1290 = vadd.f32 0.0, %v1289
  %v1291 = vpop.f32.mrb[0].mxu0
  %v1292 = vpop.f32.mrb[0].mxu0
  %v1293 = vadd.f32 0.0, %v1292
  %v1294 = vpop.f32.mrb[0].mxu0
  %1295 = vmatprep.mubr.bf16.mxu0 0
  %1296 = vmatmul.mubr.bf16.gmra.mrb[0].mxu0 %v1108
  %v1297 = vpop.f32.mrb[0].mxu0
  %v1298 = vadd.f32 0.0, %v1297
  %v1299 = vpop.f32.mrb[0].mxu0
  %v1300 = vpop.f32.mrb[0].mxu0
  %v1301 = vadd.f32 0.0, %v1300
  %v1302 = vpop.f32.mrb[0].mxu0
  %1303 = vmatprep.mubr.bf16.mxu0 0
  %1304 = vmatmul.mubr.bf16.gmra.mrb[0].mxu0 %v1109
  %v1305 = vpop.f32.mrb[0].mxu0
  %v1306 = vadd.f32 0.0, %v1305
  %v1307 = vpop.f32.mrb[0].mxu0
  %v1308 = vpop.f32.mrb[0].mxu0
  %v1309 = vadd.f32 0.0, %v1308
  %v1310 = vpop.f32.mrb[0].mxu0
  %1311 = vmatprep.mubr.bf16.mxu0 0
  %1312 = vmatmul.mubr.bf16.gmra.mrb[0].mxu0 %v1110
  %v1313 = vpop.f32.mrb[0].mxu0
  %v1314 = vadd.f32 0.0, %v1313
  %v1315 = vpop.f32.mrb[0].mxu0
  %v1316 = vpop.f32.mrb[0].mxu0
  %v1317 = vadd.f32 0.0, %v1316
  %v1318 = vpop.f32.mrb[0].mxu0
  %1319 = vmatprep.mubr.bf16.mxu0 0
  %1320 = vmatmul.mubr.bf16.gmra.mrb[0].mxu0 %v1111
  %v1321 = vpop.f32.mrb[0].mxu0
  %v1322 = vadd.f32 0.0, %v1321
  %v1323 = vpop.f32.mrb[0].mxu0
  %v1324 = vpop.f32.mrb[0].mxu0
  %v1325 = vadd.f32 0.0, %v1324
  %v1326 = vpop.f32.mrb[0].mxu0
  %1327 = vmatprep.mubr.bf16.mxu0 0
  %1328 = vmatmul.mubr.bf16.gmra.mrb[0].mxu0 %v1112
  %v1329 = vpop.f32.mrb[0].mxu0
  %v1330 = vadd.f32 0.0, %v1329
  %v1331 = vpop.f32.mrb[0].mxu0
  %v1332 = vpop.f32.mrb[0].mxu0
  %v1333 = vadd.f32 0.0, %v1332
  %v1334 = vpop.f32.mrb[0].mxu0
  %1335 = vmatprep.mubr.bf16.mxu0 0
  %1336 = vmatmul.mubr.bf16.gmra.mrb[0].mxu0 %v1113
  %v1337 = vpop.f32.mrb[0].mxu0
  %v1338 = vadd.f32 0.0, %v1337
  %v1339 = vpop.f32.mrb[0].mxu0
  %v1340 = vpop.f32.mrb[0].mxu0
  %v1341 = vadd.f32 0.0, %v1340
  %v1342 = vpop.f32.mrb[0].mxu0
  %1343 = vmatprep.mubr.bf16.mxu0 0
  %1344 = vmatmul.mubr.bf16.gmra.mrb[0].mxu0 %v1114
  %v1345 = vpop.f32.mrb[0].mxu0
  %v1346 = vadd.f32 0.0, %v1345
  %v1347 = vpop.f32.mrb[0].mxu0
  %v1348 = vpop.f32.mrb[0].mxu0
  %v1349 = vadd.f32 0.0, %v1348
  %v1350 = vpop.f32.mrb[0].mxu0
  %1351 = vmatprep.mubr.bf16.mxu0 0
  %1352 = vmatmul.mubr.bf16.gmra.mrb[0].mxu0 %v1115
  %v1353 = vpop.f32.mrb[0].mxu0
  %v1354 = vadd.f32 0.0, %v1353
  %v1355 = vpop.f32.mrb[0].mxu0
  %v1356 = vpop.f32.mrb[0].mxu0
  %v1357 = vadd.f32 0.0, %v1356
  %v1358 = vpop.f32.mrb[0].mxu0
  %1359 = vmatprep.mubr.bf16.mxu0 0
  %1360 = vmatmul.mubr.bf16.gmra.mrb[0].mxu0 %v1116
  %v1361 = vpop.f32.mrb[0].mxu0
  %v1362 = vadd.f32 0.0, %v1361
  %v1363 = vpop.f32.mrb[0].mxu0
  %v1364 = vpop.f32.mrb[0].mxu0
  %v1365 = vadd.f32 0.0, %v1364
  %v1366 = vpop.f32.mrb[0].mxu0
  %1367 = vmatprep.mubr.bf16.mxu0 0
  %1368 = vmatmul.mubr.bf16.gmra.mrb[0].mxu0 %v1117
  %v1369 = vpop.f32.mrb[0].mxu0
  %v1370 = vadd.f32 0.0, %v1369
  %v1371 = vpop.f32.mrb[0].mxu0
  %v1372 = vpop.f32.mrb[0].mxu0
  %v1373 = vpop.f32.mrb[0].mxu0
  %1374 = vdwg.mxu0
  %v1375 = vld [vmem:[%s3] sm:$0xf]
  %v1376 = vld [vmem:[%s3 + $0x4] sm:$0xf]
  %v1377 = vld [vmem:[%s3 + $0x8] sm:$0xf]
  %v1378 = vld [vmem:[%s3 + $0xc] sm:$0xf]
  %v1379 = vld [vmem:[%s3 + $0x10] sm:$0xf]
  %v1380 = vld [vmem:[%s3 + $0x14] sm:$0xf]
  %v1381 = vld [vmem:[%s3 + $0x18] sm:$0xf]
  %v1382 = vld [vmem:[%s3 + $0x1c] sm:$0xf]
  %v1383 = vld [vmem:[%s3 + $0x20] sm:$0xf]
  %v1384 = vld [vmem:[%s3 + $0x24] sm:$0xf]
  %v1385 = vld [vmem:[%s3 + $0x28] sm:$0xf]
  %v1386 = vld [vmem:[%s3 + $0x2c] sm:$0xf]
  %v1387 = vld [vmem:[%s3 + $0x30] sm:$0xf]
  %v1388 = vld [vmem:[%s3 + $0x34] sm:$0xf]
  %v1389 = vld [vmem:[%s3 + $0x38] sm:$0xf]
  %v1390 = vld [vmem:[%s3 + $0x3c] sm:$0xf]
  %v1391 = vld [vmem:[%s3 + $0x40] sm:$0xf]
  %v1392 = vld [vmem:[%s3 + $0x44] sm:$0xf]
  %v1393 = vld [vmem:[%s3 + $0x48] sm:$0xf]
  %v1394 = vld [vmem:[%s3 + $0x4c] sm:$0xf]
  %v1395 = vld [vmem:[%s3 + $0x50] sm:$0xf]
  %v1396 = vld [vmem:[%s3 + $0x54] sm:$0xf]
  %v1397 = vld [vmem:[%s3 + $0x58] sm:$0xf]
  %v1398 = vld [vmem:[%s3 + $0x5c] sm:$0xf]
  %v1399 = vld [vmem:[%s3 + $0x60] sm:$0xf]
  %v1400 = vld [vmem:[%s3 + $0x64] sm:$0xf]
  %v1401 = vld [vmem:[%s3 + $0x68] sm:$0xf]
  %v1402 = vld [vmem:[%s3 + $0x6c] sm:$0xf]
  %v1403 = vld [vmem:[%s3 + $0x70] sm:$0xf]
  %v1404 = vld [vmem:[%s3 + $0x74] sm:$0xf]
  %v1405 = vld [vmem:[%s3 + $0x78] sm:$0xf]
  %v1406 = vld [vmem:[%s3 + $0x7c] sm:$0xf]
  %v1407 = vld [vmem:[%s3 + $0x80] sm:$0xf]
  %v1408 = vld [vmem:[%s3 + $0x84] sm:$0xf]
  %v1409 = vld [vmem:[%s3 + $0x88] sm:$0xf]
  %v1410 = vld [vmem:[%s3 + $0x8c] sm:$0xf]
  %v1411 = vld [vmem:[%s3 + $0x90] sm:$0xf]
  %v1412 = vld [vmem:[%s3 + $0x94] sm:$0xf]
  %v1413 = vld [vmem:[%s3 + $0x98] sm:$0xf]
  %v1414 = vld [vmem:[%s3 + $0x9c] sm:$0xf]
  %v1415 = vld [vmem:[%s3 + $0xa0] sm:$0xf]
  %v1416 = vld [vmem:[%s3 + $0xa4] sm:$0xf]
  %v1417 = vld [vmem:[%s3 + $0xa8] sm:$0xf]
  %v1418 = vld [vmem:[%s3 + $0xac] sm:$0xf]
  %v1419 = vld [vmem:[%s3 + $0xb0] sm:$0xf]
  %v1420 = vld [vmem:[%s3 + $0xb4] sm:$0xf]
  %v1421 = vld [vmem:[%s3 + $0xb8] sm:$0xf]
  %v1422 = vld [vmem:[%s3 + $0xbc] sm:$0xf]
  %v1423 = vld [vmem:[%s3 + $0xc0] sm:$0xf]
  %v1473 = vunpack.c.l.b16 %v1375
  %v1474 = vunpack.c.l.b16 %v1376
  %v1475 = vunpack.c.l.b16 %v1377
  %v1476 = vunpack.c.l.b16 %v1378
  %v1477 = vunpack.c.l.b16 %v1379
  %v1478 = vunpack.c.l.b16 %v1380
  %v1479 = vunpack.c.l.b16 %v1381
  %v1480 = vunpack.c.l.b16 %v1382
  %v1481 = vunpack.c.l.b16 %v1383
  %v1482 = vunpack.c.l.b16 %v1384
  %v1483 = vunpack.c.l.b16 %v1385
  %v1484 = vunpack.c.l.b16 %v1386
  %v1485 = vunpack.c.l.b16 %v1387
  %v1486 = vunpack.c.l.b16 %v1388
  %v1487 = vunpack.c.l.b16 %v1389
  %v1488 = vunpack.c.l.b16 %v1390
  %v1489 = vunpack.c.l.b16 %v1391
  %v1490 = vunpack.c.l.b16 %v1392
  %v1491 = vunpack.c.l.b16 %v1393
  %v1492 = vunpack.c.l.b16 %v1394
  %v1493 = vunpack.c.l.b16 %v1395
  %v1494 = vunpack.c.l.b16 %v1396
  %v1495 = vunpack.c.l.b16 %v1397
  %v1496 = vunpack.c.l.b16 %v1398
  %v1497 = vunpack.c.l.b16 %v1399
  %v1498 = vunpack.c.l.b16 %v1400
  %v1499 = vunpack.c.l.b16 %v1401
  %v1500 = vunpack.c.l.b16 %v1402
  %v1501 = vunpack.c.l.b16 %v1403
  %v1502 = vunpack.c.l.b16 %v1404
  %v1503 = vunpack.c.l.b16 %v1405
  %v1504 = vunpack.c.l.b16 %v1406
  %v1505 = vunpack.c.l.b16 %v1407
  %v1506 = vunpack.c.l.b16 %v1408
  %v1507 = vunpack.c.l.b16 %v1409
  %v1508 = vunpack.c.l.b16 %v1410
  %v1509 = vunpack.c.l.b16 %v1411
  %v1510 = vunpack.c.l.b16 %v1412
  %v1511 = vunpack.c.l.b16 %v1413
  %v1512 = vunpack.c.l.b16 %v1414
  %v1513 = vunpack.c.l.b16 %v1415
  %v1514 = vunpack.c.l.b16 %v1416
  %v1515 = vunpack.c.l.b16 %v1417
  %v1516 = vunpack.c.l.b16 %v1418
  %v1517 = vunpack.c.l.b16 %v1419
  %v1518 = vunpack.c.l.b16 %v1420
  %v1519 = vunpack.c.l.b16 %v1421
  %v1520 = vunpack.c.l.b16 %v1422
  %v1521 = vunpack.c.l.b16 %v1423
  %v1522 = vpack.c.b16 %v1474, %v1473
  %v1523 = vpack.c.b16 %v1476, %v1475
  %v1524 = vpack.c.b16 %v1478, %v1477
  %v1525 = vpack.c.b16 %v1480, %v1479
  %v1526 = vpack.c.b16 %v1482, %v1481
  %v1527 = vpack.c.b16 %v1484, %v1483
  %v1528 = vpack.c.b16 %v1486, %v1485
  %v1529 = vpack.c.b16 %v1488, %v1487
  %v1530 = vpack.c.b16 %v1490, %v1489
  %v1531 = vpack.c.b16 %v1492, %v1491
  %v1532 = vpack.c.b16 %v1494, %v1493
  %v1533 = vpack.c.b16 %v1496, %v1495
  %v1534 = vpack.c.b16 %v1498, %v1497
  %v1535 = vpack.c.b16 %v1500, %v1499
  %v1536 = vpack.c.b16 %v1502, %v1501
  %v1537 = vpack.c.b16 %v1504, %v1503
  %v1538 = vpack.c.b16 %v1506, %v1505
  %v1539 = vpack.c.b16 %v1508, %v1507
  %v1540 = vpack.c.b16 %v1510, %v1509
  %v1541 = vpack.c.b16 %v1512, %v1511
  %v1542 = vpack.c.b16 %v1514, %v1513
  %v1543 = vpack.c.b16 %v1516, %v1515
  %v1544 = vpack.c.b16 %v1518, %v1517
  %v1545 = vpack.c.b16 %v1520, %v1519
  %v1546 = vpack.c.b16 %v1521, %v1521
  %1572 = vmatprep.subr.bf16.mxu0 0
  %1573 = vmatpush1.bf16.msra.mxu0 %v269
  %1574 = vmatprep.subr.bf16.mxu0 0
  %1575 = vmatpush1.bf16.msra.mxu0 %v270
  %1576 = vmatprep.subr.bf16.mxu0 0
  %1577 = vmatpush1.bf16.msra.mxu0 %v271
  %1578 = vmatprep.subr.bf16.mxu0 0
  %1579 = vmatpush1.bf16.msra.mxu0 %v272
  %1580 = vmatprep.subr.bf16.mxu0 0
  %1581 = vmatpush1.bf16.msra.mxu0 %v273
  %1582 = vmatprep.subr.bf16.mxu0 0
  %1583 = vmatpush1.bf16.msra.mxu0 %v274
  %1584 = vmatprep.subr.bf16.mxu0 0
  %1585 = vmatpush1.bf16.msra.mxu0 %v275
  %1586 = vmatprep.subr.bf16.mxu0 0
  %1587 = vmatpush1.bf16.msra.mxu0 %v276
  %1588 = vmatprep.subr.bf16.mxu0 0
  %1589 = vmatpush1.bf16.msra.mxu0 0
  %1590 = vmatprep.subr.bf16.mxu0 0
  %1591 = vmatpush1.bf16.msra.mxu0 0
  %1592 = vmatprep.subr.bf16.mxu0 0
  %1593 = vmatpush1.bf16.msra.mxu0 0
  %1594 = vmatprep.subr.bf16.mxu0 0
  %1595 = vmatpush1.bf16.msra.mxu0 0
  %1596 = vmatprep.subr.bf16.mxu0 0
  %1597 = vmatpush1.bf16.msra.mxu0 0
  %1598 = vmatprep.subr.bf16.mxu0 0
  %1599 = vmatpush1.bf16.msra.mxu0 0
  %1600 = vmatprep.subr.bf16.mxu0 0
  %1601 = vmatpush1.bf16.msra.mxu0 0
  %1602 = vmatprep.subr.bf16.mxu0 0
  %1603 = vmatpush1.bf16.msra.mxu0 0
  %1604 = vmatprep.mubr.bf16.mxu0 0
  %1605 = vmatmul.mubr.bf16.gmra.mrb[0].mxu0 %v1522
  %v1606 = vpop.f32.mrb[0].mxu0
  %v1607 = vadd.f32 0.0, %v1606
  %v1608 = vpop.f32.mrb[0].mxu0
  %v1609 = vpop.f32.mrb[0].mxu0
  %v1610 = vadd.f32 0.0, %v1609
  %v1611 = vpop.f32.mrb[0].mxu0
  %1612 = vmatprep.mubr.bf16.mxu0 0
  %1613 = vmatmul.mubr.bf16.gmra.mrb[0].mxu0 %v1523
  %v1614 = vpop.f32.mrb[0].mxu0
  %v1615 = vadd.f32 0.0, %v1614
  %v1616 = vpop.f32.mrb[0].mxu0
  %v1617 = vpop.f32.mrb[0].mxu0
  %v1618 = vadd.f32 0.0, %v1617
  %v1619 = vpop.f32.mrb[0].mxu0
  %1620 = vmatprep.mubr.bf16.mxu0 0
  %1621 = vmatmul.mubr.bf16.gmra.mrb[0].mxu0 %v1524
  %v1622 = vpop.f32.mrb[0].mxu0
  %v1623 = vadd.f32 0.0, %v1622
  %v1624 = vpop.f32.mrb[0].mxu0
  %v1625 = vpop.f32.mrb[0].mxu0
  %v1626 = vadd.f32 0.0, %v1625
  %v1627 = vpop.f32.mrb[0].mxu0
  %1628 = vmatprep.mubr.bf16.mxu0 0
  %1629 = vmatmul.mubr.bf16.gmra.mrb[0].mxu0 %v1525
  %v1630 = vpop.f32.mrb[0].mxu0
  %v1631 = vadd.f32 0.0, %v1630
  %v1632 = vpop.f32.mrb[0].mxu0
  %v1633 = vpop.f32.mrb[0].mxu0
  %v1634 = vadd.f32 0.0, %v1633
  %v1635 = vpop.f32.mrb[0].mxu0
  %1636 = vmatprep.mubr.bf16.mxu0 0
  %1637 = vmatmul.mubr.bf16.gmra.mrb[0].mxu0 %v1526
  %v1638 = vpop.f32.mrb[0].mxu0
  %v1639 = vadd.f32 0.0, %v1638
  %v1640 = vpop.f32.mrb[0].mxu0
  %v1641 = vpop.f32.mrb[0].mxu0
  %v1642 = vadd.f32 0.0, %v1641
  %v1643 = vpop.f32.mrb[0].mxu0
  %1644 = vmatprep.mubr.bf16.mxu0 0
  %1645 = vmatmul.mubr.bf16.gmra.mrb[0].mxu0 %v1527
  %v1646 = vpop.f32.mrb[0].mxu0
  %v1647 = vadd.f32 0.0, %v1646
  %v1648 = vpop.f32.mrb[0].mxu0
  %v1649 = vpop.f32.mrb[0].mxu0
  %v1650 = vadd.f32 0.0, %v1649
  %v1651 = vpop.f32.mrb[0].mxu0
  %1652 = vmatprep.mubr.bf16.mxu0 0
  %1653 = vmatmul.mubr.bf16.gmra.mrb[0].mxu0 %v1528
  %v1654 = vpop.f32.mrb[0].mxu0
  %v1655 = vadd.f32 0.0, %v1654
  %v1656 = vpop.f32.mrb[0].mxu0
  %v1657 = vpop.f32.mrb[0].mxu0
  %v1658 = vadd.f32 0.0, %v1657
  %v1659 = vpop.f32.mrb[0].mxu0
  %1660 = vmatprep.mubr.bf16.mxu0 0
  %1661 = vmatmul.mubr.bf16.gmra.mrb[0].mxu0 %v1529
  %v1662 = vpop.f32.mrb[0].mxu0
  %v1663 = vadd.f32 0.0, %v1662
  %v1664 = vpop.f32.mrb[0].mxu0
  %v1665 = vpop.f32.mrb[0].mxu0
  %v1666 = vadd.f32 0.0, %v1665
  %v1667 = vpop.f32.mrb[0].mxu0
  %1668 = vmatprep.mubr.bf16.mxu0 0
  %1669 = vmatmul.mubr.bf16.gmra.mrb[0].mxu0 %v1530
  %v1670 = vpop.f32.mrb[0].mxu0
  %v1671 = vadd.f32 0.0, %v1670
  %v1672 = vpop.f32.mrb[0].mxu0
  %v1673 = vpop.f32.mrb[0].mxu0
  %v1674 = vadd.f32 0.0, %v1673
  %v1675 = vpop.f32.mrb[0].mxu0
  %1676 = vmatprep.mubr.bf16.mxu0 0
  %1677 = vmatmul.mubr.bf16.gmra.mrb[0].mxu0 %v1531
  %v1678 = vpop.f32.mrb[0].mxu0
  %v1679 = vadd.f32 0.0, %v1678
  %v1680 = vpop.f32.mrb[0].mxu0
  %v1681 = vpop.f32.mrb[0].mxu0
  %v1682 = vadd.f32 0.0, %v1681
  %v1683 = vpop.f32.mrb[0].mxu0
  %1684 = vmatprep.mubr.bf16.mxu0 0
  %1685 = vmatmul.mubr.bf16.gmra.mrb[0].mxu0 %v1532
  %v1686 = vpop.f32.mrb[0].mxu0
  %v1687 = vadd.f32 0.0, %v1686
  %v1688 = vpop.f32.mrb[0].mxu0
  %v1689 = vpop.f32.mrb[0].mxu0
  %v1690 = vadd.f32 0.0, %v1689
  %v1691 = vpop.f32.mrb[0].mxu0
  %1692 = vmatprep.mubr.bf16.mxu0 0
  %1693 = vmatmul.mubr.bf16.gmra.mrb[0].mxu0 %v1533
  %v1694 = vpop.f32.mrb[0].mxu0
  %v1695 = vadd.f32 0.0, %v1694
  %v1696 = vpop.f32.mrb[0].mxu0
  %v1697 = vpop.f32.mrb[0].mxu0
  %v1698 = vadd.f32 0.0, %v1697
  %v1699 = vpop.f32.mrb[0].mxu0
  %1700 = vmatprep.mubr.bf16.mxu0 0
  %1701 = vmatmul.mubr.bf16.gmra.mrb[0].mxu0 %v1534
  %v1702 = vpop.f32.mrb[0].mxu0
  %v1703 = vadd.f32 0.0, %v1702
  %v1704 = vpop.f32.mrb[0].mxu0
  %v1705 = vpop.f32.mrb[0].mxu0
  %v1706 = vadd.f32 0.0, %v1705
  %v1707 = vpop.f32.mrb[0].mxu0
  %1708 = vmatprep.mubr.bf16.mxu0 0
  %1709 = vmatmul.mubr.bf16.gmra.mrb[0].mxu0 %v1535
  %v1710 = vpop.f32.mrb[0].mxu0
  %v1711 = vadd.f32 0.0, %v1710
  %v1712 = vpop.f32.mrb[0].mxu0
  %v1713 = vpop.f32.mrb[0].mxu0
  %v1714 = vadd.f32 0.0, %v1713
  %v1715 = vpop.f32.mrb[0].mxu0
  %1716 = vmatprep.mubr.bf16.mxu0 0
  %1717 = vmatmul.mubr.bf16.gmra.mrb[0].mxu0 %v1536
  %v1718 = vpop.f32.mrb[0].mxu0
  %v1719 = vadd.f32 0.0, %v1718
  %v1720 = vpop.f32.mrb[0].mxu0
  %v1721 = vpop.f32.mrb[0].mxu0
  %v1722 = vadd.f32 0.0, %v1721
  %v1723 = vpop.f32.mrb[0].mxu0
  %1724 = vmatprep.mubr.bf16.mxu0 0
  %1725 = vmatmul.mubr.bf16.gmra.mrb[0].mxu0 %v1537
  %v1726 = vpop.f32.mrb[0].mxu0
  %v1727 = vadd.f32 0.0, %v1726
  %v1728 = vpop.f32.mrb[0].mxu0
  %v1729 = vpop.f32.mrb[0].mxu0
  %v1730 = vadd.f32 0.0, %v1729
  %v1731 = vpop.f32.mrb[0].mxu0
  %1732 = vmatprep.mubr.bf16.mxu0 0
  %1733 = vmatmul.mubr.bf16.gmra.mrb[0].mxu0 %v1538
  %v1734 = vpop.f32.mrb[0].mxu0
  %v1735 = vadd.f32 0.0, %v1734
  %v1736 = vpop.f32.mrb[0].mxu0
  %v1737 = vpop.f32.mrb[0].mxu0
  %v1738 = vadd.f32 0.0, %v1737
  %v1739 = vpop.f32.mrb[0].mxu0
  %1740 = vmatprep.mubr.bf16.mxu0 0
  %1741 = vmatmul.mubr.bf16.gmra.mrb[0].mxu0 %v1539
  %v1742 = vpop.f32.mrb[0].mxu0
  %v1743 = vadd.f32 0.0, %v1742
  %v1744 = vpop.f32.mrb[0].mxu0
  %v1745 = vpop.f32.mrb[0].mxu0
  %v1746 = vadd.f32 0.0, %v1745
  %v1747 = vpop.f32.mrb[0].mxu0
  %1748 = vmatprep.mubr.bf16.mxu0 0
  %1749 = vmatmul.mubr.bf16.gmra.mrb[0].mxu0 %v1540
  %v1750 = vpop.f32.mrb[0].mxu0
  %v1751 = vadd.f32 0.0, %v1750
  %v1752 = vpop.f32.mrb[0].mxu0
  %v1753 = vpop.f32.mrb[0].mxu0
  %v1754 = vadd.f32 0.0, %v1753
  %v1755 = vpop.f32.mrb[0].mxu0
  %1756 = vmatprep.mubr.bf16.mxu0 0
  %1757 = vmatmul.mubr.bf16.gmra.mrb[0].mxu0 %v1541
  %v1758 = vpop.f32.mrb[0].mxu0
  %v1759 = vadd.f32 0.0, %v1758
  %v1760 = vpop.f32.mrb[0].mxu0
  %v1761 = vpop.f32.mrb[0].mxu0
  %v1762 = vadd.f32 0.0, %v1761
  %v1763 = vpop.f32.mrb[0].mxu0
  %1764 = vmatprep.mubr.bf16.mxu0 0
  %1765 = vmatmul.mubr.bf16.gmra.mrb[0].mxu0 %v1542
  %v1766 = vpop.f32.mrb[0].mxu0
  %v1767 = vadd.f32 0.0, %v1766
  %v1768 = vpop.f32.mrb[0].mxu0
  %v1769 = vpop.f32.mrb[0].mxu0
  %v1770 = vadd.f32 0.0, %v1769
  %v1771 = vpop.f32.mrb[0].mxu0
  %1772 = vmatprep.mubr.bf16.mxu0 0
  %1773 = vmatmul.mubr.bf16.gmra.mrb[0].mxu0 %v1543
  %v1774 = vpop.f32.mrb[0].mxu0
  %v1775 = vadd.f32 0.0, %v1774
  %v1776 = vpop.f32.mrb[0].mxu0
  %v1777 = vpop.f32.mrb[0].mxu0
  %v1778 = vadd.f32 0.0, %v1777
  %v1779 = vpop.f32.mrb[0].mxu0
  %1780 = vmatprep.mubr.bf16.mxu0 0
  %1781 = vmatmul.mubr.bf16.gmra.mrb[0].mxu0 %v1544
  %v1782 = vpop.f32.mrb[0].mxu0
  %v1783 = vadd.f32 0.0, %v1782
  %v1784 = vpop.f32.mrb[0].mxu0
  %v1785 = vpop.f32.mrb[0].mxu0
  %v1786 = vadd.f32 0.0, %v1785
  %v1787 = vpop.f32.mrb[0].mxu0
  %1788 = vmatprep.mubr.bf16.mxu0 0
  %1789 = vmatmul.mubr.bf16.gmra.mrb[0].mxu0 %v1545
  %v1790 = vpop.f32.mrb[0].mxu0
  %v1791 = vadd.f32 0.0, %v1790
  %v1792 = vpop.f32.mrb[0].mxu0
  %v1793 = vpop.f32.mrb[0].mxu0
  %v1794 = vadd.f32 0.0, %v1793
  %v1795 = vpop.f32.mrb[0].mxu0
  %1796 = vmatprep.mubr.bf16.mxu0 0
  %1797 = vmatmul.mubr.bf16.gmra.mrb[0].mxu0 %v1546
  %v1798 = vpop.f32.mrb[0].mxu0
  %v1799 = vadd.f32 0.0, %v1798
  %v1800 = vpop.f32.mrb[0].mxu0
  %v1801 = vpop.f32.mrb[0].mxu0
  %v1802 = vpop.f32.mrb[0].mxu0
  %1803 = vdwg.mxu0
  %v1804 = vmax.f32 %v320, %v749
  %v1805 = vmax.f32 %v323, %v752
  %v1806 = vmax.f32 %v328, %v757
  %v1807 = vmax.f32 %v331, %v760
  %v1808 = vmax.f32 %v336, %v765
  %v1809 = vmax.f32 %v339, %v768
  %v1810 = vmax.f32 %v344, %v773
  %v1811 = vmax.f32 %v347, %v776
  %v1812 = vmax.f32 %v352, %v781
  %v1813 = vmax.f32 %v355, %v784
  %v1814 = vmax.f32 %v360, %v789
  %v1815 = vmax.f32 %v363, %v792
  %v1816 = vmax.f32 %v368, %v797
  %v1817 = vmax.f32 %v371, %v800
  %v1818 = vmax.f32 %v376, %v805
  %v1819 = vmax.f32 %v379, %v808
  %v1820 = vmax.f32 %v384, %v813
  %v1821 = vmax.f32 %v387, %v816
  %v1822 = vmax.f32 %v392, %v821
  %v1823 = vmax.f32 %v395, %v824
  %v1824 = vmax.f32 %v400, %v829
  %v1825 = vmax.f32 %v403, %v832
  %v1826 = vmax.f32 %v408, %v837
  %v1827 = vmax.f32 %v411, %v840
  %v1828 = vmax.f32 %v416, %v845
  %v1829 = vmax.f32 %v419, %v848
  %v1830 = vmax.f32 %v424, %v853
  %v1831 = vmax.f32 %v427, %v856
  %v1832 = vmax.f32 %v432, %v861
  %v1833 = vmax.f32 %v435, %v864
  %v1834 = vmax.f32 %v440, %v869
  %v1835 = vmax.f32 %v443, %v872
  %v1836 = vmax.f32 %v448, %v877
  %v1837 = vmax.f32 %v451, %v880
  %v1838 = vmax.f32 %v456, %v885
  %v1839 = vmax.f32 %v459, %v888
  %v1840 = vmax.f32 %v464, %v893
  %v1841 = vmax.f32 %v467, %v896
  %v1842 = vmax.f32 %v472, %v901
  %v1843 = vmax.f32 %v475, %v904
  %v1844 = vmax.f32 %v480, %v909
  %v1845 = vmax.f32 %v483, %v912
  %v1846 = vmax.f32 %v488, %v917
  %v1847 = vmax.f32 %v491, %v920
  %v1848 = vmax.f32 %v496, %v925
  %v1849 = vmax.f32 %v499, %v928
  %v1850 = vmax.f32 %v504, %v933
  %v1851 = vmax.f32 %v507, %v936
  %v1852 = vmax.f32 %v512, %v941
  %v1853 = vmax.f32 %v1178, %v1607
  %v1854 = vmax.f32 %v1181, %v1610
  %v1855 = vmax.f32 %v1186, %v1615
  %v1856 = vmax.f32 %v1189, %v1618
  %v1857 = vmax.f32 %v1194, %v1623
  %v1858 = vmax.f32 %v1197, %v1626
  %v1859 = vmax.f32 %v1202, %v1631
  %v1860 = vmax.f32 %v1205, %v1634
  %v1861 = vmax.f32 %v1210, %v1639
  %v1862 = vmax.f32 %v1213, %v1642
  %v1863 = vmax.f32 %v1218, %v1647
  %v1864 = vmax.f32 %v1221, %v1650
  %v1865 = vmax.f32 %v1226, %v1655
  %v1866 = vmax.f32 %v1229, %v1658
  %v1867 = vmax.f32 %v1234, %v1663
  %v1868 = vmax.f32 %v1237, %v1666
  %v1869 = vmax.f32 %v1242, %v1671
  %v1870 = vmax.f32 %v1245, %v1674
  %v1871 = vmax.f32 %v1250, %v1679
  %v1872 = vmax.f32 %v1253, %v1682
  %v1873 = vmax.f32 %v1258, %v1687
  %v1874 = vmax.f32 %v1261, %v1690
  %v1875 = vmax.f32 %v1266, %v1695
  %v1876 = vmax.f32 %v1269, %v1698
  %v1877 = vmax.f32 %v1274, %v1703
  %v1878 = vmax.f32 %v1277, %v1706
  %v1879 = vmax.f32 %v1282, %v1711
  %v1880 = vmax.f32 %v1285, %v1714
  %v1881 = vmax.f32 %v1290, %v1719
  %v1882 = vmax.f32 %v1293, %v1722
  %v1883 = vmax.f32 %v1298, %v1727
  %v1884 = vmax.f32 %v1301, %v1730
  %v1885 = vmax.f32 %v1306, %v1735
  %v1886 = vmax.f32 %v1309, %v1738
  %v1887 = vmax.f32 %v1314, %v1743
  %v1888 = vmax.f32 %v1317, %v1746
  %v1889 = vmax.f32 %v1322, %v1751
  %v1890 = vmax.f32 %v1325, %v1754
  %v1891 = vmax.f32 %v1330, %v1759
  %v1892 = vmax.f32 %v1333, %v1762
  %v1893 = vmax.f32 %v1338, %v1767
  %v1894 = vmax.f32 %v1341, %v1770
  %v1895 = vmax.f32 %v1346, %v1775
  %v1896 = vmax.f32 %v1349, %v1778
  %v1897 = vmax.f32 %v1354, %v1783
  %v1898 = vmax.f32 %v1357, %v1786
  %v1899 = vmax.f32 %v1362, %v1791
  %v1900 = vmax.f32 %v1365, %v1794
  %v1901 = vmax.f32 %v1370, %v1799
  %v1902 = vmax.f32 %v1804, %v1853
  %v1903 = vmax.f32 %v1805, %v1854
  %v1904 = vmax.f32 %v1806, %v1855
  %v1905 = vmax.f32 %v1807, %v1856
  %v1906 = vmax.f32 %v1808, %v1857
  %v1907 = vmax.f32 %v1809, %v1858
  %v1908 = vmax.f32 %v1810, %v1859
  %v1909 = vmax.f32 %v1811, %v1860
  %v1910 = vmax.f32 %v1812, %v1861
  %v1911 = vmax.f32 %v1813, %v1862
  %v1912 = vmax.f32 %v1814, %v1863
  %v1913 = vmax.f32 %v1815, %v1864
  %v1914 = vmax.f32 %v1816, %v1865
  %v1915 = vmax.f32 %v1817, %v1866
  %v1916 = vmax.f32 %v1818, %v1867
  %v1917 = vmax.f32 %v1819, %v1868
  %v1918 = vmax.f32 %v1820, %v1869
  %v1919 = vmax.f32 %v1821, %v1870
  %v1920 = vmax.f32 %v1822, %v1871
  %v1921 = vmax.f32 %v1823, %v1872
  %v1922 = vmax.f32 %v1824, %v1873
  %v1923 = vmax.f32 %v1825, %v1874
  %v1924 = vmax.f32 %v1826, %v1875
  %v1925 = vmax.f32 %v1827, %v1876
  %v1926 = vmax.f32 %v1828, %v1877
  %v1927 = vmax.f32 %v1829, %v1878
  %v1928 = vmax.f32 %v1830, %v1879
  %v1929 = vmax.f32 %v1831, %v1880
  %v1930 = vmax.f32 %v1832, %v1881
  %v1931 = vmax.f32 %v1833, %v1882
  %v1932 = vmax.f32 %v1834, %v1883
  %v1933 = vmax.f32 %v1835, %v1884
  %v1934 = vmax.f32 %v1836, %v1885
  %v1935 = vmax.f32 %v1837, %v1886
  %v1936 = vmax.f32 %v1838, %v1887
  %v1937 = vmax.f32 %v1839, %v1888
  %v1938 = vmax.f32 %v1840, %v1889
  %v1939 = vmax.f32 %v1841, %v1890
  %v1940 = vmax.f32 %v1842, %v1891
  %v1941 = vmax.f32 %v1843, %v1892
  %v1942 = vmax.f32 %v1844, %v1893
  %v1943 = vmax.f32 %v1845, %v1894
  %v1944 = vmax.f32 %v1846, %v1895
  %v1945 = vmax.f32 %v1847, %v1896
  %v1946 = vmax.f32 %v1848, %v1897
  %v1947 = vmax.f32 %v1849, %v1898
  %v1948 = vmax.f32 %v1850, %v1899
  %v1949 = vmax.f32 %v1851, %v1900
  %v1950 = vmax.f32 %v1852, %v1901
  %v1951 = vld [vmem:[%s5] sm:$0x1]
  %v1953 = vlaneseq
  %v1954 = vshrl.u32 %v1953, 7
  %v1955 = vsub.s32 0, %v1954
  %v1956 = vrot.slane %v1951, %v1955
  %v1958 = vadd.f32 %v1902, %v1956
  %v1959 = vadd.f32 %v1903, %v1956
  %v1960 = vadd.f32 %v1904, %v1956
  %v1961 = vadd.f32 %v1905, %v1956
  %v1962 = vadd.f32 %v1906, %v1956
  %v1963 = vadd.f32 %v1907, %v1956
  %v1964 = vadd.f32 %v1908, %v1956
  %v1965 = vadd.f32 %v1909, %v1956
  %v1966 = vadd.f32 %v1910, %v1956
  %v1967 = vadd.f32 %v1911, %v1956
  %v1968 = vadd.f32 %v1912, %v1956
  %v1969 = vadd.f32 %v1913, %v1956
  %v1970 = vadd.f32 %v1914, %v1956
  %v1971 = vadd.f32 %v1915, %v1956
  %v1972 = vadd.f32 %v1916, %v1956
  %v1973 = vadd.f32 %v1917, %v1956
  %v1974 = vadd.f32 %v1918, %v1956
  %v1975 = vadd.f32 %v1919, %v1956
  %v1976 = vadd.f32 %v1920, %v1956
  %v1977 = vadd.f32 %v1921, %v1956
  %v1978 = vadd.f32 %v1922, %v1956
  %v1979 = vadd.f32 %v1923, %v1956
  %v1980 = vadd.f32 %v1924, %v1956
  %v1981 = vadd.f32 %v1925, %v1956
  %v1982 = vadd.f32 %v1926, %v1956
  %v1983 = vadd.f32 %v1927, %v1956
  %v1984 = vadd.f32 %v1928, %v1956
  %v1985 = vadd.f32 %v1929, %v1956
  %v1986 = vadd.f32 %v1930, %v1956
  %v1987 = vadd.f32 %v1931, %v1956
  %v1988 = vadd.f32 %v1932, %v1956
  %v1989 = vadd.f32 %v1933, %v1956
  %v1990 = vadd.f32 %v1934, %v1956
  %v1991 = vadd.f32 %v1935, %v1956
  %v1992 = vadd.f32 %v1936, %v1956
  %v1993 = vadd.f32 %v1937, %v1956
  %v1994 = vadd.f32 %v1938, %v1956
  %v1995 = vadd.f32 %v1939, %v1956
  %v1996 = vadd.f32 %v1940, %v1956
  %v1997 = vadd.f32 %v1941, %v1956
  %v1998 = vadd.f32 %v1942, %v1956
  %v1999 = vadd.f32 %v1943, %v1956
  %v2000 = vadd.f32 %v1944, %v1956
  %v2001 = vadd.f32 %v1945, %v1956
  %v2002 = vadd.f32 %v1946, %v1956
  %v2003 = vadd.f32 %v1947, %v1956
  %v2004 = vadd.f32 %v1948, %v1956
  %v2005 = vadd.f32 %v1949, %v1956
  %v2006 = vadd.f32 %v1950, %v1956
  %v2007 = vmax.f32 %v1958, 0.0
  %v2008 = vmax.f32 %v1959, 0.0
  %v2009 = vmax.f32 %v1960, 0.0
  %v2010 = vmax.f32 %v1961, 0.0
  %v2011 = vmax.f32 %v1962, 0.0
  %v2012 = vmax.f32 %v1963, 0.0
  %v2013 = vmax.f32 %v1964, 0.0
  %v2014 = vmax.f32 %v1965, 0.0
  %v2015 = vmax.f32 %v1966, 0.0
  %v2016 = vmax.f32 %v1967, 0.0
  %v2017 = vmax.f32 %v1968, 0.0
  %v2018 = vmax.f32 %v1969, 0.0
  %v2019 = vmax.f32 %v1970, 0.0
  %v2020 = vmax.f32 %v1971, 0.0
  %v2021 = vmax.f32 %v1972, 0.0
  %v2022 = vmax.f32 %v1973, 0.0
  %v2023 = vmax.f32 %v1974, 0.0
  %v2024 = vmax.f32 %v1975, 0.0
  %v2025 = vmax.f32 %v1976, 0.0
  %v2026 = vmax.f32 %v1977, 0.0
  %v2027 = vmax.f32 %v1978, 0.0
  %v2028 = vmax.f32 %v1979, 0.0
  %v2029 = vmax.f32 %v1980, 0.0
  %v2030 = vmax.f32 %v1981, 0.0
  %v2031 = vmax.f32 %v1982, 0.0
  %v2032 = vmax.f32 %v1983, 0.0
  %v2033 = vmax.f32 %v1984, 0.0
  %v2034 = vmax.f32 %v1985, 0.0
  %v2035 = vmax.f32 %v1986, 0.0
  %v2036 = vmax.f32 %v1987, 0.0
  %v2037 = vmax.f32 %v1988, 0.0
  %v2038 = vmax.f32 %v1989, 0.0
  %v2039 = vmax.f32 %v1990, 0.0
  %v2040 = vmax.f32 %v1991, 0.0
  %v2041 = vmax.f32 %v1992, 0.0
  %v2042 = vmax.f32 %v1993, 0.0
  %v2043 = vmax.f32 %v1994, 0.0
  %v2044 = vmax.f32 %v1995, 0.0
  %v2045 = vmax.f32 %v1996, 0.0
  %v2046 = vmax.f32 %v1997, 0.0
  %v2047 = vmax.f32 %v1998, 0.0
  %v2048 = vmax.f32 %v1999, 0.0
  %v2049 = vmax.f32 %v2000, 0.0
  %v2050 = vmax.f32 %v2001, 0.0
  %v2051 = vmax.f32 %v2002, 0.0
  %v2052 = vmax.f32 %v2003, 0.0
  %v2053 = vmax.f32 %v2004, 0.0
  %v2054 = vmax.f32 %v2005, 0.0
  %v2055 = vmax.f32 %v2006, 0.0
  %v2056 = vpack.c.bf16 %v2008, %v2007
  %v2057 = vpack.c.bf16 %v2010, %v2009
  %v2058 = vpack.c.bf16 %v2012, %v2011
  %v2059 = vpack.c.bf16 %v2014, %v2013
  %v2060 = vpack.c.bf16 %v2016, %v2015
  %v2061 = vpack.c.bf16 %v2018, %v2017
  %v2062 = vpack.c.bf16 %v2020, %v2019
  %v2063 = vpack.c.bf16 %v2022, %v2021
  %v2064 = vpack.c.bf16 %v2024, %v2023
  %v2065 = vpack.c.bf16 %v2026, %v2025
  %v2066 = vpack.c.bf16 %v2028, %v2027
  %v2067 = vpack.c.bf16 %v2030, %v2029
  %v2068 = vpack.c.bf16 %v2032, %v2031
  %v2069 = vpack.c.bf16 %v2034, %v2033
  %v2070 = vpack.c.bf16 %v2036, %v2035
  %v2071 = vpack.c.bf16 %v2038, %v2037
  %v2072 = vpack.c.bf16 %v2040, %v2039
  %v2073 = vpack.c.bf16 %v2042, %v2041
  %v2074 = vpack.c.bf16 %v2044, %v2043
  %v2075 = vpack.c.bf16 %v2046, %v2045
  %v2076 = vpack.c.bf16 %v2048, %v2047
  %v2077 = vpack.c.bf16 %v2050, %v2049
  %v2078 = vpack.c.bf16 %v2052, %v2051
  %v2079 = vpack.c.bf16 %v2054, %v2053
  %v2080 = vpack.c.bf16 %v2055, %v2055
  %v2106 = vunpack.c.l.b16 %v2056
  %v2107 = vunpack.c.h.b16 %v2056
  %v2108 = vunpack.c.l.b16 %v2057
  %v2109 = vunpack.c.h.b16 %v2057
  %v2110 = vunpack.c.l.b16 %v2058
  %v2111 = vunpack.c.h.b16 %v2058
  %v2112 = vunpack.c.l.b16 %v2059
  %v2113 = vunpack.c.h.b16 %v2059
  %v2114 = vunpack.c.l.b16 %v2060
  %v2115 = vunpack.c.h.b16 %v2060
  %v2116 = vunpack.c.l.b16 %v2061
  %v2117 = vunpack.c.h.b16 %v2061
  %v2118 = vunpack.c.l.b16 %v2062
  %v2119 = vunpack.c.h.b16 %v2062
  %v2120 = vunpack.c.l.b16 %v2063
  %v2121 = vunpack.c.h.b16 %v2063
  %v2122 = vunpack.c.l.b16 %v2064
  %v2123 = vunpack.c.h.b16 %v2064
  %v2124 = vunpack.c.l.b16 %v2065
  %v2125 = vunpack.c.h.b16 %v2065
  %v2126 = vunpack.c.l.b16 %v2066
  %v2127 = vunpack.c.h.b16 %v2066
  %v2128 = vunpack.c.l.b16 %v2067
  %v2129 = vunpack.c.h.b16 %v2067
  %v2130 = vunpack.c.l.b16 %v2068
  %v2131 = vunpack.c.h.b16 %v2068
  %v2132 = vunpack.c.l.b16 %v2069
  %v2133 = vunpack.c.h.b16 %v2069
  %v2134 = vunpack.c.l.b16 %v2070
  %v2135 = vunpack.c.h.b16 %v2070
  %v2136 = vunpack.c.l.b16 %v2071
  %v2137 = vunpack.c.h.b16 %v2071
  %v2138 = vunpack.c.l.b16 %v2072
  %v2139 = vunpack.c.h.b16 %v2072
  %v2140 = vunpack.c.l.b16 %v2073
  %v2141 = vunpack.c.h.b16 %v2073
  %v2142 = vunpack.c.l.b16 %v2074
  %v2143 = vunpack.c.h.b16 %v2074
  %v2144 = vunpack.c.l.b16 %v2075
  %v2145 = vunpack.c.h.b16 %v2075
  %v2146 = vunpack.c.l.b16 %v2076
  %v2147 = vunpack.c.h.b16 %v2076
  %v2148 = vunpack.c.l.b16 %v2077
  %v2149 = vunpack.c.h.b16 %v2077
  %v2150 = vunpack.c.l.b16 %v2078
  %v2151 = vunpack.c.h.b16 %v2078
  %v2152 = vunpack.c.l.b16 %v2079
  %v2153 = vunpack.c.h.b16 %v2079
  %v2154 = vunpack.c.l.b16 %v2080
  %v2155 = vpack.c.b16 %v2106, %v2106
  %v2156 = vpack.c.b16 %v2107, %v2107
  %v2157 = vpack.c.b16 %v2108, %v2108
  %v2158 = vpack.c.b16 %v2109, %v2109
  %v2159 = vpack.c.b16 %v2110, %v2110
  %v2160 = vpack.c.b16 %v2111, %v2111
  %v2161 = vpack.c.b16 %v2112, %v2112
  %v2162 = vpack.c.b16 %v2113, %v2113
  %v2163 = vpack.c.b16 %v2114, %v2114
  %v2164 = vpack.c.b16 %v2115, %v2115
  %v2165 = vpack.c.b16 %v2116, %v2116
  %v2166 = vpack.c.b16 %v2117, %v2117
  %v2167 = vpack.c.b16 %v2118, %v2118
  %v2168 = vpack.c.b16 %v2119, %v2119
  %v2169 = vpack.c.b16 %v2120, %v2120
  %v2170 = vpack.c.b16 %v2121, %v2121
  %v2171 = vpack.c.b16 %v2122, %v2122
  %v2172 = vpack.c.b16 %v2123, %v2123
  %v2173 = vpack.c.b16 %v2124, %v2124
  %v2174 = vpack.c.b16 %v2125, %v2125
  %v2175 = vpack.c.b16 %v2126, %v2126
  %v2176 = vpack.c.b16 %v2127, %v2127
  %v2177 = vpack.c.b16 %v2128, %v2128
  %v2178 = vpack.c.b16 %v2129, %v2129
  %v2179 = vpack.c.b16 %v2130, %v2130
  %v2180 = vpack.c.b16 %v2131, %v2131
  %v2181 = vpack.c.b16 %v2132, %v2132
  %v2182 = vpack.c.b16 %v2133, %v2133
  %v2183 = vpack.c.b16 %v2134, %v2134
  %v2184 = vpack.c.b16 %v2135, %v2135
  %v2185 = vpack.c.b16 %v2136, %v2136
  %v2186 = vpack.c.b16 %v2137, %v2137
  %v2187 = vpack.c.b16 %v2138, %v2138
  %v2188 = vpack.c.b16 %v2139, %v2139
  %v2189 = vpack.c.b16 %v2140, %v2140
  %v2190 = vpack.c.b16 %v2141, %v2141
  %v2191 = vpack.c.b16 %v2142, %v2142
  %v2192 = vpack.c.b16 %v2143, %v2143
  %v2193 = vpack.c.b16 %v2144, %v2144
  %v2194 = vpack.c.b16 %v2145, %v2145
  %v2195 = vpack.c.b16 %v2146, %v2146
  %v2196 = vpack.c.b16 %v2147, %v2147
  %v2197 = vpack.c.b16 %v2148, %v2148
  %v2198 = vpack.c.b16 %v2149, %v2149
  %v2199 = vpack.c.b16 %v2150, %v2150
  %v2200 = vpack.c.b16 %v2151, %v2151
  %v2201 = vpack.c.b16 %v2152, %v2152
  %v2202 = vpack.c.b16 %v2153, %v2153
  %v2203 = vpack.c.b16 %v2154, %v2154
  %2253 = vst [vmem:[%s6] sm:$0xf] %v2155
  %2254 = vst [vmem:[%s6 + $0x4] sm:$0xf] %v2156
  %2255 = vst [vmem:[%s6 + $0x8] sm:$0xf] %v2157
  %2256 = vst [vmem:[%s6 + $0xc] sm:$0xf] %v2158
  %2257 = vst [vmem:[%s6 + $0x10] sm:$0xf] %v2159
  %2258 = vst [vmem:[%s6 + $0x14] sm:$0xf] %v2160
  %2259 = vst [vmem:[%s6 + $0x18] sm:$0xf] %v2161
  %2260 = vst [vmem:[%s6 + $0x1c] sm:$0xf] %v2162
  %2261 = vst [vmem:[%s6 + $0x20] sm:$0xf] %v2163
  %2262 = vst [vmem:[%s6 + $0x24] sm:$0xf] %v2164
  %2263 = vst [vmem:[%s6 + $0x28] sm:$0xf] %v2165
  %2264 = vst [vmem:[%s6 + $0x2c] sm:$0xf] %v2166
  %2265 = vst [vmem:[%s6 + $0x30] sm:$0xf] %v2167
  %2266 = vst [vmem:[%s6 + $0x34] sm:$0xf] %v2168
  %2267 = vst [vmem:[%s6 + $0x38] sm:$0xf] %v2169
  %2268 = vst [vmem:[%s6 + $0x3c] sm:$0xf] %v2170
  %2269 = vst [vmem:[%s6 + $0x40] sm:$0xf] %v2171
  %2270 = vst [vmem:[%s6 + $0x44] sm:$0xf] %v2172
  %2271 = vst [vmem:[%s6 + $0x48] sm:$0xf] %v2173
  %2272 = vst [vmem:[%s6 + $0x4c] sm:$0xf] %v2174
  %2273 = vst [vmem:[%s6 + $0x50] sm:$0xf] %v2175
  %2274 = vst [vmem:[%s6 + $0x54] sm:$0xf] %v2176
  %2275 = vst [vmem:[%s6 + $0x58] sm:$0xf] %v2177
  %2276 = vst [vmem:[%s6 + $0x5c] sm:$0xf] %v2178
  %2277 = vst [vmem:[%s6 + $0x60] sm:$0xf] %v2179
  %2278 = vst [vmem:[%s6 + $0x64] sm:$0xf] %v2180
  %2279 = vst [vmem:[%s6 + $0x68] sm:$0xf] %v2181
  %2280 = vst [vmem:[%s6 + $0x6c] sm:$0xf] %v2182
  %2281 = vst [vmem:[%s6 + $0x70] sm:$0xf] %v2183
  %2282 = vst [vmem:[%s6 + $0x74] sm:$0xf] %v2184
  %2283 = vst [vmem:[%s6 + $0x78] sm:$0xf] %v2185
  %2284 = vst [vmem:[%s6 + $0x7c] sm:$0xf] %v2186
  %2285 = vst [vmem:[%s6 + $0x80] sm:$0xf] %v2187
  %2286 = vst [vmem:[%s6 + $0x84] sm:$0xf] %v2188
  %2287 = vst [vmem:[%s6 + $0x88] sm:$0xf] %v2189
  %2288 = vst [vmem:[%s6 + $0x8c] sm:$0xf] %v2190
  %2289 = vst [vmem:[%s6 + $0x90] sm:$0xf] %v2191
  %2290 = vst [vmem:[%s6 + $0x94] sm:$0xf] %v2192
  %2291 = vst [vmem:[%s6 + $0x98] sm:$0xf] %v2193
  %2292 = vst [vmem:[%s6 + $0x9c] sm:$0xf] %v2194
  %2293 = vst [vmem:[%s6 + $0xa0] sm:$0xf] %v2195
  %2294 = vst [vmem:[%s6 + $0xa4] sm:$0xf] %v2196
  %2295 = vst [vmem:[%s6 + $0xa8] sm:$0xf] %v2197
  %2296 = vst [vmem:[%s6 + $0xac] sm:$0xf] %v2198
  %2297 = vst [vmem:[%s6 + $0xb0] sm:$0xf] %v2199
  %2298 = vst [vmem:[%s6 + $0xb4] sm:$0xf] %v2200
  %2299 = vst [vmem:[%s6 + $0xb8] sm:$0xf] %v2201
  %2300 = vst [vmem:[%s6 + $0xbc] sm:$0xf] %v2202
  %2301 = vst [vmem:[%s6 + $0xc0] sm:$0xf] %v2203
  // Predicated region
  $region26: #{net_forward.3} parent=0 // pred_check
    _
  $region27: #{net_forward.3} parent=0 // pred_check_branch
    %2303 = sbr.rel (0) target = $region29
  $region28: #{net_forward.3} parent=0 // pred_region
    _
  $region29: #{net_forward.3} parent=0 // pred_fallthru
    _
  // Predicated region
  $region30: #{net_forward.3} parent=0 // pred_check
    _
  $region31: #{net_forward.3} parent=0 // pred_check_branch
    %2305 = sbr.rel (0) target = $region33
  $region32: #{net_forward.3} parent=0 // pred_region
    _
  $region33: #{net_forward.3} parent=0 // pred_fallthru
    _

// kernel: net_forward.4
$region0: #{net_forward.4}
  #allocation0 [shape = 'u32[]', space=smem, size = 0x4, offset = 0x4, fixed_abs, tag = 'smem constant byte address 0x4 - core index']
  #allocation1 [shape = 'u32[144,128]{1,0:T(1,128)}', space=vmem, size = 0x12000, scoped, tag = 'internal scratch']
  %s0 = inlined_call_operand.vmem [shape: bf16[56,256], index: 0, kind: input, shape index: {}]
  %s1 = inlined_call_operand.vmem [shape: bf16[56,256], index: 1, kind: input, shape index: {}]
  %s2 = inlined_call_operand.vmem [shape: bf16[56,256], index: 2, kind: input, shape index: {}]
  %s3 = inlined_call_operand.vmem [shape: bf16[56,256], index: 3, kind: input, shape index: {}]
  %s4 = inlined_call_operand.vmem [shape: bf16[256,128], index: 4, kind: input, shape index: {}]
  %s5 = inlined_call_operand.vmem [shape: f32[1,128], index: 5, kind: input, shape index: {}]
  %s6 = inlined_call_operand.vmem [shape: bf16[56,128], index: 6, kind: output, shape index: {}]
  %s7 = sld [smem:[#allocation0]]
  $region34: #{net_forward.4} parent=0
    _
  %s9 = ssub.s32 1, %s7
  %s10 = scalar_select 0, %s9, %s7
  // Predicated region
  $region2: #{net_forward.4} parent=0 // pred_check
    _
  $region3: #{net_forward.4} parent=0 // pred_check_branch
    %12 = sbr.rel (0) target = $region5
  $region4: #{net_forward.4} parent=0 // pred_region
    _
  $region5: #{net_forward.4} parent=0 // pred_fallthru
    _
  // Predicated region
  $region6: #{net_forward.4} parent=0 // pred_check
    _
  $region7: #{net_forward.4} parent=0 // pred_check_branch
    %14 = sbr.rel (0) target = $region9
  $region8: #{net_forward.4} parent=0 // pred_region
    _
  $region9: #{net_forward.4} parent=0 // pred_fallthru
    _
  // Predicated region
  $region10: #{net_forward.4} parent=0 // pred_check
    _
  $region11: #{net_forward.4} parent=0 // pred_check_branch
    %16 = sbr.rel (0) target = $region13
  $region12: #{net_forward.4} parent=0 // pred_region
    _
  $region13: #{net_forward.4} parent=0 // pred_fallthru
    _
  // Predicated region
  $region14: #{net_forward.4} parent=0 // pred_check
    _
  $region15: #{net_forward.4} parent=0 // pred_check_branch
    %18 = sbr.rel (0) target = $region17
  $region16: #{net_forward.4} parent=0 // pred_region
    _
  $region17: #{net_forward.4} parent=0 // pred_fallthru
    _
  // Predicated region
  $region18: #{net_forward.4} parent=0 // pred_check
    _
  $region19: #{net_forward.4} parent=0 // pred_check_branch
    %20 = sbr.rel (0) target = $region21
  $region20: #{net_forward.4} parent=0 // pred_region
    _
  $region21: #{net_forward.4} parent=0 // pred_fallthru
    _
  // Predicated region
  $region22: #{net_forward.4} parent=0 // pred_check
    _
  $region23: #{net_forward.4} parent=0 // pred_check_branch
    %22 = sbr.rel (0) target = $region25
  $region24: #{net_forward.4} parent=0 // pred_region
    _
  $region25: #{net_forward.4} parent=0 // pred_fallthru
    _
  %v24 = vld [vmem:[%s4] sm:$0xf]
  %v25 = vld [vmem:[%s4 + $0x4] sm:$0xf]
  %v26 = vld [vmem:[%s4 + $0x8] sm:$0xf]
  %v27 = vld [vmem:[%s4 + $0xc] sm:$0xf]
  %v28 = vld [vmem:[%s4 + $0x10] sm:$0xf]
  %v29 = vld [vmem:[%s4 + $0x14] sm:$0xf]
  %v30 = vld [vmem:[%s4 + $0x18] sm:$0xf]
  %v31 = vld [vmem:[%s4 + $0x1c] sm:$0xf]
  %v32 = vld [vmem:[%s4 + $0x20] sm:$0xf]
  %v33 = vld [vmem:[%s4 + $0x24] sm:$0xf]
  %v34 = vld [vmem:[%s4 + $0x28] sm:$0xf]
  %v35 = vld [vmem:[%s4 + $0x2c] sm:$0xf]
  %v36 = vld [vmem:[%s4 + $0x30] sm:$0xf]
  %v37 = vld [vmem:[%s4 + $0x34] sm:$0xf]
  %v38 = vld [vmem:[%s4 + $0x38] sm:$0xf]
  %v39 = vld [vmem:[%s4 + $0x3c] sm:$0xf]
  %v40 = vld [vmem:[%s4 + $0x40] sm:$0xf]
  %v41 = vld [vmem:[%s4 + $0x44] sm:$0xf]
  %v42 = vld [vmem:[%s4 + $0x48] sm:$0xf]
  %v43 = vld [vmem:[%s4 + $0x4c] sm:$0xf]
  %v44 = vld [vmem:[%s4 + $0x50] sm:$0xf]
  %v45 = vld [vmem:[%s4 + $0x54] sm:$0xf]
  %v46 = vld [vmem:[%s4 + $0x58] sm:$0xf]
  %v47 = vld [vmem:[%s4 + $0x5c] sm:$0xf]
  %v48 = vld [vmem:[%s4 + $0x60] sm:$0xf]
  %v49 = vld [vmem:[%s4 + $0x64] sm:$0xf]
  %v50 = vld [vmem:[%s4 + $0x68] sm:$0xf]
  %v51 = vld [vmem:[%s4 + $0x6c] sm:$0xf]
  %v52 = vld [vmem:[%s4 + $0x70] sm:$0xf]
  %v53 = vld [vmem:[%s4 + $0x74] sm:$0xf]
  %v54 = vld [vmem:[%s4 + $0x78] sm:$0xf]
  %v55 = vld [vmem:[%s4 + $0x7c] sm:$0xf]
  %v56 = vld [vmem:[%s0] sm:$0xff]
  %v57 = vld [vmem:[%s0 + $0x8] sm:$0xff]
  %v58 = vld [vmem:[%s0 + $0x10] sm:$0xff]
  %v59 = vld [vmem:[%s0 + $0x18] sm:$0xff]
  %v60 = vld [vmem:[%s0 + $0x20] sm:$0xff]
  %v61 = vld [vmem:[%s0 + $0x28] sm:$0xff]
  %v62 = vld [vmem:[%s0 + $0x30] sm:$0xff]
  %v70 = vunpack.c.l.b16 %v56
  %v71 = vunpack.c.h.b16 %v56
  %v72 = vunpack.c.l.b16 %v57
  %v73 = vunpack.c.h.b16 %v57
  %v74 = vunpack.c.l.b16 %v58
  %v75 = vunpack.c.h.b16 %v58
  %v76 = vunpack.c.l.b16 %v59
  %v77 = vunpack.c.h.b16 %v59
  %v78 = vunpack.c.l.b16 %v60
  %v79 = vunpack.c.h.b16 %v60
  %v80 = vunpack.c.l.b16 %v61
  %v81 = vunpack.c.h.b16 %v61
  %v82 = vunpack.c.l.b16 %v62
  %v83 = vunpack.c.h.b16 %v62
  %v84 = vpack.c.b16 %v72, %v70
  %v85 = vpack.c.b16 %v73, %v71
  %v86 = vpack.c.b16 %v76, %v74
  %v87 = vpack.c.b16 %v77, %v75
  %v88 = vpack.c.b16 %v80, %v78
  %v89 = vpack.c.b16 %v81, %v79
  %v90 = vpack.c.b16 %v82, %v82
  %v91 = vpack.c.b16 %v83, %v83
  %v132 = vunpack.c.l.b16 %v24
  %v133 = vunpack.c.l.b16 %v25
  %v134 = vunpack.c.l.b16 %v26
  %v135 = vunpack.c.l.b16 %v27
  %v136 = vunpack.c.l.b16 %v28
  %v137 = vunpack.c.l.b16 %v29
  %v138 = vunpack.c.l.b16 %v30
  %v139 = vunpack.c.l.b16 %v31
  %v140 = vunpack.c.l.b16 %v32
  %v141 = vunpack.c.l.b16 %v33
  %v142 = vunpack.c.l.b16 %v34
  %v143 = vunpack.c.l.b16 %v35
  %v144 = vunpack.c.l.b16 %v36
  %v145 = vunpack.c.l.b16 %v37
  %v146 = vunpack.c.l.b16 %v38
  %v147 = vunpack.c.l.b16 %v39
  %v148 = vunpack.c.l.b16 %v40
  %v149 = vunpack.c.l.b16 %v41
  %v150 = vunpack.c.l.b16 %v42
  %v151 = vunpack.c.l.b16 %v43
  %v152 = vunpack.c.l.b16 %v44
  %v153 = vunpack.c.l.b16 %v45
  %v154 = vunpack.c.l.b16 %v46
  %v155 = vunpack.c.l.b16 %v47
  %v156 = vunpack.c.l.b16 %v48
  %v157 = vunpack.c.l.b16 %v49
  %v158 = vunpack.c.l.b16 %v50
  %v159 = vunpack.c.l.b16 %v51
  %v160 = vunpack.c.l.b16 %v52
  %v161 = vunpack.c.l.b16 %v53
  %v162 = vunpack.c.l.b16 %v54
  %v163 = vunpack.c.l.b16 %v55
  %v164 = vpack.c.b16 %v133, %v132
  %v165 = vpack.c.b16 %v135, %v134
  %v166 = vpack.c.b16 %v137, %v136
  %v167 = vpack.c.b16 %v139, %v138
  %v168 = vpack.c.b16 %v141, %v140
  %v169 = vpack.c.b16 %v143, %v142
  %v170 = vpack.c.b16 %v145, %v144
  %v171 = vpack.c.b16 %v147, %v146
  %v172 = vpack.c.b16 %v149, %v148
  %v173 = vpack.c.b16 %v151, %v150
  %v174 = vpack.c.b16 %v153, %v152
  %v175 = vpack.c.b16 %v155, %v154
  %v176 = vpack.c.b16 %v157, %v156
  %v177 = vpack.c.b16 %v159, %v158
  %v178 = vpack.c.b16 %v161, %v160
  %v179 = vpack.c.b16 %v163, %v162
  %196 = vmatprep.subr.bf16.mxu0 0
  %197 = vmatpush1.bf16.msra.mxu0 %v164
  %198 = vmatprep.subr.bf16.mxu0 0
  %199 = vmatpush1.bf16.msra.mxu0 %v165
  %200 = vmatprep.subr.bf16.mxu0 0
  %201 = vmatpush1.bf16.msra.mxu0 %v166
  %202 = vmatprep.subr.bf16.mxu0 0
  %203 = vmatpush1.bf16.msra.mxu0 %v167
  %204 = vmatprep.subr.bf16.mxu0 0
  %205 = vmatpush1.bf16.msra.mxu0 %v168
  %206 = vmatprep.subr.bf16.mxu0 0
  %207 = vmatpush1.bf16.msra.mxu0 %v169
  %208 = vmatprep.subr.bf16.mxu0 0
  %209 = vmatpush1.bf16.msra.mxu0 %v170
  %210 = vmatprep.subr.bf16.mxu0 0
  %211 = vmatpush1.bf16.msra.mxu0 %v171
  %212 = vmatprep.subr.bf16.mxu0 0
  %213 = vmatpush1.bf16.msra.mxu0 %v172
  %214 = vmatprep.subr.bf16.mxu0 0
  %215 = vmatpush1.bf16.msra.mxu0 %v173
  %216 = vmatprep.subr.bf16.mxu0 0
  %217 = vmatpush1.bf16.msra.mxu0 %v174
  %218 = vmatprep.subr.bf16.mxu0 0
  %219 = vmatpush1.bf16.msra.mxu0 %v175
  %220 = vmatprep.subr.bf16.mxu0 0
  %221 = vmatpush1.bf16.msra.mxu0 %v176
  %222 = vmatprep.subr.bf16.mxu0 0
  %223 = vmatpush1.bf16.msra.mxu0 %v177
  %224 = vmatprep.subr.bf16.mxu0 0
  %225 = vmatpush1.bf16.msra.mxu0 %v178
  %226 = vmatprep.subr.bf16.mxu0 0
  %227 = vmatpush1.bf16.msra.mxu0 %v179
  %228 = vmatprep.mubr.bf16.mxu0 %v85
  %229 = vmatmul.mubr.bf16.gmra.mrb[0].mxu0 %v84
  %v230 = vpop.f32.mrb[0].mxu0
  %v231 = vadd.f32 0.0, %v230
  %v232 = vpop.f32.mrb[0].mxu0
  %v233 = vpop.f32.mrb[0].mxu0
  %v234 = vadd.f32 0.0, %v233
  %v235 = vpop.f32.mrb[0].mxu0
  %236 = vmatprep.mubr.bf16.mxu0 %v87
  %237 = vmatmul.mubr.bf16.gmra.mrb[0].mxu0 %v86
  %v238 = vpop.f32.mrb[0].mxu0
  %v239 = vadd.f32 0.0, %v238
  %v240 = vpop.f32.mrb[0].mxu0
  %v241 = vpop.f32.mrb[0].mxu0
  %v242 = vadd.f32 0.0, %v241
  %v243 = vpop.f32.mrb[0].mxu0
  %244 = vmatprep.mubr.bf16.mxu0 %v89
  %245 = vmatmul.mubr.bf16.gmra.mrb[0].mxu0 %v88
  %v246 = vpop.f32.mrb[0].mxu0
  %v247 = vadd.f32 0.0, %v246
  %v248 = vpop.f32.mrb[0].mxu0
  %v249 = vpop.f32.mrb[0].mxu0
  %v250 = vadd.f32 0.0, %v249
  %v251 = vpop.f32.mrb[0].mxu0
  %252 = vmatprep.mubr.bf16.mxu0 %v91
  %253 = vmatmul.mubr.bf16.gmra.mrb[0].mxu0 %v90
  %v254 = vpop.f32.mrb[0].mxu0
  %v255 = vadd.f32 0.0, %v254
  %v256 = vpop.f32.mrb[0].mxu0
  %v257 = vpop.f32.mrb[0].mxu0
  %v258 = vpop.f32.mrb[0].mxu0
  %259 = vdwg.mxu0
  %v260 = vld [vmem:[%s1] sm:$0xff]
  %v261 = vld [vmem:[%s1 + $0x8] sm:$0xff]
  %v262 = vld [vmem:[%s1 + $0x10] sm:$0xff]
  %v263 = vld [vmem:[%s1 + $0x18] sm:$0xff]
  %v264 = vld [vmem:[%s1 + $0x20] sm:$0xff]
  %v265 = vld [vmem:[%s1 + $0x28] sm:$0xff]
  %v266 = vld [vmem:[%s1 + $0x30] sm:$0xff]
  %v274 = vunpack.c.l.b16 %v260
  %v275 = vunpack.c.h.b16 %v260
  %v276 = vunpack.c.l.b16 %v261
  %v277 = vunpack.c.h.b16 %v261
  %v278 = vunpack.c.l.b16 %v262
  %v279 = vunpack.c.h.b16 %v262
  %v280 = vunpack.c.l.b16 %v263
  %v281 = vunpack.c.h.b16 %v263
  %v282 = vunpack.c.l.b16 %v264
  %v283 = vunpack.c.h.b16 %v264
  %v284 = vunpack.c.l.b16 %v265
  %v285 = vunpack.c.h.b16 %v265
  %v286 = vunpack.c.l.b16 %v266
  %v287 = vunpack.c.h.b16 %v266
  %v288 = vpack.c.b16 %v276, %v274
  %v289 = vpack.c.b16 %v277, %v275
  %v290 = vpack.c.b16 %v280, %v278
  %v291 = vpack.c.b16 %v281, %v279
  %v292 = vpack.c.b16 %v284, %v282
  %v293 = vpack.c.b16 %v285, %v283
  %v294 = vpack.c.b16 %v286, %v286
  %v295 = vpack.c.b16 %v287, %v287
  %304 = vmatprep.subr.bf16.mxu0 0
  %305 = vmatpush1.bf16.msra.mxu0 %v164
  %306 = vmatprep.subr.bf16.mxu0 0
  %307 = vmatpush1.bf16.msra.mxu0 %v165
  %308 = vmatprep.subr.bf16.mxu0 0
  %309 = vmatpush1.bf16.msra.mxu0 %v166
  %310 = vmatprep.subr.bf16.mxu0 0
  %311 = vmatpush1.bf16.msra.mxu0 %v167
  %312 = vmatprep.subr.bf16.mxu0 0
  %313 = vmatpush1.bf16.msra.mxu0 %v168
  %314 = vmatprep.subr.bf16.mxu0 0
  %315 = vmatpush1.bf16.msra.mxu0 %v169
  %316 = vmatprep.subr.bf16.mxu0 0
  %317 = vmatpush1.bf16.msra.mxu0 %v170
  %318 = vmatprep.subr.bf16.mxu0 0
  %319 = vmatpush1.bf16.msra.mxu0 %v171
  %320 = vmatprep.subr.bf16.mxu0 0
  %321 = vmatpush1.bf16.msra.mxu0 %v172
  %322 = vmatprep.subr.bf16.mxu0 0
  %323 = vmatpush1.bf16.msra.mxu0 %v173
  %324 = vmatprep.subr.bf16.mxu0 0
  %325 = vmatpush1.bf16.msra.mxu0 %v174
  %326 = vmatprep.subr.bf16.mxu0 0
  %327 = vmatpush1.bf16.msra.mxu0 %v175
  %328 = vmatprep.subr.bf16.mxu0 0
  %329 = vmatpush1.bf16.msra.mxu0 %v176
  %330 = vmatprep.subr.bf16.mxu0 0
  %331 = vmatpush1.bf16.msra.mxu0 %v177
  %332 = vmatprep.subr.bf16.mxu0 0
  %333 = vmatpush1.bf16.msra.mxu0 %v178
  %334 = vmatprep.subr.bf16.mxu0 0
  %335 = vmatpush1.bf16.msra.mxu0 %v179
  %336 = vmatprep.mubr.bf16.mxu0 %v289
  %337 = vmatmul.mubr.bf16.gmra.mrb[0].mxu0 %v288
  %v338 = vpop.f32.mrb[0].mxu0
  %v339 = vadd.f32 0.0, %v338
  %v340 = vpop.f32.mrb[0].mxu0
  %v341 = vpop.f32.mrb[0].mxu0
  %v342 = vadd.f32 0.0, %v341
  %v343 = vpop.f32.mrb[0].mxu0
  %344 = vmatprep.mubr.bf16.mxu0 %v291
  %345 = vmatmul.mubr.bf16.gmra.mrb[0].mxu0 %v290
  %v346 = vpop.f32.mrb[0].mxu0
  %v347 = vadd.f32 0.0, %v346
  %v348 = vpop.f32.mrb[0].mxu0
  %v349 = vpop.f32.mrb[0].mxu0
  %v350 = vadd.f32 0.0, %v349
  %v351 = vpop.f32.mrb[0].mxu0
  %352 = vmatprep.mubr.bf16.mxu0 %v293
  %353 = vmatmul.mubr.bf16.gmra.mrb[0].mxu0 %v292
  %v354 = vpop.f32.mrb[0].mxu0
  %v355 = vadd.f32 0.0, %v354
  %v356 = vpop.f32.mrb[0].mxu0
  %v357 = vpop.f32.mrb[0].mxu0
  %v358 = vadd.f32 0.0, %v357
  %v359 = vpop.f32.mrb[0].mxu0
  %360 = vmatprep.mubr.bf16.mxu0 %v295
  %361 = vmatmul.mubr.bf16.gmra.mrb[0].mxu0 %v294
  %v362 = vpop.f32.mrb[0].mxu0
  %v363 = vadd.f32 0.0, %v362
  %v364 = vpop.f32.mrb[0].mxu0
  %v365 = vpop.f32.mrb[0].mxu0
  %v366 = vpop.f32.mrb[0].mxu0
  %367 = vdwg.mxu0
  %v368 = vld [vmem:[%s2] sm:$0xff]
  %v369 = vld [vmem:[%s2 + $0x8] sm:$0xff]
  %v370 = vld [vmem:[%s2 + $0x10] sm:$0xff]
  %v371 = vld [vmem:[%s2 + $0x18] sm:$0xff]
  %v372 = vld [vmem:[%s2 + $0x20] sm:$0xff]
  %v373 = vld [vmem:[%s2 + $0x28] sm:$0xff]
  %v374 = vld [vmem:[%s2 + $0x30] sm:$0xff]
  %v382 = vunpack.c.l.b16 %v368
  %v383 = vunpack.c.h.b16 %v368
  %v384 = vunpack.c.l.b16 %v369
  %v385 = vunpack.c.h.b16 %v369
  %v386 = vunpack.c.l.b16 %v370
  %v387 = vunpack.c.h.b16 %v370
  %v388 = vunpack.c.l.b16 %v371
  %v389 = vunpack.c.h.b16 %v371
  %v390 = vunpack.c.l.b16 %v372
  %v391 = vunpack.c.h.b16 %v372
  %v392 = vunpack.c.l.b16 %v373
  %v393 = vunpack.c.h.b16 %v373
  %v394 = vunpack.c.l.b16 %v374
  %v395 = vunpack.c.h.b16 %v374
  %v396 = vpack.c.b16 %v384, %v382
  %v397 = vpack.c.b16 %v385, %v383
  %v398 = vpack.c.b16 %v388, %v386
  %v399 = vpack.c.b16 %v389, %v387
  %v400 = vpack.c.b16 %v392, %v390
  %v401 = vpack.c.b16 %v393, %v391
  %v402 = vpack.c.b16 %v394, %v394
  %v403 = vpack.c.b16 %v395, %v395
  %412 = vmatprep.subr.bf16.mxu0 0
  %413 = vmatpush1.bf16.msra.mxu0 %v164
  %414 = vmatprep.subr.bf16.mxu0 0
  %415 = vmatpush1.bf16.msra.mxu0 %v165
  %416 = vmatprep.subr.bf16.mxu0 0
  %417 = vmatpush1.bf16.msra.mxu0 %v166
  %418 = vmatprep.subr.bf16.mxu0 0
  %419 = vmatpush1.bf16.msra.mxu0 %v167
  %420 = vmatprep.subr.bf16.mxu0 0
  %421 = vmatpush1.bf16.msra.mxu0 %v168
  %422 = vmatprep.subr.bf16.mxu0 0
  %423 = vmatpush1.bf16.msra.mxu0 %v169
  %424 = vmatprep.subr.bf16.mxu0 0
  %425 = vmatpush1.bf16.msra.mxu0 %v170
  %426 = vmatprep.subr.bf16.mxu0 0
  %427 = vmatpush1.bf16.msra.mxu0 %v171
  %428 = vmatprep.subr.bf16.mxu0 0
  %429 = vmatpush1.bf16.msra.mxu0 %v172
  %430 = vmatprep.subr.bf16.mxu0 0
  %431 = vmatpush1.bf16.msra.mxu0 %v173
  %432 = vmatprep.subr.bf16.mxu0 0
  %433 = vmatpush1.bf16.msra.mxu0 %v174
  %434 = vmatprep.subr.bf16.mxu0 0
  %435 = vmatpush1.bf16.msra.mxu0 %v175
  %436 = vmatprep.subr.bf16.mxu0 0
  %437 = vmatpush1.bf16.msra.mxu0 %v176
  %438 = vmatprep.subr.bf16.mxu0 0
  %439 = vmatpush1.bf16.msra.mxu0 %v177
  %440 = vmatprep.subr.bf16.mxu0 0
  %441 = vmatpush1.bf16.msra.mxu0 %v178
  %442 = vmatprep.subr.bf16.mxu0 0
  %443 = vmatpush1.bf16.msra.mxu0 %v179
  %444 = vmatprep.mubr.bf16.mxu0 %v397
  %445 = vmatmul.mubr.bf16.gmra.mrb[0].mxu0 %v396
  %v446 = vpop.f32.mrb[0].mxu0
  %v447 = vadd.f32 0.0, %v446
  %v448 = vpop.f32.mrb[0].mxu0
  %v449 = vpop.f32.mrb[0].mxu0
  %v450 = vadd.f32 0.0, %v449
  %v451 = vpop.f32.mrb[0].mxu0
  %452 = vmatprep.mubr.bf16.mxu0 %v399
  %453 = vmatmul.mubr.bf16.gmra.mrb[0].mxu0 %v398
  %v454 = vpop.f32.mrb[0].mxu0
  %v455 = vadd.f32 0.0, %v454
  %v456 = vpop.f32.mrb[0].mxu0
  %v457 = vpop.f32.mrb[0].mxu0
  %v458 = vadd.f32 0.0, %v457
  %v459 = vpop.f32.mrb[0].mxu0
  %460 = vmatprep.mubr.bf16.mxu0 %v401
  %461 = vmatmul.mubr.bf16.gmra.mrb[0].mxu0 %v400
  %v462 = vpop.f32.mrb[0].mxu0
  %v463 = vadd.f32 0.0, %v462
  %v464 = vpop.f32.mrb[0].mxu0
  %v465 = vpop.f32.mrb[0].mxu0
  %v466 = vadd.f32 0.0, %v465
  %v467 = vpop.f32.mrb[0].mxu0
  %468 = vmatprep.mubr.bf16.mxu0 %v403
  %469 = vmatmul.mubr.bf16.gmra.mrb[0].mxu0 %v402
  %v470 = vpop.f32.mrb[0].mxu0
  %v471 = vadd.f32 0.0, %v470
  %v472 = vpop.f32.mrb[0].mxu0
  %v473 = vpop.f32.mrb[0].mxu0
  %v474 = vpop.f32.mrb[0].mxu0
  %475 = vdwg.mxu0
  %v476 = vld [vmem:[%s3] sm:$0xff]
  %v477 = vld [vmem:[%s3 + $0x8] sm:$0xff]
  %v478 = vld [vmem:[%s3 + $0x10] sm:$0xff]
  %v479 = vld [vmem:[%s3 + $0x18] sm:$0xff]
  %v480 = vld [vmem:[%s3 + $0x20] sm:$0xff]
  %v481 = vld [vmem:[%s3 + $0x28] sm:$0xff]
  %v482 = vld [vmem:[%s3 + $0x30] sm:$0xff]
  %v490 = vunpack.c.l.b16 %v476
  %v491 = vunpack.c.h.b16 %v476
  %v492 = vunpack.c.l.b16 %v477
  %v493 = vunpack.c.h.b16 %v477
  %v494 = vunpack.c.l.b16 %v478
  %v495 = vunpack.c.h.b16 %v478
  %v496 = vunpack.c.l.b16 %v479
  %v497 = vunpack.c.h.b16 %v479
  %v498 = vunpack.c.l.b16 %v480
  %v499 = vunpack.c.h.b16 %v480
  %v500 = vunpack.c.l.b16 %v481
  %v501 = vunpack.c.h.b16 %v481
  %v502 = vunpack.c.l.b16 %v482
  %v503 = vunpack.c.h.b16 %v482
  %v504 = vpack.c.b16 %v492, %v490
  %v505 = vpack.c.b16 %v493, %v491
  %v506 = vpack.c.b16 %v496, %v494
  %v507 = vpack.c.b16 %v497, %v495
  %v508 = vpack.c.b16 %v500, %v498
  %v509 = vpack.c.b16 %v501, %v499
  %v510 = vpack.c.b16 %v502, %v502
  %v511 = vpack.c.b16 %v503, %v503
  %520 = vmatprep.subr.bf16.mxu0 0
  %521 = vmatpush1.bf16.msra.mxu0 %v164
  %522 = vmatprep.subr.bf16.mxu0 0
  %523 = vmatpush1.bf16.msra.mxu0 %v165
  %524 = vmatprep.subr.bf16.mxu0 0
  %525 = vmatpush1.bf16.msra.mxu0 %v166
  %526 = vmatprep.subr.bf16.mxu0 0
  %527 = vmatpush1.bf16.msra.mxu0 %v167
  %528 = vmatprep.subr.bf16.mxu0 0
  %529 = vmatpush1.bf16.msra.mxu0 %v168
  %530 = vmatprep.subr.bf16.mxu0 0
  %531 = vmatpush1.bf16.msra.mxu0 %v169
  %532 = vmatprep.subr.bf16.mxu0 0
  %533 = vmatpush1.bf16.msra.mxu0 %v170
  %534 = vmatprep.subr.bf16.mxu0 0
  %535 = vmatpush1.bf16.msra.mxu0 %v171
  %536 = vmatprep.subr.bf16.mxu0 0
  %537 = vmatpush1.bf16.msra.mxu0 %v172
  %538 = vmatprep.subr.bf16.mxu0 0
  %539 = vmatpush1.bf16.msra.mxu0 %v173
  %540 = vmatprep.subr.bf16.mxu0 0
  %541 = vmatpush1.bf16.msra.mxu0 %v174
  %542 = vmatprep.subr.bf16.mxu0 0
  %543 = vmatpush1.bf16.msra.mxu0 %v175
  %544 = vmatprep.subr.bf16.mxu0 0
  %545 = vmatpush1.bf16.msra.mxu0 %v176
  %546 = vmatprep.subr.bf16.mxu0 0
  %547 = vmatpush1.bf16.msra.mxu0 %v177
  %548 = vmatprep.subr.bf16.mxu0 0
  %549 = vmatpush1.bf16.msra.mxu0 %v178
  %550 = vmatprep.subr.bf16.mxu0 0
  %551 = vmatpush1.bf16.msra.mxu0 %v179
  %552 = vmatprep.mubr.bf16.mxu0 %v505
  %553 = vmatmul.mubr.bf16.gmra.mrb[0].mxu0 %v504
  %v554 = vpop.f32.mrb[0].mxu0
  %v555 = vadd.f32 0.0, %v554
  %v556 = vpop.f32.mrb[0].mxu0
  %v557 = vpop.f32.mrb[0].mxu0
  %v558 = vadd.f32 0.0, %v557
  %v559 = vpop.f32.mrb[0].mxu0
  %560 = vmatprep.mubr.bf16.mxu0 %v507
  %561 = vmatmul.mubr.bf16.gmra.mrb[0].mxu0 %v506
  %v562 = vpop.f32.mrb[0].mxu0
  %v563 = vadd.f32 0.0, %v562
  %v564 = vpop.f32.mrb[0].mxu0
  %v565 = vpop.f32.mrb[0].mxu0
  %v566 = vadd.f32 0.0, %v565
  %v567 = vpop.f32.mrb[0].mxu0
  %568 = vmatprep.mubr.bf16.mxu0 %v509
  %569 = vmatmul.mubr.bf16.gmra.mrb[0].mxu0 %v508
  %v570 = vpop.f32.mrb[0].mxu0
  %v571 = vadd.f32 0.0, %v570
  %v572 = vpop.f32.mrb[0].mxu0
  %v573 = vpop.f32.mrb[0].mxu0
  %v574 = vadd.f32 0.0, %v573
  %v575 = vpop.f32.mrb[0].mxu0
  %576 = vmatprep.mubr.bf16.mxu0 %v511
  %577 = vmatmul.mubr.bf16.gmra.mrb[0].mxu0 %v510
  %v578 = vpop.f32.mrb[0].mxu0
  %v579 = vadd.f32 0.0, %v578
  %v580 = vpop.f32.mrb[0].mxu0
  %v581 = vpop.f32.mrb[0].mxu0
  %v582 = vpop.f32.mrb[0].mxu0
  %583 = vdwg.mxu0
  %v584 = vmax.f32 %v231, %v339
  %v585 = vmax.f32 %v234, %v342
  %v586 = vmax.f32 %v239, %v347
  %v587 = vmax.f32 %v242, %v350
  %v588 = vmax.f32 %v247, %v355
  %v589 = vmax.f32 %v250, %v358
  %v590 = vmax.f32 %v255, %v363
  %v591 = vmax.f32 %v447, %v555
  %v592 = vmax.f32 %v450, %v558
  %v593 = vmax.f32 %v455, %v563
  %v594 = vmax.f32 %v458, %v566
  %v595 = vmax.f32 %v463, %v571
  %v596 = vmax.f32 %v466, %v574
  %v597 = vmax.f32 %v471, %v579
  %v598 = vmax.f32 %v584, %v591
  %v599 = vmax.f32 %v585, %v592
  %v600 = vmax.f32 %v586, %v593
  %v601 = vmax.f32 %v587, %v594
  %v602 = vmax.f32 %v588, %v595
  %v603 = vmax.f32 %v589, %v596
  %v604 = vmax.f32 %v590, %v597
  %v605 = vld [vmem:[%s5] sm:$0x1]
  %v607 = vlaneseq
  %v608 = vshrl.u32 %v607, 7
  %v609 = vsub.s32 0, %v608
  %v610 = vrot.slane %v605, %v609
  %v612 = vadd.f32 %v598, %v610
  %v613 = vadd.f32 %v599, %v610
  %v614 = vadd.f32 %v600, %v610
  %v615 = vadd.f32 %v601, %v610
  %v616 = vadd.f32 %v602, %v610
  %v617 = vadd.f32 %v603, %v610
  %v618 = vadd.f32 %v604, %v610
  %v619 = vmax.f32 %v612, 0.0
  %v620 = vmax.f32 %v613, 0.0
  %v621 = vmax.f32 %v614, 0.0
  %v622 = vmax.f32 %v615, 0.0
  %v623 = vmax.f32 %v616, 0.0
  %v624 = vmax.f32 %v617, 0.0
  %v625 = vmax.f32 %v618, 0.0
  %v626 = vpack.c.bf16 %v620, %v619
  %v627 = vpack.c.bf16 %v622, %v621
  %v628 = vpack.c.bf16 %v624, %v623
  %v629 = vpack.c.bf16 %v625, %v625
  %v634 = vunpack.c.l.b16 %v626
  %v635 = vunpack.c.h.b16 %v626
  %v636 = vunpack.c.l.b16 %v627
  %v637 = vunpack.c.h.b16 %v627
  %v638 = vunpack.c.l.b16 %v628
  %v639 = vunpack.c.h.b16 %v628
  %v640 = vunpack.c.l.b16 %v629
  %v641 = vpack.c.b16 %v634, %v634
  %v642 = vpack.c.b16 %v635, %v635
  %v643 = vpack.c.b16 %v636, %v636
  %v644 = vpack.c.b16 %v637, %v637
  %v645 = vpack.c.b16 %v638, %v638
  %v646 = vpack.c.b16 %v639, %v639
  %v647 = vpack.c.b16 %v640, %v640
  %655 = vst [vmem:[%s6] sm:$0xf] %v641
  %656 = vst [vmem:[%s6 + $0x4] sm:$0xf] %v642
  %657 = vst [vmem:[%s6 + $0x8] sm:$0xf] %v643
  %658 = vst [vmem:[%s6 + $0xc] sm:$0xf] %v644
  %659 = vst [vmem:[%s6 + $0x10] sm:$0xf] %v645
  %660 = vst [vmem:[%s6 + $0x14] sm:$0xf] %v646
  %661 = vst [vmem:[%s6 + $0x18] sm:$0xf] %v647
  // Predicated region
  $region26: #{net_forward.4} parent=0 // pred_check
    _
  $region27: #{net_forward.4} parent=0 // pred_check_branch
    %663 = sbr.rel (0) target = $region29
  $region28: #{net_forward.4} parent=0 // pred_region
    _
  $region29: #{net_forward.4} parent=0 // pred_fallthru
    _
  // Predicated region
  $region30: #{net_forward.4} parent=0 // pred_check
    _
  $region31: #{net_forward.4} parent=0 // pred_check_branch
    %665 = sbr.rel (0) target = $region33
  $region32: #{net_forward.4} parent=0 // pred_region
    _
  $region33: #{net_forward.4} parent=0 // pred_fallthru
    _

// kernel: net_forward.5
$region0: #{net_forward.5}
  #allocation0 [shape = 'u32[]', space=smem, size = 0x4, offset = 0x4, fixed_abs, tag = 'smem constant byte address 0x4 - core index']
  #allocation1 [shape = 'u32[144,128]{1,0:T(1,128)}', space=vmem, size = 0x12000, scoped, tag = 'internal scratch']
  %s0 = inlined_call_operand.vmem [shape: bf16[8,3200], index: 0, kind: input, shape index: {}]
  %s1 = inlined_call_operand.vmem [shape: bf16[3200,128], index: 1, kind: input, shape index: {}]
  %s2 = inlined_call_operand.vmem [shape: f32[1,128], index: 2, kind: input, shape index: {}]
  %s3 = inlined_call_operand.vmem [shape: bf16[128,128], index: 3, kind: input, shape index: {}]
  %s4 = inlined_call_operand.vmem [shape: f32[1,128], index: 4, kind: input, shape index: {}]
  %s5 = inlined_call_operand.vmem [shape: bf16[128,128], index: 5, kind: input, shape index: {}]
  %s6 = inlined_call_operand.vmem [shape: f32[1,128], index: 6, kind: input, shape index: {}]
  %s7 = inlined_call_operand.vmem [shape: f32[8,128], index: 7, kind: output, shape index: {}]
  %s8 = sld [smem:[#allocation0]]
  $region38: #{net_forward.5} parent=0
    _
  %s10 = ssub.s32 1, %s8
  %s11 = scalar_select 0, %s10, %s8
  // Predicated region
  $region2: #{net_forward.5} parent=0 // pred_check
    _
  $region3: #{net_forward.5} parent=0 // pred_check_branch
    %13 = sbr.rel (0) target = $region5
  $region4: #{net_forward.5} parent=0 // pred_region
    _
  $region5: #{net_forward.5} parent=0 // pred_fallthru
    _
  // Predicated region
  $region6: #{net_forward.5} parent=0 // pred_check
    _
  $region7: #{net_forward.5} parent=0 // pred_check_branch
    %15 = sbr.rel (0) target = $region9
  $region8: #{net_forward.5} parent=0 // pred_region
    _
  $region9: #{net_forward.5} parent=0 // pred_fallthru
    _
  // Predicated region
  $region10: #{net_forward.5} parent=0 // pred_check
    _
  $region11: #{net_forward.5} parent=0 // pred_check_branch
    %17 = sbr.rel (0) target = $region13
  $region12: #{net_forward.5} parent=0 // pred_region
    _
  $region13: #{net_forward.5} parent=0 // pred_fallthru
    _
  // Predicated region
  $region14: #{net_forward.5} parent=0 // pred_check
    _
  $region15: #{net_forward.5} parent=0 // pred_check_branch
    %19 = sbr.rel (0) target = $region17
  $region16: #{net_forward.5} parent=0 // pred_region
    _
  $region17: #{net_forward.5} parent=0 // pred_fallthru
    _
  // Predicated region
  $region18: #{net_forward.5} parent=0 // pred_check
    _
  $region19: #{net_forward.5} parent=0 // pred_check_branch
    %21 = sbr.rel (0) target = $region21
  $region20: #{net_forward.5} parent=0 // pred_region
    _
  $region21: #{net_forward.5} parent=0 // pred_fallthru
    _
  // Predicated region
  $region22: #{net_forward.5} parent=0 // pred_check
    _
  $region23: #{net_forward.5} parent=0 // pred_check_branch
    %23 = sbr.rel (0) target = $region25
  $region24: #{net_forward.5} parent=0 // pred_region
    _
  $region25: #{net_forward.5} parent=0 // pred_fallthru
    _
  // Predicated region
  $region26: #{net_forward.5} parent=0 // pred_check
    _
  $region27: #{net_forward.5} parent=0 // pred_check_branch
    %25 = sbr.rel (0) target = $region29
  $region28: #{net_forward.5} parent=0 // pred_region
    _
  $region29: #{net_forward.5} parent=0 // pred_fallthru
    _
  %v27 = vld [vmem:[%s0] sm:$0xff]
  %v28 = vld [vmem:[%s0 + $0x8] sm:$0xff]
  %v29 = vld [vmem:[%s0 + $0x10] sm:$0xff]
  %v30 = vld [vmem:[%s0 + $0x18] sm:$0xff]
  %v31 = vld [vmem:[%s0 + $0x20] sm:$0xff]
  %v32 = vld [vmem:[%s0 + $0x28] sm:$0xff]
  %v33 = vld [vmem:[%s0 + $0x30] sm:$0xff]
  %v34 = vld [vmem:[%s0 + $0x38] sm:$0xff]
  %v35 = vld [vmem:[%s0 + $0x40] sm:$0xff]
  %v36 = vld [vmem:[%s0 + $0x48] sm:$0xff]
  %v37 = vld [vmem:[%s0 + $0x50] sm:$0xff]
  %v38 = vld [vmem:[%s0 + $0x58] sm:$0xff]
  %v39 = vld [vmem:[%s0 + $0x60] sm:$0xf]
  %v40 = vld [vmem:[%s1] sm:$0xf]
  %v41 = vld [vmem:[%s1 + $0x4] sm:$0xf]
  %v42 = vld [vmem:[%s1 + $0x8] sm:$0xf]
  %v43 = vld [vmem:[%s1 + $0xc] sm:$0xf]
  %v44 = vld [vmem:[%s1 + $0x10] sm:$0xf]
  %v45 = vld [vmem:[%s1 + $0x14] sm:$0xf]
  %v46 = vld [vmem:[%s1 + $0x18] sm:$0xf]
  %v47 = vld [vmem:[%s1 + $0x1c] sm:$0xf]
  %v48 = vld [vmem:[%s1 + $0x20] sm:$0xf]
  %v49 = vld [vmem:[%s1 + $0x24] sm:$0xf]
  %v50 = vld [vmem:[%s1 + $0x28] sm:$0xf]
  %v51 = vld [vmem:[%s1 + $0x2c] sm:$0xf]
  %v52 = vld [vmem:[%s1 + $0x30] sm:$0xf]
  %v53 = vld [vmem:[%s1 + $0x34] sm:$0xf]
  %v54 = vld [vmem:[%s1 + $0x38] sm:$0xf]
  %v55 = vld [vmem:[%s1 + $0x3c] sm:$0xf]
  %v56 = vld [vmem:[%s1 + $0x40] sm:$0xf]
  %v57 = vld [vmem:[%s1 + $0x44] sm:$0xf]
  %v58 = vld [vmem:[%s1 + $0x48] sm:$0xf]
  %v59 = vld [vmem:[%s1 + $0x4c] sm:$0xf]
  %v60 = vld [vmem:[%s1 + $0x50] sm:$0xf]
  %v61 = vld [vmem:[%s1 + $0x54] sm:$0xf]
  %v62 = vld [vmem:[%s1 + $0x58] sm:$0xf]
  %v63 = vld [vmem:[%s1 + $0x5c] sm:$0xf]
  %v64 = vld [vmem:[%s1 + $0x60] sm:$0xf]
  %v65 = vld [vmem:[%s1 + $0x64] sm:$0xf]
  %v66 = vld [vmem:[%s1 + $0x68] sm:$0xf]
  %v67 = vld [vmem:[%s1 + $0x6c] sm:$0xf]
  %v68 = vld [vmem:[%s1 + $0x70] sm:$0xf]
  %v69 = vld [vmem:[%s1 + $0x74] sm:$0xf]
  %v70 = vld [vmem:[%s1 + $0x78] sm:$0xf]
  %v71 = vld [vmem:[%s1 + $0x7c] sm:$0xf]
  %v72 = vld [vmem:[%s1 + $0x80] sm:$0xf]
  %v73 = vld [vmem:[%s1 + $0x84] sm:$0xf]
  %v74 = vld [vmem:[%s1 + $0x88] sm:$0xf]
  %v75 = vld [vmem:[%s1 + $0x8c] sm:$0xf]
  %v76 = vld [vmem:[%s1 + $0x90] sm:$0xf]
  %v77 = vld [vmem:[%s1 + $0x94] sm:$0xf]
  %v78 = vld [vmem:[%s1 + $0x98] sm:$0xf]
  %v79 = vld [vmem:[%s1 + $0x9c] sm:$0xf]
  %v80 = vld [vmem:[%s1 + $0xa0] sm:$0xf]
  %v81 = vld [vmem:[%s1 + $0xa4] sm:$0xf]
  %v82 = vld [vmem:[%s1 + $0xa8] sm:$0xf]
  %v83 = vld [vmem:[%s1 + $0xac] sm:$0xf]
  %v84 = vld [vmem:[%s1 + $0xb0] sm:$0xf]
  %v85 = vld [vmem:[%s1 + $0xb4] sm:$0xf]
  %v86 = vld [vmem:[%s1 + $0xb8] sm:$0xf]
  %v87 = vld [vmem:[%s1 + $0xbc] sm:$0xf]
  %v88 = vld [vmem:[%s1 + $0xc0] sm:$0xf]
  %v89 = vld [vmem:[%s1 + $0xc4] sm:$0xf]
  %v90 = vld [vmem:[%s1 + $0xc8] sm:$0xf]
  %v91 = vld [vmem:[%s1 + $0xcc] sm:$0xf]
  %v92 = vld [vmem:[%s1 + $0xd0] sm:$0xf]
  %v93 = vld [vmem:[%s1 + $0xd4] sm:$0xf]
  %v94 = vld [vmem:[%s1 + $0xd8] sm:$0xf]
  %v95 = vld [vmem:[%s1 + $0xdc] sm:$0xf]
  %v96 = vld [vmem:[%s1 + $0xe0] sm:$0xf]
  %v97 = vld [vmem:[%s1 + $0xe4] sm:$0xf]
  %v98 = vld [vmem:[%s1 + $0xe8] sm:$0xf]
  %v99 = vld [vmem:[%s1 + $0xec] sm:$0xf]
  %v100 = vld [vmem:[%s1 + $0xf0] sm:$0xf]
  %v101 = vld [vmem:[%s1 + $0xf4] sm:$0xf]
  %v102 = vld [vmem:[%s1 + $0xf8] sm:$0xf]
  %v103 = vld [vmem:[%s1 + $0xfc] sm:$0xf]
  %v104 = vld [vmem:[%s1 + $0x100] sm:$0xf]
  %v105 = vld [vmem:[%s1 + $0x104] sm:$0xf]
  %v106 = vld [vmem:[%s1 + $0x108] sm:$0xf]
  %v107 = vld [vmem:[%s1 + $0x10c] sm:$0xf]
  %v108 = vld [vmem:[%s1 + $0x110] sm:$0xf]
  %v109 = vld [vmem:[%s1 + $0x114] sm:$0xf]
  %v110 = vld [vmem:[%s1 + $0x118] sm:$0xf]
  %v111 = vld [vmem:[%s1 + $0x11c] sm:$0xf]
  %v112 = vld [vmem:[%s1 + $0x120] sm:$0xf]
  %v113 = vld [vmem:[%s1 + $0x124] sm:$0xf]
  %v114 = vld [vmem:[%s1 + $0x128] sm:$0xf]
  %v115 = vld [vmem:[%s1 + $0x12c] sm:$0xf]
  %v116 = vld [vmem:[%s1 + $0x130] sm:$0xf]
  %v117 = vld [vmem:[%s1 + $0x134] sm:$0xf]
  %v118 = vld [vmem:[%s1 + $0x138] sm:$0xf]
  %v119 = vld [vmem:[%s1 + $0x13c] sm:$0xf]
  %v120 = vld [vmem:[%s1 + $0x140] sm:$0xf]
  %v121 = vld [vmem:[%s1 + $0x144] sm:$0xf]
  %v122 = vld [vmem:[%s1 + $0x148] sm:$0xf]
  %v123 = vld [vmem:[%s1 + $0x14c] sm:$0xf]
  %v124 = vld [vmem:[%s1 + $0x150] sm:$0xf]
  %v125 = vld [vmem:[%s1 + $0x154] sm:$0xf]
  %v126 = vld [vmem:[%s1 + $0x158] sm:$0xf]
  %v127 = vld [vmem:[%s1 + $0x15c] sm:$0xf]
  %v128 = vld [vmem:[%s1 + $0x160] sm:$0xf]
  %v129 = vld [vmem:[%s1 + $0x164] sm:$0xf]
  %v130 = vld [vmem:[%s1 + $0x168] sm:$0xf]
  %v131 = vld [vmem:[%s1 + $0x16c] sm:$0xf]
  %v132 = vld [vmem:[%s1 + $0x170] sm:$0xf]
  %v133 = vld [vmem:[%s1 + $0x174] sm:$0xf]
  %v134 = vld [vmem:[%s1 + $0x178] sm:$0xf]
  %v135 = vld [vmem:[%s1 + $0x17c] sm:$0xf]
  %v136 = vld [vmem:[%s1 + $0x180] sm:$0xf]
  %v137 = vld [vmem:[%s1 + $0x184] sm:$0xf]
  %v138 = vld [vmem:[%s1 + $0x188] sm:$0xf]
  %v139 = vld [vmem:[%s1 + $0x18c] sm:$0xf]
  %v140 = vld [vmem:[%s1 + $0x190] sm:$0xf]
  %v141 = vld [vmem:[%s1 + $0x194] sm:$0xf]
  %v142 = vld [vmem:[%s1 + $0x198] sm:$0xf]
  %v143 = vld [vmem:[%s1 + $0x19c] sm:$0xf]
  %v144 = vld [vmem:[%s1 + $0x1a0] sm:$0xf]
  %v145 = vld [vmem:[%s1 + $0x1a4] sm:$0xf]
  %v146 = vld [vmem:[%s1 + $0x1a8] sm:$0xf]
  %v147 = vld [vmem:[%s1 + $0x1ac] sm:$0xf]
  %v148 = vld [vmem:[%s1 + $0x1b0] sm:$0xf]
  %v149 = vld [vmem:[%s1 + $0x1b4] sm:$0xf]
  %v150 = vld [vmem:[%s1 + $0x1b8] sm:$0xf]
  %v151 = vld [vmem:[%s1 + $0x1bc] sm:$0xf]
  %v152 = vld [vmem:[%s1 + $0x1c0] sm:$0xf]
  %v153 = vld [vmem:[%s1 + $0x1c4] sm:$0xf]
  %v154 = vld [vmem:[%s1 + $0x1c8] sm:$0xf]
  %v155 = vld [vmem:[%s1 + $0x1cc] sm:$0xf]
  %v156 = vld [vmem:[%s1 + $0x1d0] sm:$0xf]
  %v157 = vld [vmem:[%s1 + $0x1d4] sm:$0xf]
  %v158 = vld [vmem:[%s1 + $0x1d8] sm:$0xf]
  %v159 = vld [vmem:[%s1 + $0x1dc] sm:$0xf]
  %v160 = vld [vmem:[%s1 + $0x1e0] sm:$0xf]
  %v161 = vld [vmem:[%s1 + $0x1e4] sm:$0xf]
  %v162 = vld [vmem:[%s1 + $0x1e8] sm:$0xf]
  %v163 = vld [vmem:[%s1 + $0x1ec] sm:$0xf]
  %v164 = vld [vmem:[%s1 + $0x1f0] sm:$0xf]
  %v165 = vld [vmem:[%s1 + $0x1f4] sm:$0xf]
  %v166 = vld [vmem:[%s1 + $0x1f8] sm:$0xf]
  %v167 = vld [vmem:[%s1 + $0x1fc] sm:$0xf]
  %v168 = vld [vmem:[%s1 + $0x200] sm:$0xf]
  %v169 = vld [vmem:[%s1 + $0x204] sm:$0xf]
  %v170 = vld [vmem:[%s1 + $0x208] sm:$0xf]
  %v171 = vld [vmem:[%s1 + $0x20c] sm:$0xf]
  %v172 = vld [vmem:[%s1 + $0x210] sm:$0xf]
  %v173 = vld [vmem:[%s1 + $0x214] sm:$0xf]
  %v174 = vld [vmem:[%s1 + $0x218] sm:$0xf]
  %v175 = vld [vmem:[%s1 + $0x21c] sm:$0xf]
  %v176 = vld [vmem:[%s1 + $0x220] sm:$0xf]
  %v177 = vld [vmem:[%s1 + $0x224] sm:$0xf]
  %v178 = vld [vmem:[%s1 + $0x228] sm:$0xf]
  %v179 = vld [vmem:[%s1 + $0x22c] sm:$0xf]
  %v180 = vld [vmem:[%s1 + $0x230] sm:$0xf]
  %v181 = vld [vmem:[%s1 + $0x234] sm:$0xf]
  %v182 = vld [vmem:[%s1 + $0x238] sm:$0xf]
  %v183 = vld [vmem:[%s1 + $0x23c] sm:$0xf]
  %v184 = vld [vmem:[%s1 + $0x240] sm:$0xf]
  %v185 = vld [vmem:[%s1 + $0x244] sm:$0xf]
  %v186 = vld [vmem:[%s1 + $0x248] sm:$0xf]
  %v187 = vld [vmem:[%s1 + $0x24c] sm:$0xf]
  %v188 = vld [vmem:[%s1 + $0x250] sm:$0xf]
  %v189 = vld [vmem:[%s1 + $0x254] sm:$0xf]
  %v190 = vld [vmem:[%s1 + $0x258] sm:$0xf]
  %v191 = vld [vmem:[%s1 + $0x25c] sm:$0xf]
  %v192 = vld [vmem:[%s1 + $0x260] sm:$0xf]
  %v193 = vld [vmem:[%s1 + $0x264] sm:$0xf]
  %v194 = vld [vmem:[%s1 + $0x268] sm:$0xf]
  %v195 = vld [vmem:[%s1 + $0x26c] sm:$0xf]
  %v196 = vld [vmem:[%s1 + $0x270] sm:$0xf]
  %v197 = vld [vmem:[%s1 + $0x274] sm:$0xf]
  %v198 = vld [vmem:[%s1 + $0x278] sm:$0xf]
  %v199 = vld [vmem:[%s1 + $0x27c] sm:$0xf]
  %v200 = vld [vmem:[%s1 + $0x280] sm:$0xf]
  %v201 = vld [vmem:[%s1 + $0x284] sm:$0xf]
  %v202 = vld [vmem:[%s1 + $0x288] sm:$0xf]
  %v203 = vld [vmem:[%s1 + $0x28c] sm:$0xf]
  %v204 = vld [vmem:[%s1 + $0x290] sm:$0xf]
  %v205 = vld [vmem:[%s1 + $0x294] sm:$0xf]
  %v206 = vld [vmem:[%s1 + $0x298] sm:$0xf]
  %v207 = vld [vmem:[%s1 + $0x29c] sm:$0xf]
  %v208 = vld [vmem:[%s1 + $0x2a0] sm:$0xf]
  %v209 = vld [vmem:[%s1 + $0x2a4] sm:$0xf]
  %v210 = vld [vmem:[%s1 + $0x2a8] sm:$0xf]
  %v211 = vld [vmem:[%s1 + $0x2ac] sm:$0xf]
  %v212 = vld [vmem:[%s1 + $0x2b0] sm:$0xf]
  %v213 = vld [vmem:[%s1 + $0x2b4] sm:$0xf]
  %v214 = vld [vmem:[%s1 + $0x2b8] sm:$0xf]
  %v215 = vld [vmem:[%s1 + $0x2bc] sm:$0xf]
  %v216 = vld [vmem:[%s1 + $0x2c0] sm:$0xf]
  %v217 = vld [vmem:[%s1 + $0x2c4] sm:$0xf]
  %v218 = vld [vmem:[%s1 + $0x2c8] sm:$0xf]
  %v219 = vld [vmem:[%s1 + $0x2cc] sm:$0xf]
  %v220 = vld [vmem:[%s1 + $0x2d0] sm:$0xf]
  %v221 = vld [vmem:[%s1 + $0x2d4] sm:$0xf]
  %v222 = vld [vmem:[%s1 + $0x2d8] sm:$0xf]
  %v223 = vld [vmem:[%s1 + $0x2dc] sm:$0xf]
  %v224 = vld [vmem:[%s1 + $0x2e0] sm:$0xf]
  %v225 = vld [vmem:[%s1 + $0x2e4] sm:$0xf]
  %v226 = vld [vmem:[%s1 + $0x2e8] sm:$0xf]
  %v227 = vld [vmem:[%s1 + $0x2ec] sm:$0xf]
  %v228 = vld [vmem:[%s1 + $0x2f0] sm:$0xf]
  %v229 = vld [vmem:[%s1 + $0x2f4] sm:$0xf]
  %v230 = vld [vmem:[%s1 + $0x2f8] sm:$0xf]
  %v231 = vld [vmem:[%s1 + $0x2fc] sm:$0xf]
  %v232 = vld [vmem:[%s1 + $0x300] sm:$0xf]
  %v233 = vld [vmem:[%s1 + $0x304] sm:$0xf]
  %v234 = vld [vmem:[%s1 + $0x308] sm:$0xf]
  %v235 = vld [vmem:[%s1 + $0x30c] sm:$0xf]
  %v236 = vld [vmem:[%s1 + $0x310] sm:$0xf]
  %v237 = vld [vmem:[%s1 + $0x314] sm:$0xf]
  %v238 = vld [vmem:[%s1 + $0x318] sm:$0xf]
  %v239 = vld [vmem:[%s1 + $0x31c] sm:$0xf]
  %v240 = vld [vmem:[%s1 + $0x320] sm:$0xf]
  %v241 = vld [vmem:[%s1 + $0x324] sm:$0xf]
  %v242 = vld [vmem:[%s1 + $0x328] sm:$0xf]
  %v243 = vld [vmem:[%s1 + $0x32c] sm:$0xf]
  %v244 = vld [vmem:[%s1 + $0x330] sm:$0xf]
  %v245 = vld [vmem:[%s1 + $0x334] sm:$0xf]
  %v246 = vld [vmem:[%s1 + $0x338] sm:$0xf]
  %v247 = vld [vmem:[%s1 + $0x33c] sm:$0xf]
  %v248 = vld [vmem:[%s1 + $0x340] sm:$0xf]
  %v249 = vld [vmem:[%s1 + $0x344] sm:$0xf]
  %v250 = vld [vmem:[%s1 + $0x348] sm:$0xf]
  %v251 = vld [vmem:[%s1 + $0x34c] sm:$0xf]
  %v252 = vld [vmem:[%s1 + $0x350] sm:$0xf]
  %v253 = vld [vmem:[%s1 + $0x354] sm:$0xf]
  %v254 = vld [vmem:[%s1 + $0x358] sm:$0xf]
  %v255 = vld [vmem:[%s1 + $0x35c] sm:$0xf]
  %v256 = vld [vmem:[%s1 + $0x360] sm:$0xf]
  %v257 = vld [vmem:[%s1 + $0x364] sm:$0xf]
  %v258 = vld [vmem:[%s1 + $0x368] sm:$0xf]
  %v259 = vld [vmem:[%s1 + $0x36c] sm:$0xf]
  %v260 = vld [vmem:[%s1 + $0x370] sm:$0xf]
  %v261 = vld [vmem:[%s1 + $0x374] sm:$0xf]
  %v262 = vld [vmem:[%s1 + $0x378] sm:$0xf]
  %v263 = vld [vmem:[%s1 + $0x37c] sm:$0xf]
  %v264 = vld [vmem:[%s1 + $0x380] sm:$0xf]
  %v265 = vld [vmem:[%s1 + $0x384] sm:$0xf]
  %v266 = vld [vmem:[%s1 + $0x388] sm:$0xf]
  %v267 = vld [vmem:[%s1 + $0x38c] sm:$0xf]
  %v268 = vld [vmem:[%s1 + $0x390] sm:$0xf]
  %v269 = vld [vmem:[%s1 + $0x394] sm:$0xf]
  %v270 = vld [vmem:[%s1 + $0x398] sm:$0xf]
  %v271 = vld [vmem:[%s1 + $0x39c] sm:$0xf]
  %v272 = vld [vmem:[%s1 + $0x3a0] sm:$0xf]
  %v273 = vld [vmem:[%s1 + $0x3a4] sm:$0xf]
  %v274 = vld [vmem:[%s1 + $0x3a8] sm:$0xf]
  %v275 = vld [vmem:[%s1 + $0x3ac] sm:$0xf]
  %v276 = vld [vmem:[%s1 + $0x3b0] sm:$0xf]
  %v277 = vld [vmem:[%s1 + $0x3b4] sm:$0xf]
  %v278 = vld [vmem:[%s1 + $0x3b8] sm:$0xf]
  %v279 = vld [vmem:[%s1 + $0x3bc] sm:$0xf]
  %v280 = vld [vmem:[%s1 + $0x3c0] sm:$0xf]
  %v281 = vld [vmem:[%s1 + $0x3c4] sm:$0xf]
  %v282 = vld [vmem:[%s1 + $0x3c8] sm:$0xf]
  %v283 = vld [vmem:[%s1 + $0x3cc] sm:$0xf]
  %v284 = vld [vmem:[%s1 + $0x3d0] sm:$0xf]
  %v285 = vld [vmem:[%s1 + $0x3d4] sm:$0xf]
  %v286 = vld [vmem:[%s1 + $0x3d8] sm:$0xf]
  %v287 = vld [vmem:[%s1 + $0x3dc] sm:$0xf]
  %v288 = vld [vmem:[%s1 + $0x3e0] sm:$0xf]
  %v289 = vld [vmem:[%s1 + $0x3e4] sm:$0xf]
  %v290 = vld [vmem:[%s1 + $0x3e8] sm:$0xf]
  %v291 = vld [vmem:[%s1 + $0x3ec] sm:$0xf]
  %v292 = vld [vmem:[%s1 + $0x3f0] sm:$0xf]
  %v293 = vld [vmem:[%s1 + $0x3f4] sm:$0xf]
  %v294 = vld [vmem:[%s1 + $0x3f8] sm:$0xf]
  %v295 = vld [vmem:[%s1 + $0x3fc] sm:$0xf]
  %v296 = vld [vmem:[%s1 + $0x400] sm:$0xf]
  %v297 = vld [vmem:[%s1 + $0x404] sm:$0xf]
  %v298 = vld [vmem:[%s1 + $0x408] sm:$0xf]
  %v299 = vld [vmem:[%s1 + $0x40c] sm:$0xf]
  %v300 = vld [vmem:[%s1 + $0x410] sm:$0xf]
  %v301 = vld [vmem:[%s1 + $0x414] sm:$0xf]
  %v302 = vld [vmem:[%s1 + $0x418] sm:$0xf]
  %v303 = vld [vmem:[%s1 + $0x41c] sm:$0xf]
  %v304 = vld [vmem:[%s1 + $0x420] sm:$0xf]
  %v305 = vld [vmem:[%s1 + $0x424] sm:$0xf]
  %v306 = vld [vmem:[%s1 + $0x428] sm:$0xf]
  %v307 = vld [vmem:[%s1 + $0x42c] sm:$0xf]
  %v308 = vld [vmem:[%s1 + $0x430] sm:$0xf]
  %v309 = vld [vmem:[%s1 + $0x434] sm:$0xf]
  %v310 = vld [vmem:[%s1 + $0x438] sm:$0xf]
  %v311 = vld [vmem:[%s1 + $0x43c] sm:$0xf]
  %v312 = vld [vmem:[%s1 + $0x440] sm:$0xf]
  %v313 = vld [vmem:[%s1 + $0x444] sm:$0xf]
  %v314 = vld [vmem:[%s1 + $0x448] sm:$0xf]
  %v315 = vld [vmem:[%s1 + $0x44c] sm:$0xf]
  %v316 = vld [vmem:[%s1 + $0x450] sm:$0xf]
  %v317 = vld [vmem:[%s1 + $0x454] sm:$0xf]
  %v318 = vld [vmem:[%s1 + $0x458] sm:$0xf]
  %v319 = vld [vmem:[%s1 + $0x45c] sm:$0xf]
  %v320 = vld [vmem:[%s1 + $0x460] sm:$0xf]
  %v321 = vld [vmem:[%s1 + $0x464] sm:$0xf]
  %v322 = vld [vmem:[%s1 + $0x468] sm:$0xf]
  %v323 = vld [vmem:[%s1 + $0x46c] sm:$0xf]
  %v324 = vld [vmem:[%s1 + $0x470] sm:$0xf]
  %v325 = vld [vmem:[%s1 + $0x474] sm:$0xf]
  %v326 = vld [vmem:[%s1 + $0x478] sm:$0xf]
  %v327 = vld [vmem:[%s1 + $0x47c] sm:$0xf]
  %v328 = vld [vmem:[%s1 + $0x480] sm:$0xf]
  %v329 = vld [vmem:[%s1 + $0x484] sm:$0xf]
  %v330 = vld [vmem:[%s1 + $0x488] sm:$0xf]
  %v331 = vld [vmem:[%s1 + $0x48c] sm:$0xf]
  %v332 = vld [vmem:[%s1 + $0x490] sm:$0xf]
  %v333 = vld [vmem:[%s1 + $0x494] sm:$0xf]
  %v334 = vld [vmem:[%s1 + $0x498] sm:$0xf]
  %v335 = vld [vmem:[%s1 + $0x49c] sm:$0xf]
  %v336 = vld [vmem:[%s1 + $0x4a0] sm:$0xf]
  %v337 = vld [vmem:[%s1 + $0x4a4] sm:$0xf]
  %v338 = vld [vmem:[%s1 + $0x4a8] sm:$0xf]
  %v339 = vld [vmem:[%s1 + $0x4ac] sm:$0xf]
  %v340 = vld [vmem:[%s1 + $0x4b0] sm:$0xf]
  %v341 = vld [vmem:[%s1 + $0x4b4] sm:$0xf]
  %v342 = vld [vmem:[%s1 + $0x4b8] sm:$0xf]
  %v343 = vld [vmem:[%s1 + $0x4bc] sm:$0xf]
  %v344 = vld [vmem:[%s1 + $0x4c0] sm:$0xf]
  %v345 = vld [vmem:[%s1 + $0x4c4] sm:$0xf]
  %v346 = vld [vmem:[%s1 + $0x4c8] sm:$0xf]
  %v347 = vld [vmem:[%s1 + $0x4cc] sm:$0xf]
  %v348 = vld [vmem:[%s1 + $0x4d0] sm:$0xf]
  %v349 = vld [vmem:[%s1 + $0x4d4] sm:$0xf]
  %v350 = vld [vmem:[%s1 + $0x4d8] sm:$0xf]
  %v351 = vld [vmem:[%s1 + $0x4dc] sm:$0xf]
  %v352 = vld [vmem:[%s1 + $0x4e0] sm:$0xf]
  %v353 = vld [vmem:[%s1 + $0x4e4] sm:$0xf]
  %v354 = vld [vmem:[%s1 + $0x4e8] sm:$0xf]
  %v355 = vld [vmem:[%s1 + $0x4ec] sm:$0xf]
  %v356 = vld [vmem:[%s1 + $0x4f0] sm:$0xf]
  %v357 = vld [vmem:[%s1 + $0x4f4] sm:$0xf]
  %v358 = vld [vmem:[%s1 + $0x4f8] sm:$0xf]
  %v359 = vld [vmem:[%s1 + $0x4fc] sm:$0xf]
  %v360 = vld [vmem:[%s1 + $0x500] sm:$0xf]
  %v361 = vld [vmem:[%s1 + $0x504] sm:$0xf]
  %v362 = vld [vmem:[%s1 + $0x508] sm:$0xf]
  %v363 = vld [vmem:[%s1 + $0x50c] sm:$0xf]
  %v364 = vld [vmem:[%s1 + $0x510] sm:$0xf]
  %v365 = vld [vmem:[%s1 + $0x514] sm:$0xf]
  %v366 = vld [vmem:[%s1 + $0x518] sm:$0xf]
  %v367 = vld [vmem:[%s1 + $0x51c] sm:$0xf]
  %v368 = vld [vmem:[%s1 + $0x520] sm:$0xf]
  %v369 = vld [vmem:[%s1 + $0x524] sm:$0xf]
  %v370 = vld [vmem:[%s1 + $0x528] sm:$0xf]
  %v371 = vld [vmem:[%s1 + $0x52c] sm:$0xf]
  %v372 = vld [vmem:[%s1 + $0x530] sm:$0xf]
  %v373 = vld [vmem:[%s1 + $0x534] sm:$0xf]
  %v374 = vld [vmem:[%s1 + $0x538] sm:$0xf]
  %v375 = vld [vmem:[%s1 + $0x53c] sm:$0xf]
  %v376 = vld [vmem:[%s1 + $0x540] sm:$0xf]
  %v377 = vld [vmem:[%s1 + $0x544] sm:$0xf]
  %v378 = vld [vmem:[%s1 + $0x548] sm:$0xf]
  %v379 = vld [vmem:[%s1 + $0x54c] sm:$0xf]
  %v380 = vld [vmem:[%s1 + $0x550] sm:$0xf]
  %v381 = vld [vmem:[%s1 + $0x554] sm:$0xf]
  %v382 = vld [vmem:[%s1 + $0x558] sm:$0xf]
  %v383 = vld [vmem:[%s1 + $0x55c] sm:$0xf]
  %v384 = vld [vmem:[%s1 + $0x560] sm:$0xf]
  %v385 = vld [vmem:[%s1 + $0x564] sm:$0xf]
  %v386 = vld [vmem:[%s1 + $0x568] sm:$0xf]
  %v387 = vld [vmem:[%s1 + $0x56c] sm:$0xf]
  %v388 = vld [vmem:[%s1 + $0x570] sm:$0xf]
  %v389 = vld [vmem:[%s1 + $0x574] sm:$0xf]
  %v390 = vld [vmem:[%s1 + $0x578] sm:$0xf]
  %v391 = vld [vmem:[%s1 + $0x57c] sm:$0xf]
  %v392 = vld [vmem:[%s1 + $0x580] sm:$0xf]
  %v393 = vld [vmem:[%s1 + $0x584] sm:$0xf]
  %v394 = vld [vmem:[%s1 + $0x588] sm:$0xf]
  %v395 = vld [vmem:[%s1 + $0x58c] sm:$0xf]
  %v396 = vld [vmem:[%s1 + $0x590] sm:$0xf]
  %v397 = vld [vmem:[%s1 + $0x594] sm:$0xf]
  %v398 = vld [vmem:[%s1 + $0x598] sm:$0xf]
  %v399 = vld [vmem:[%s1 + $0x59c] sm:$0xf]
  %v400 = vld [vmem:[%s1 + $0x5a0] sm:$0xf]
  %v401 = vld [vmem:[%s1 + $0x5a4] sm:$0xf]
  %v402 = vld [vmem:[%s1 + $0x5a8] sm:$0xf]
  %v403 = vld [vmem:[%s1 + $0x5ac] sm:$0xf]
  %v404 = vld [vmem:[%s1 + $0x5b0] sm:$0xf]
  %v405 = vld [vmem:[%s1 + $0x5b4] sm:$0xf]
  %v406 = vld [vmem:[%s1 + $0x5b8] sm:$0xf]
  %v407 = vld [vmem:[%s1 + $0x5bc] sm:$0xf]
  %v408 = vld [vmem:[%s1 + $0x5c0] sm:$0xf]
  %v409 = vld [vmem:[%s1 + $0x5c4] sm:$0xf]
  %v410 = vld [vmem:[%s1 + $0x5c8] sm:$0xf]
  %v411 = vld [vmem:[%s1 + $0x5cc] sm:$0xf]
  %v412 = vld [vmem:[%s1 + $0x5d0] sm:$0xf]
  %v413 = vld [vmem:[%s1 + $0x5d4] sm:$0xf]
  %v414 = vld [vmem:[%s1 + $0x5d8] sm:$0xf]
  %v415 = vld [vmem:[%s1 + $0x5dc] sm:$0xf]
  %v416 = vld [vmem:[%s1 + $0x5e0] sm:$0xf]
  %v417 = vld [vmem:[%s1 + $0x5e4] sm:$0xf]
  %v418 = vld [vmem:[%s1 + $0x5e8] sm:$0xf]
  %v419 = vld [vmem:[%s1 + $0x5ec] sm:$0xf]
  %v420 = vld [vmem:[%s1 + $0x5f0] sm:$0xf]
  %v421 = vld [vmem:[%s1 + $0x5f4] sm:$0xf]
  %v422 = vld [vmem:[%s1 + $0x5f8] sm:$0xf]
  %v423 = vld [vmem:[%s1 + $0x5fc] sm:$0xf]
  %v424 = vld [vmem:[%s1 + $0x600] sm:$0xf]
  %v425 = vld [vmem:[%s1 + $0x604] sm:$0xf]
  %v426 = vld [vmem:[%s1 + $0x608] sm:$0xf]
  %v427 = vld [vmem:[%s1 + $0x60c] sm:$0xf]
  %v428 = vld [vmem:[%s1 + $0x610] sm:$0xf]
  %v429 = vld [vmem:[%s1 + $0x614] sm:$0xf]
  %v430 = vld [vmem:[%s1 + $0x618] sm:$0xf]
  %v431 = vld [vmem:[%s1 + $0x61c] sm:$0xf]
  %v432 = vld [vmem:[%s1 + $0x620] sm:$0xf]
  %v433 = vld [vmem:[%s1 + $0x624] sm:$0xf]
  %v434 = vld [vmem:[%s1 + $0x628] sm:$0xf]
  %v435 = vld [vmem:[%s1 + $0x62c] sm:$0xf]
  %v436 = vld [vmem:[%s1 + $0x630] sm:$0xf]
  %v437 = vld [vmem:[%s1 + $0x634] sm:$0xf]
  %v438 = vld [vmem:[%s1 + $0x638] sm:$0xf]
  %v439 = vld [vmem:[%s1 + $0x63c] sm:$0xf]
  %v440 = vld [vmem:[%s2] sm:$0x1]
  %v442 = vlaneseq
  %v443 = vshrl.u32 %v442, 7
  %v444 = vsub.s32 0, %v443
  %v445 = vrot.slane %v440, %v444
  %v460 = vunpack.c.l.b16 %v27
  %v461 = vunpack.c.h.b16 %v27
  %v462 = vunpack.c.l.b16 %v28
  %v463 = vunpack.c.h.b16 %v28
  %v464 = vunpack.c.l.b16 %v29
  %v465 = vunpack.c.h.b16 %v29
  %v466 = vunpack.c.l.b16 %v30
  %v467 = vunpack.c.h.b16 %v30
  %v468 = vunpack.c.l.b16 %v31
  %v469 = vunpack.c.h.b16 %v31
  %v470 = vunpack.c.l.b16 %v32
  %v471 = vunpack.c.h.b16 %v32
  %v472 = vunpack.c.l.b16 %v33
  %v473 = vunpack.c.h.b16 %v33
  %v474 = vunpack.c.l.b16 %v34
  %v475 = vunpack.c.h.b16 %v34
  %v476 = vunpack.c.l.b16 %v35
  %v477 = vunpack.c.h.b16 %v35
  %v478 = vunpack.c.l.b16 %v36
  %v479 = vunpack.c.h.b16 %v36
  %v480 = vunpack.c.l.b16 %v37
  %v481 = vunpack.c.h.b16 %v37
  %v482 = vunpack.c.l.b16 %v38
  %v483 = vunpack.c.h.b16 %v38
  %v484 = vunpack.c.l.b16 %v39
  %v485 = vpack.c.b16 %v460, %v460
  %v486 = vpack.c.b16 %v461, %v461
  %v487 = vpack.c.b16 %v462, %v462
  %v488 = vpack.c.b16 %v463, %v463
  %v489 = vpack.c.b16 %v464, %v464
  %v490 = vpack.c.b16 %v465, %v465
  %v491 = vpack.c.b16 %v466, %v466
  %v492 = vpack.c.b16 %v467, %v467
  %v493 = vpack.c.b16 %v468, %v468
  %v494 = vpack.c.b16 %v469, %v469
  %v495 = vpack.c.b16 %v470, %v470
  %v496 = vpack.c.b16 %v471, %v471
  %v497 = vpack.c.b16 %v472, %v472
  %v498 = vpack.c.b16 %v473, %v473
  %v499 = vpack.c.b16 %v474, %v474
  %v500 = vpack.c.b16 %v475, %v475
  %v501 = vpack.c.b16 %v476, %v476
  %v502 = vpack.c.b16 %v477, %v477
  %v503 = vpack.c.b16 %v478, %v478
  %v504 = vpack.c.b16 %v479, %v479
  %v505 = vpack.c.b16 %v480, %v480
  %v506 = vpack.c.b16 %v481, %v481
  %v507 = vpack.c.b16 %v482, %v482
  %v508 = vpack.c.b16 %v483, %v483
  %v509 = vpack.c.b16 %v484, %v484
  %v935 = vunpack.c.l.b16 %v40
  %v936 = vunpack.c.l.b16 %v41
  %v937 = vunpack.c.l.b16 %v42
  %v938 = vunpack.c.l.b16 %v43
  %v939 = vunpack.c.l.b16 %v44
  %v940 = vunpack.c.l.b16 %v45
  %v941 = vunpack.c.l.b16 %v46
  %v942 = vunpack.c.l.b16 %v47
  %v943 = vunpack.c.l.b16 %v48
  %v944 = vunpack.c.l.b16 %v49
  %v945 = vunpack.c.l.b16 %v50
  %v946 = vunpack.c.l.b16 %v51
  %v947 = vunpack.c.l.b16 %v52
  %v948 = vunpack.c.l.b16 %v53
  %v949 = vunpack.c.l.b16 %v54
  %v950 = vunpack.c.l.b16 %v55
  %v951 = vunpack.c.l.b16 %v56
  %v952 = vunpack.c.l.b16 %v57
  %v953 = vunpack.c.l.b16 %v58
  %v954 = vunpack.c.l.b16 %v59
  %v955 = vunpack.c.l.b16 %v60
  %v956 = vunpack.c.l.b16 %v61
  %v957 = vunpack.c.l.b16 %v62
  %v958 = vunpack.c.l.b16 %v63
  %v959 = vunpack.c.l.b16 %v64
  %v960 = vunpack.c.l.b16 %v65
  %v961 = vunpack.c.l.b16 %v66
  %v962 = vunpack.c.l.b16 %v67
  %v963 = vunpack.c.l.b16 %v68
  %v964 = vunpack.c.l.b16 %v69
  %v965 = vunpack.c.l.b16 %v70
  %v966 = vunpack.c.l.b16 %v71
  %v967 = vunpack.c.l.b16 %v72
  %v968 = vunpack.c.l.b16 %v73
  %v969 = vunpack.c.l.b16 %v74
  %v970 = vunpack.c.l.b16 %v75
  %v971 = vunpack.c.l.b16 %v76
  %v972 = vunpack.c.l.b16 %v77
  %v973 = vunpack.c.l.b16 %v78
  %v974 = vunpack.c.l.b16 %v79
  %v975 = vunpack.c.l.b16 %v80
  %v976 = vunpack.c.l.b16 %v81
  %v977 = vunpack.c.l.b16 %v82
  %v978 = vunpack.c.l.b16 %v83
  %v979 = vunpack.c.l.b16 %v84
  %v980 = vunpack.c.l.b16 %v85
  %v981 = vunpack.c.l.b16 %v86
  %v982 = vunpack.c.l.b16 %v87
  %v983 = vunpack.c.l.b16 %v88
  %v984 = vunpack.c.l.b16 %v89
  %v985 = vunpack.c.l.b16 %v90
  %v986 = vunpack.c.l.b16 %v91
  %v987 = vunpack.c.l.b16 %v92
  %v988 = vunpack.c.l.b16 %v93
  %v989 = vunpack.c.l.b16 %v94
  %v990 = vunpack.c.l.b16 %v95
  %v991 = vunpack.c.l.b16 %v96
  %v992 = vunpack.c.l.b16 %v97
  %v993 = vunpack.c.l.b16 %v98
  %v994 = vunpack.c.l.b16 %v99
  %v995 = vunpack.c.l.b16 %v100
  %v996 = vunpack.c.l.b16 %v101
  %v997 = vunpack.c.l.b16 %v102
  %v998 = vunpack.c.l.b16 %v103
  %v999 = vunpack.c.l.b16 %v104
  %v1000 = vunpack.c.l.b16 %v105
  %v1001 = vunpack.c.l.b16 %v106
  %v1002 = vunpack.c.l.b16 %v107
  %v1003 = vunpack.c.l.b16 %v108
  %v1004 = vunpack.c.l.b16 %v109
  %v1005 = vunpack.c.l.b16 %v110
  %v1006 = vunpack.c.l.b16 %v111
  %v1007 = vunpack.c.l.b16 %v112
  %v1008 = vunpack.c.l.b16 %v113
  %v1009 = vunpack.c.l.b16 %v114
  %v1010 = vunpack.c.l.b16 %v115
  %v1011 = vunpack.c.l.b16 %v116
  %v1012 = vunpack.c.l.b16 %v117
  %v1013 = vunpack.c.l.b16 %v118
  %v1014 = vunpack.c.l.b16 %v119
  %v1015 = vunpack.c.l.b16 %v120
  %v1016 = vunpack.c.l.b16 %v121
  %v1017 = vunpack.c.l.b16 %v122
  %v1018 = vunpack.c.l.b16 %v123
  %v1019 = vunpack.c.l.b16 %v124
  %v1020 = vunpack.c.l.b16 %v125
  %v1021 = vunpack.c.l.b16 %v126
  %v1022 = vunpack.c.l.b16 %v127
  %v1023 = vunpack.c.l.b16 %v128
  %v1024 = vunpack.c.l.b16 %v129
  %v1025 = vunpack.c.l.b16 %v130
  %v1026 = vunpack.c.l.b16 %v131
  %v1027 = vunpack.c.l.b16 %v132
  %v1028 = vunpack.c.l.b16 %v133
  %v1029 = vunpack.c.l.b16 %v134
  %v1030 = vunpack.c.l.b16 %v135
  %v1031 = vunpack.c.l.b16 %v136
  %v1032 = vunpack.c.l.b16 %v137
  %v1033 = vunpack.c.l.b16 %v138
  %v1034 = vunpack.c.l.b16 %v139
  %v1035 = vunpack.c.l.b16 %v140
  %v1036 = vunpack.c.l.b16 %v141
  %v1037 = vunpack.c.l.b16 %v142
  %v1038 = vunpack.c.l.b16 %v143
  %v1039 = vunpack.c.l.b16 %v144
  %v1040 = vunpack.c.l.b16 %v145
  %v1041 = vunpack.c.l.b16 %v146
  %v1042 = vunpack.c.l.b16 %v147
  %v1043 = vunpack.c.l.b16 %v148
  %v1044 = vunpack.c.l.b16 %v149
  %v1045 = vunpack.c.l.b16 %v150
  %v1046 = vunpack.c.l.b16 %v151
  %v1047 = vunpack.c.l.b16 %v152
  %v1048 = vunpack.c.l.b16 %v153
  %v1049 = vunpack.c.l.b16 %v154
  %v1050 = vunpack.c.l.b16 %v155
  %v1051 = vunpack.c.l.b16 %v156
  %v1052 = vunpack.c.l.b16 %v157
  %v1053 = vunpack.c.l.b16 %v158
  %v1054 = vunpack.c.l.b16 %v159
  %v1055 = vunpack.c.l.b16 %v160
  %v1056 = vunpack.c.l.b16 %v161
  %v1057 = vunpack.c.l.b16 %v162
  %v1058 = vunpack.c.l.b16 %v163
  %v1059 = vunpack.c.l.b16 %v164
  %v1060 = vunpack.c.l.b16 %v165
  %v1061 = vunpack.c.l.b16 %v166
  %v1062 = vunpack.c.l.b16 %v167
  %v1063 = vunpack.c.l.b16 %v168
  %v1064 = vunpack.c.l.b16 %v169
  %v1065 = vunpack.c.l.b16 %v170
  %v1066 = vunpack.c.l.b16 %v171
  %v1067 = vunpack.c.l.b16 %v172
  %v1068 = vunpack.c.l.b16 %v173
  %v1069 = vunpack.c.l.b16 %v174
  %v1070 = vunpack.c.l.b16 %v175
  %v1071 = vunpack.c.l.b16 %v176
  %v1072 = vunpack.c.l.b16 %v177
  %v1073 = vunpack.c.l.b16 %v178
  %v1074 = vunpack.c.l.b16 %v179
  %v1075 = vunpack.c.l.b16 %v180
  %v1076 = vunpack.c.l.b16 %v181
  %v1077 = vunpack.c.l.b16 %v182
  %v1078 = vunpack.c.l.b16 %v183
  %v1079 = vunpack.c.l.b16 %v184
  %v1080 = vunpack.c.l.b16 %v185
  %v1081 = vunpack.c.l.b16 %v186
  %v1082 = vunpack.c.l.b16 %v187
  %v1083 = vunpack.c.l.b16 %v188
  %v1084 = vunpack.c.l.b16 %v189
  %v1085 = vunpack.c.l.b16 %v190
  %v1086 = vunpack.c.l.b16 %v191
  %v1087 = vunpack.c.l.b16 %v192
  %v1088 = vunpack.c.l.b16 %v193
  %v1089 = vunpack.c.l.b16 %v194
  %v1090 = vunpack.c.l.b16 %v195
  %v1091 = vunpack.c.l.b16 %v196
  %v1092 = vunpack.c.l.b16 %v197
  %v1093 = vunpack.c.l.b16 %v198
  %v1094 = vunpack.c.l.b16 %v199
  %v1095 = vunpack.c.l.b16 %v200
  %v1096 = vunpack.c.l.b16 %v201
  %v1097 = vunpack.c.l.b16 %v202
  %v1098 = vunpack.c.l.b16 %v203
  %v1099 = vunpack.c.l.b16 %v204
  %v1100 = vunpack.c.l.b16 %v205
  %v1101 = vunpack.c.l.b16 %v206
  %v1102 = vunpack.c.l.b16 %v207
  %v1103 = vunpack.c.l.b16 %v208
  %v1104 = vunpack.c.l.b16 %v209
  %v1105 = vunpack.c.l.b16 %v210
  %v1106 = vunpack.c.l.b16 %v211
  %v1107 = vunpack.c.l.b16 %v212
  %v1108 = vunpack.c.l.b16 %v213
  %v1109 = vunpack.c.l.b16 %v214
  %v1110 = vunpack.c.l.b16 %v215
  %v1111 = vunpack.c.l.b16 %v216
  %v1112 = vunpack.c.l.b16 %v217
  %v1113 = vunpack.c.l.b16 %v218
  %v1114 = vunpack.c.l.b16 %v219
  %v1115 = vunpack.c.l.b16 %v220
  %v1116 = vunpack.c.l.b16 %v221
  %v1117 = vunpack.c.l.b16 %v222
  %v1118 = vunpack.c.l.b16 %v223
  %v1119 = vunpack.c.l.b16 %v224
  %v1120 = vunpack.c.l.b16 %v225
  %v1121 = vunpack.c.l.b16 %v226
  %v1122 = vunpack.c.l.b16 %v227
  %v1123 = vunpack.c.l.b16 %v228
  %v1124 = vunpack.c.l.b16 %v229
  %v1125 = vunpack.c.l.b16 %v230
  %v1126 = vunpack.c.l.b16 %v231
  %v1127 = vunpack.c.l.b16 %v232
  %v1128 = vunpack.c.l.b16 %v233
  %v1129 = vunpack.c.l.b16 %v234
  %v1130 = vunpack.c.l.b16 %v235
  %v1131 = vunpack.c.l.b16 %v236
  %v1132 = vunpack.c.l.b16 %v237
  %v1133 = vunpack.c.l.b16 %v238
  %v1134 = vunpack.c.l.b16 %v239
  %v1135 = vunpack.c.l.b16 %v240
  %v1136 = vunpack.c.l.b16 %v241
  %v1137 = vunpack.c.l.b16 %v242
  %v1138 = vunpack.c.l.b16 %v243
  %v1139 = vunpack.c.l.b16 %v244
  %v1140 = vunpack.c.l.b16 %v245
  %v1141 = vunpack.c.l.b16 %v246
  %v1142 = vunpack.c.l.b16 %v247
  %v1143 = vunpack.c.l.b16 %v248
  %v1144 = vunpack.c.l.b16 %v249
  %v1145 = vunpack.c.l.b16 %v250
  %v1146 = vunpack.c.l.b16 %v251
  %v1147 = vunpack.c.l.b16 %v252
  %v1148 = vunpack.c.l.b16 %v253
  %v1149 = vunpack.c.l.b16 %v254
  %v1150 = vunpack.c.l.b16 %v255
  %v1151 = vunpack.c.l.b16 %v256
  %v1152 = vunpack.c.l.b16 %v257
  %v1153 = vunpack.c.l.b16 %v258
  %v1154 = vunpack.c.l.b16 %v259
  %v1155 = vunpack.c.l.b16 %v260
  %v1156 = vunpack.c.l.b16 %v261
  %v1157 = vunpack.c.l.b16 %v262
  %v1158 = vunpack.c.l.b16 %v263
  %v1159 = vunpack.c.l.b16 %v264
  %v1160 = vunpack.c.l.b16 %v265
  %v1161 = vunpack.c.l.b16 %v266
  %v1162 = vunpack.c.l.b16 %v267
  %v1163 = vunpack.c.l.b16 %v268
  %v1164 = vunpack.c.l.b16 %v269
  %v1165 = vunpack.c.l.b16 %v270
  %v1166 = vunpack.c.l.b16 %v271
  %v1167 = vunpack.c.l.b16 %v272
  %v1168 = vunpack.c.l.b16 %v273
  %v1169 = vunpack.c.l.b16 %v274
  %v1170 = vunpack.c.l.b16 %v275
  %v1171 = vunpack.c.l.b16 %v276
  %v1172 = vunpack.c.l.b16 %v277
  %v1173 = vunpack.c.l.b16 %v278
  %v1174 = vunpack.c.l.b16 %v279
  %v1175 = vunpack.c.l.b16 %v280
  %v1176 = vunpack.c.l.b16 %v281
  %v1177 = vunpack.c.l.b16 %v282
  %v1178 = vunpack.c.l.b16 %v283
  %v1179 = vunpack.c.l.b16 %v284
  %v1180 = vunpack.c.l.b16 %v285
  %v1181 = vunpack.c.l.b16 %v286
  %v1182 = vunpack.c.l.b16 %v287
  %v1183 = vunpack.c.l.b16 %v288
  %v1184 = vunpack.c.l.b16 %v289
  %v1185 = vunpack.c.l.b16 %v290
  %v1186 = vunpack.c.l.b16 %v291
  %v1187 = vunpack.c.l.b16 %v292
  %v1188 = vunpack.c.l.b16 %v293
  %v1189 = vunpack.c.l.b16 %v294
  %v1190 = vunpack.c.l.b16 %v295
  %v1191 = vunpack.c.l.b16 %v296
  %v1192 = vunpack.c.l.b16 %v297
  %v1193 = vunpack.c.l.b16 %v298
  %v1194 = vunpack.c.l.b16 %v299
  %v1195 = vunpack.c.l.b16 %v300
  %v1196 = vunpack.c.l.b16 %v301
  %v1197 = vunpack.c.l.b16 %v302
  %v1198 = vunpack.c.l.b16 %v303
  %v1199 = vunpack.c.l.b16 %v304
  %v1200 = vunpack.c.l.b16 %v305
  %v1201 = vunpack.c.l.b16 %v306
  %v1202 = vunpack.c.l.b16 %v307
  %v1203 = vunpack.c.l.b16 %v308
  %v1204 = vunpack.c.l.b16 %v309
  %v1205 = vunpack.c.l.b16 %v310
  %v1206 = vunpack.c.l.b16 %v311
  %v1207 = vunpack.c.l.b16 %v312
  %v1208 = vunpack.c.l.b16 %v313
  %v1209 = vunpack.c.l.b16 %v314
  %v1210 = vunpack.c.l.b16 %v315
  %v1211 = vunpack.c.l.b16 %v316
  %v1212 = vunpack.c.l.b16 %v317
  %v1213 = vunpack.c.l.b16 %v318
  %v1214 = vunpack.c.l.b16 %v319
  %v1215 = vunpack.c.l.b16 %v320
  %v1216 = vunpack.c.l.b16 %v321
  %v1217 = vunpack.c.l.b16 %v322
  %v1218 = vunpack.c.l.b16 %v323
  %v1219 = vunpack.c.l.b16 %v324
  %v1220 = vunpack.c.l.b16 %v325
  %v1221 = vunpack.c.l.b16 %v326
  %v1222 = vunpack.c.l.b16 %v327
  %v1223 = vunpack.c.l.b16 %v328
  %v1224 = vunpack.c.l.b16 %v329
  %v1225 = vunpack.c.l.b16 %v330
  %v1226 = vunpack.c.l.b16 %v331
  %v1227 = vunpack.c.l.b16 %v332
  %v1228 = vunpack.c.l.b16 %v333
  %v1229 = vunpack.c.l.b16 %v334
  %v1230 = vunpack.c.l.b16 %v335
  %v1231 = vunpack.c.l.b16 %v336
  %v1232 = vunpack.c.l.b16 %v337
  %v1233 = vunpack.c.l.b16 %v338
  %v1234 = vunpack.c.l.b16 %v339
  %v1235 = vunpack.c.l.b16 %v340
  %v1236 = vunpack.c.l.b16 %v341
  %v1237 = vunpack.c.l.b16 %v342
  %v1238 = vunpack.c.l.b16 %v343
  %v1239 = vunpack.c.l.b16 %v344
  %v1240 = vunpack.c.l.b16 %v345
  %v1241 = vunpack.c.l.b16 %v346
  %v1242 = vunpack.c.l.b16 %v347
  %v1243 = vunpack.c.l.b16 %v348
  %v1244 = vunpack.c.l.b16 %v349
  %v1245 = vunpack.c.l.b16 %v350
  %v1246 = vunpack.c.l.b16 %v351
  %v1247 = vunpack.c.l.b16 %v352
  %v1248 = vunpack.c.l.b16 %v353
  %v1249 = vunpack.c.l.b16 %v354
  %v1250 = vunpack.c.l.b16 %v355
  %v1251 = vunpack.c.l.b16 %v356
  %v1252 = vunpack.c.l.b16 %v357
  %v1253 = vunpack.c.l.b16 %v358
  %v1254 = vunpack.c.l.b16 %v359
  %v1255 = vunpack.c.l.b16 %v360
  %v1256 = vunpack.c.l.b16 %v361
  %v1257 = vunpack.c.l.b16 %v362
  %v1258 = vunpack.c.l.b16 %v363
  %v1259 = vunpack.c.l.b16 %v364
  %v1260 = vunpack.c.l.b16 %v365
  %v1261 = vunpack.c.l.b16 %v366
  %v1262 = vunpack.c.l.b16 %v367
  %v1263 = vunpack.c.l.b16 %v368
  %v1264 = vunpack.c.l.b16 %v369
  %v1265 = vunpack.c.l.b16 %v370
  %v1266 = vunpack.c.l.b16 %v371
  %v1267 = vunpack.c.l.b16 %v372
  %v1268 = vunpack.c.l.b16 %v373
  %v1269 = vunpack.c.l.b16 %v374
  %v1270 = vunpack.c.l.b16 %v375
  %v1271 = vunpack.c.l.b16 %v376
  %v1272 = vunpack.c.l.b16 %v377
  %v1273 = vunpack.c.l.b16 %v378
  %v1274 = vunpack.c.l.b16 %v379
  %v1275 = vunpack.c.l.b16 %v380
  %v1276 = vunpack.c.l.b16 %v381
  %v1277 = vunpack.c.l.b16 %v382
  %v1278 = vunpack.c.l.b16 %v383
  %v1279 = vunpack.c.l.b16 %v384
  %v1280 = vunpack.c.l.b16 %v385
  %v1281 = vunpack.c.l.b16 %v386
  %v1282 = vunpack.c.l.b16 %v387
  %v1283 = vunpack.c.l.b16 %v388
  %v1284 = vunpack.c.l.b16 %v389
  %v1285 = vunpack.c.l.b16 %v390
  %v1286 = vunpack.c.l.b16 %v391
  %v1287 = vunpack.c.l.b16 %v392
  %v1288 = vunpack.c.l.b16 %v393
  %v1289 = vunpack.c.l.b16 %v394
  %v1290 = vunpack.c.l.b16 %v395
  %v1291 = vunpack.c.l.b16 %v396
  %v1292 = vunpack.c.l.b16 %v397
  %v1293 = vunpack.c.l.b16 %v398
  %v1294 = vunpack.c.l.b16 %v399
  %v1295 = vunpack.c.l.b16 %v400
  %v1296 = vunpack.c.l.b16 %v401
  %v1297 = vunpack.c.l.b16 %v402
  %v1298 = vunpack.c.l.b16 %v403
  %v1299 = vunpack.c.l.b16 %v404
  %v1300 = vunpack.c.l.b16 %v405
  %v1301 = vunpack.c.l.b16 %v406
  %v1302 = vunpack.c.l.b16 %v407
  %v1303 = vunpack.c.l.b16 %v408
  %v1304 = vunpack.c.l.b16 %v409
  %v1305 = vunpack.c.l.b16 %v410
  %v1306 = vunpack.c.l.b16 %v411
  %v1307 = vunpack.c.l.b16 %v412
  %v1308 = vunpack.c.l.b16 %v413
  %v1309 = vunpack.c.l.b16 %v414
  %v1310 = vunpack.c.l.b16 %v415
  %v1311 = vunpack.c.l.b16 %v416
  %v1312 = vunpack.c.l.b16 %v417
  %v1313 = vunpack.c.l.b16 %v418
  %v1314 = vunpack.c.l.b16 %v419
  %v1315 = vunpack.c.l.b16 %v420
  %v1316 = vunpack.c.l.b16 %v421
  %v1317 = vunpack.c.l.b16 %v422
  %v1318 = vunpack.c.l.b16 %v423
  %v1319 = vunpack.c.l.b16 %v424
  %v1320 = vunpack.c.l.b16 %v425
  %v1321 = vunpack.c.l.b16 %v426
  %v1322 = vunpack.c.l.b16 %v427
  %v1323 = vunpack.c.l.b16 %v428
  %v1324 = vunpack.c.l.b16 %v429
  %v1325 = vunpack.c.l.b16 %v430
  %v1326 = vunpack.c.l.b16 %v431
  %v1327 = vunpack.c.l.b16 %v432
  %v1328 = vunpack.c.l.b16 %v433
  %v1329 = vunpack.c.l.b16 %v434
  %v1330 = vunpack.c.l.b16 %v435
  %v1331 = vunpack.c.l.b16 %v436
  %v1332 = vunpack.c.l.b16 %v437
  %v1333 = vunpack.c.l.b16 %v438
  %v1334 = vunpack.c.l.b16 %v439
  %v1335 = vpack.c.b16 %v936, %v935
  %v1336 = vpack.c.b16 %v938, %v937
  %v1337 = vpack.c.b16 %v940, %v939
  %v1338 = vpack.c.b16 %v942, %v941
  %v1339 = vpack.c.b16 %v944, %v943
  %v1340 = vpack.c.b16 %v946, %v945
  %v1341 = vpack.c.b16 %v948, %v947
  %v1342 = vpack.c.b16 %v950, %v949
  %v1343 = vpack.c.b16 %v952, %v951
  %v1344 = vpack.c.b16 %v954, %v953
  %v1345 = vpack.c.b16 %v956, %v955
  %v1346 = vpack.c.b16 %v958, %v957
  %v1347 = vpack.c.b16 %v960, %v959
  %v1348 = vpack.c.b16 %v962, %v961
  %v1349 = vpack.c.b16 %v964, %v963
  %v1350 = vpack.c.b16 %v966, %v965
  %v1351 = vpack.c.b16 %v968, %v967
  %v1352 = vpack.c.b16 %v970, %v969
  %v1353 = vpack.c.b16 %v972, %v971
  %v1354 = vpack.c.b16 %v974, %v973
  %v1355 = vpack.c.b16 %v976, %v975
  %v1356 = vpack.c.b16 %v978, %v977
  %v1357 = vpack.c.b16 %v980, %v979
  %v1358 = vpack.c.b16 %v982, %v981
  %v1359 = vpack.c.b16 %v984, %v983
  %v1360 = vpack.c.b16 %v986, %v985
  %v1361 = vpack.c.b16 %v988, %v987
  %v1362 = vpack.c.b16 %v990, %v989
  %v1363 = vpack.c.b16 %v992, %v991
  %v1364 = vpack.c.b16 %v994, %v993
  %v1365 = vpack.c.b16 %v996, %v995
  %v1366 = vpack.c.b16 %v998, %v997
  %v1367 = vpack.c.b16 %v1000, %v999
  %v1368 = vpack.c.b16 %v1002, %v1001
  %v1369 = vpack.c.b16 %v1004, %v1003
  %v1370 = vpack.c.b16 %v1006, %v1005
  %v1371 = vpack.c.b16 %v1008, %v1007
  %v1372 = vpack.c.b16 %v1010, %v1009
  %v1373 = vpack.c.b16 %v1012, %v1011
  %v1374 = vpack.c.b16 %v1014, %v1013
  %v1375 = vpack.c.b16 %v1016, %v1015
  %v1376 = vpack.c.b16 %v1018, %v1017
  %v1377 = vpack.c.b16 %v1020, %v1019
  %v1378 = vpack.c.b16 %v1022, %v1021
  %v1379 = vpack.c.b16 %v1024, %v1023
  %v1380 = vpack.c.b16 %v1026, %v1025
  %v1381 = vpack.c.b16 %v1028, %v1027
  %v1382 = vpack.c.b16 %v1030, %v1029
  %v1383 = vpack.c.b16 %v1032, %v1031
  %v1384 = vpack.c.b16 %v1034, %v1033
  %v1385 = vpack.c.b16 %v1036, %v1035
  %v1386 = vpack.c.b16 %v1038, %v1037
  %v1387 = vpack.c.b16 %v1040, %v1039
  %v1388 = vpack.c.b16 %v1042, %v1041
  %v1389 = vpack.c.b16 %v1044, %v1043
  %v1390 = vpack.c.b16 %v1046, %v1045
  %v1391 = vpack.c.b16 %v1048, %v1047
  %v1392 = vpack.c.b16 %v1050, %v1049
  %v1393 = vpack.c.b16 %v1052, %v1051
  %v1394 = vpack.c.b16 %v1054, %v1053
  %v1395 = vpack.c.b16 %v1056, %v1055
  %v1396 = vpack.c.b16 %v1058, %v1057
  %v1397 = vpack.c.b16 %v1060, %v1059
  %v1398 = vpack.c.b16 %v1062, %v1061
  %v1399 = vpack.c.b16 %v1064, %v1063
  %v1400 = vpack.c.b16 %v1066, %v1065
  %v1401 = vpack.c.b16 %v1068, %v1067
  %v1402 = vpack.c.b16 %v1070, %v1069
  %v1403 = vpack.c.b16 %v1072, %v1071
  %v1404 = vpack.c.b16 %v1074, %v1073
  %v1405 = vpack.c.b16 %v1076, %v1075
  %v1406 = vpack.c.b16 %v1078, %v1077
  %v1407 = vpack.c.b16 %v1080, %v1079
  %v1408 = vpack.c.b16 %v1082, %v1081
  %v1409 = vpack.c.b16 %v1084, %v1083
  %v1410 = vpack.c.b16 %v1086, %v1085
  %v1411 = vpack.c.b16 %v1088, %v1087
  %v1412 = vpack.c.b16 %v1090, %v1089
  %v1413 = vpack.c.b16 %v1092, %v1091
  %v1414 = vpack.c.b16 %v1094, %v1093
  %v1415 = vpack.c.b16 %v1096, %v1095
  %v1416 = vpack.c.b16 %v1098, %v1097
  %v1417 = vpack.c.b16 %v1100, %v1099
  %v1418 = vpack.c.b16 %v1102, %v1101
  %v1419 = vpack.c.b16 %v1104, %v1103
  %v1420 = vpack.c.b16 %v1106, %v1105
  %v1421 = vpack.c.b16 %v1108, %v1107
  %v1422 = vpack.c.b16 %v1110, %v1109
  %v1423 = vpack.c.b16 %v1112, %v1111
  %v1424 = vpack.c.b16 %v1114, %v1113
  %v1425 = vpack.c.b16 %v1116, %v1115
  %v1426 = vpack.c.b16 %v1118, %v1117
  %v1427 = vpack.c.b16 %v1120, %v1119
  %v1428 = vpack.c.b16 %v1122, %v1121
  %v1429 = vpack.c.b16 %v1124, %v1123
  %v1430 = vpack.c.b16 %v1126, %v1125
  %v1431 = vpack.c.b16 %v1128, %v1127
  %v1432 = vpack.c.b16 %v1130, %v1129
  %v1433 = vpack.c.b16 %v1132, %v1131
  %v1434 = vpack.c.b16 %v1134, %v1133
  %v1435 = vpack.c.b16 %v1136, %v1135
  %v1436 = vpack.c.b16 %v1138, %v1137
  %v1437 = vpack.c.b16 %v1140, %v1139
  %v1438 = vpack.c.b16 %v1142, %v1141
  %v1439 = vpack.c.b16 %v1144, %v1143
  %v1440 = vpack.c.b16 %v1146, %v1145
  %v1441 = vpack.c.b16 %v1148, %v1147
  %v1442 = vpack.c.b16 %v1150, %v1149
  %v1443 = vpack.c.b16 %v1152, %v1151
  %v1444 = vpack.c.b16 %v1154, %v1153
  %v1445 = vpack.c.b16 %v1156, %v1155
  %v1446 = vpack.c.b16 %v1158, %v1157
  %v1447 = vpack.c.b16 %v1160, %v1159
  %v1448 = vpack.c.b16 %v1162, %v1161
  %v1449 = vpack.c.b16 %v1164, %v1163
  %v1450 = vpack.c.b16 %v1166, %v1165
  %v1451 = vpack.c.b16 %v1168, %v1167
  %v1452 = vpack.c.b16 %v1170, %v1169
  %v1453 = vpack.c.b16 %v1172, %v1171
  %v1454 = vpack.c.b16 %v1174, %v1173
  %v1455 = vpack.c.b16 %v1176, %v1175
  %v1456 = vpack.c.b16 %v1178, %v1177
  %v1457 = vpack.c.b16 %v1180, %v1179
  %v1458 = vpack.c.b16 %v1182, %v1181
  %v1459 = vpack.c.b16 %v1184, %v1183
  %v1460 = vpack.c.b16 %v1186, %v1185
  %v1461 = vpack.c.b16 %v1188, %v1187
  %v1462 = vpack.c.b16 %v1190, %v1189
  %v1463 = vpack.c.b16 %v1192, %v1191
  %v1464 = vpack.c.b16 %v1194, %v1193
  %v1465 = vpack.c.b16 %v1196, %v1195
  %v1466 = vpack.c.b16 %v1198, %v1197
  %v1467 = vpack.c.b16 %v1200, %v1199
  %v1468 = vpack.c.b16 %v1202, %v1201
  %v1469 = vpack.c.b16 %v1204, %v1203
  %v1470 = vpack.c.b16 %v1206, %v1205
  %v1471 = vpack.c.b16 %v1208, %v1207
  %v1472 = vpack.c.b16 %v1210, %v1209
  %v1473 = vpack.c.b16 %v1212, %v1211
  %v1474 = vpack.c.b16 %v1214, %v1213
  %v1475 = vpack.c.b16 %v1216, %v1215
  %v1476 = vpack.c.b16 %v1218, %v1217
  %v1477 = vpack.c.b16 %v1220, %v1219
  %v1478 = vpack.c.b16 %v1222, %v1221
  %v1479 = vpack.c.b16 %v1224, %v1223
  %v1480 = vpack.c.b16 %v1226, %v1225
  %v1481 = vpack.c.b16 %v1228, %v1227
  %v1482 = vpack.c.b16 %v1230, %v1229
  %v1483 = vpack.c.b16 %v1232, %v1231
  %v1484 = vpack.c.b16 %v1234, %v1233
  %v1485 = vpack.c.b16 %v1236, %v1235
  %v1486 = vpack.c.b16 %v1238, %v1237
  %v1487 = vpack.c.b16 %v1240, %v1239
  %v1488 = vpack.c.b16 %v1242, %v1241
  %v1489 = vpack.c.b16 %v1244, %v1243
  %v1490 = vpack.c.b16 %v1246, %v1245
  %v1491 = vpack.c.b16 %v1248, %v1247
  %v1492 = vpack.c.b16 %v1250, %v1249
  %v1493 = vpack.c.b16 %v1252, %v1251
  %v1494 = vpack.c.b16 %v1254, %v1253
  %v1495 = vpack.c.b16 %v1256, %v1255
  %v1496 = vpack.c.b16 %v1258, %v1257
  %v1497 = vpack.c.b16 %v1260, %v1259
  %v1498 = vpack.c.b16 %v1262, %v1261
  %v1499 = vpack.c.b16 %v1264, %v1263
  %v1500 = vpack.c.b16 %v1266, %v1265
  %v1501 = vpack.c.b16 %v1268, %v1267
  %v1502 = vpack.c.b16 %v1270, %v1269
  %v1503 = vpack.c.b16 %v1272, %v1271
  %v1504 = vpack.c.b16 %v1274, %v1273
  %v1505 = vpack.c.b16 %v1276, %v1275
  %v1506 = vpack.c.b16 %v1278, %v1277
  %v1507 = vpack.c.b16 %v1280, %v1279
  %v1508 = vpack.c.b16 %v1282, %v1281
  %v1509 = vpack.c.b16 %v1284, %v1283
  %v1510 = vpack.c.b16 %v1286, %v1285
  %v1511 = vpack.c.b16 %v1288, %v1287
  %v1512 = vpack.c.b16 %v1290, %v1289
  %v1513 = vpack.c.b16 %v1292, %v1291
  %v1514 = vpack.c.b16 %v1294, %v1293
  %v1515 = vpack.c.b16 %v1296, %v1295
  %v1516 = vpack.c.b16 %v1298, %v1297
  %v1517 = vpack.c.b16 %v1300, %v1299
  %v1518 = vpack.c.b16 %v1302, %v1301
  %v1519 = vpack.c.b16 %v1304, %v1303
  %v1520 = vpack.c.b16 %v1306, %v1305
  %v1521 = vpack.c.b16 %v1308, %v1307
  %v1522 = vpack.c.b16 %v1310, %v1309
  %v1523 = vpack.c.b16 %v1312, %v1311
  %v1524 = vpack.c.b16 %v1314, %v1313
  %v1525 = vpack.c.b16 %v1316, %v1315
  %v1526 = vpack.c.b16 %v1318, %v1317
  %v1527 = vpack.c.b16 %v1320, %v1319
  %v1528 = vpack.c.b16 %v1322, %v1321
  %v1529 = vpack.c.b16 %v1324, %v1323
  %v1530 = vpack.c.b16 %v1326, %v1325
  %v1531 = vpack.c.b16 %v1328, %v1327
  %v1532 = vpack.c.b16 %v1330, %v1329
  %v1533 = vpack.c.b16 %v1332, %v1331
  %v1534 = vpack.c.b16 %v1334, %v1333
  %1735 = vmatprep.subr.bf16.mxu0 0
  %1736 = vmatpush1.bf16.msra.mxu0 %v1335
  %1737 = vmatprep.subr.bf16.mxu0 0
  %1738 = vmatpush1.bf16.msra.mxu0 %v1336
  %1739 = vmatprep.subr.bf16.mxu0 0
  %1740 = vmatpush1.bf16.msra.mxu0 %v1337
  %1741 = vmatprep.subr.bf16.mxu0 0
  %1742 = vmatpush1.bf16.msra.mxu0 %v1338
  %1743 = vmatprep.subr.bf16.mxu0 0
  %1744 = vmatpush1.bf16.msra.mxu0 %v1339
  %1745 = vmatprep.subr.bf16.mxu0 0
  %1746 = vmatpush1.bf16.msra.mxu0 %v1340
  %1747 = vmatprep.subr.bf16.mxu0 0
  %1748 = vmatpush1.bf16.msra.mxu0 %v1341
  %1749 = vmatprep.subr.bf16.mxu0 0
  %1750 = vmatpush1.bf16.msra.mxu0 %v1342
  %1751 = vmatprep.subr.bf16.mxu0 0
  %1752 = vmatpush1.bf16.msra.mxu0 %v1343
  %1753 = vmatprep.subr.bf16.mxu0 0
  %1754 = vmatpush1.bf16.msra.mxu0 %v1344
  %1755 = vmatprep.subr.bf16.mxu0 0
  %1756 = vmatpush1.bf16.msra.mxu0 %v1345
  %1757 = vmatprep.subr.bf16.mxu0 0
  %1758 = vmatpush1.bf16.msra.mxu0 %v1346
  %1759 = vmatprep.subr.bf16.mxu0 0
  %1760 = vmatpush1.bf16.msra.mxu0 %v1347
  %1761 = vmatprep.subr.bf16.mxu0 0
  %1762 = vmatpush1.bf16.msra.mxu0 %v1348
  %1763 = vmatprep.subr.bf16.mxu0 0
  %1764 = vmatpush1.bf16.msra.mxu0 %v1349
  %1765 = vmatprep.subr.bf16.mxu0 0
  %1766 = vmatpush1.bf16.msra.mxu0 %v1350
  %1767 = vmatprep.mubr.bf16.mxu0 %v486
  %1768 = vmatmul.mubr.bf16.gmra.mrb[0].mxu0 %v485
  %v1769 = vpop.f32.mrb[0].mxu0
  %v1770 = vadd.f32 %v445, %v1769
  %v1771 = vpop.f32.mrb[0].mxu0
  %v1772 = vpop.f32.mrb[0].mxu0
  %v1773 = vpop.f32.mrb[0].mxu0
  %1774 = vdwg.mxu0
  %1775 = vmatprep.subr.bf16.mxu0 0
  %1776 = vmatpush1.bf16.msra.mxu0 %v1351
  %1777 = vmatprep.subr.bf16.mxu0 0
  %1778 = vmatpush1.bf16.msra.mxu0 %v1352
  %1779 = vmatprep.subr.bf16.mxu0 0
  %1780 = vmatpush1.bf16.msra.mxu0 %v1353
  %1781 = vmatprep.subr.bf16.mxu0 0
  %1782 = vmatpush1.bf16.msra.mxu0 %v1354
  %1783 = vmatprep.subr.bf16.mxu0 0
  %1784 = vmatpush1.bf16.msra.mxu0 %v1355
  %1785 = vmatprep.subr.bf16.mxu0 0
  %1786 = vmatpush1.bf16.msra.mxu0 %v1356
  %1787 = vmatprep.subr.bf16.mxu0 0
  %1788 = vmatpush1.bf16.msra.mxu0 %v1357
  %1789 = vmatprep.subr.bf16.mxu0 0
  %1790 = vmatpush1.bf16.msra.mxu0 %v1358
  %1791 = vmatprep.subr.bf16.mxu0 0
  %1792 = vmatpush1.bf16.msra.mxu0 %v1359
  %1793 = vmatprep.subr.bf16.mxu0 0
  %1794 = vmatpush1.bf16.msra.mxu0 %v1360
  %1795 = vmatprep.subr.bf16.mxu0 0
  %1796 = vmatpush1.bf16.msra.mxu0 %v1361
  %1797 = vmatprep.subr.bf16.mxu0 0
  %1798 = vmatpush1.bf16.msra.mxu0 %v1362
  %1799 = vmatprep.subr.bf16.mxu0 0
  %1800 = vmatpush1.bf16.msra.mxu0 %v1363
  %1801 = vmatprep.subr.bf16.mxu0 0
  %1802 = vmatpush1.bf16.msra.mxu0 %v1364
  %1803 = vmatprep.subr.bf16.mxu0 0
  %1804 = vmatpush1.bf16.msra.mxu0 %v1365
  %1805 = vmatprep.subr.bf16.mxu0 0
  %1806 = vmatpush1.bf16.msra.mxu0 %v1366
  %1807 = vmatprep.mubr.bf16.mxu0 %v488
  %1808 = vmatmul.mubr.bf16.gmra.mrb[0].mxu0 %v487
  %v1809 = vpop.f32.mrb[0].mxu0
  %v1810 = vadd.f32 %v1770, %v1809
  %v1811 = vpop.f32.mrb[0].mxu0
  %v1812 = vpop.f32.mrb[0].mxu0
  %v1813 = vpop.f32.mrb[0].mxu0
  %1814 = vdwg.mxu0
  %1815 = vmatprep.subr.bf16.mxu0 0
  %1816 = vmatpush1.bf16.msra.mxu0 %v1367
  %1817 = vmatprep.subr.bf16.mxu0 0
  %1818 = vmatpush1.bf16.msra.mxu0 %v1368
  %1819 = vmatprep.subr.bf16.mxu0 0
  %1820 = vmatpush1.bf16.msra.mxu0 %v1369
  %1821 = vmatprep.subr.bf16.mxu0 0
  %1822 = vmatpush1.bf16.msra.mxu0 %v1370
  %1823 = vmatprep.subr.bf16.mxu0 0
  %1824 = vmatpush1.bf16.msra.mxu0 %v1371
  %1825 = vmatprep.subr.bf16.mxu0 0
  %1826 = vmatpush1.bf16.msra.mxu0 %v1372
  %1827 = vmatprep.subr.bf16.mxu0 0
  %1828 = vmatpush1.bf16.msra.mxu0 %v1373
  %1829 = vmatprep.subr.bf16.mxu0 0
  %1830 = vmatpush1.bf16.msra.mxu0 %v1374
  %1831 = vmatprep.subr.bf16.mxu0 0
  %1832 = vmatpush1.bf16.msra.mxu0 %v1375
  %1833 = vmatprep.subr.bf16.mxu0 0
  %1834 = vmatpush1.bf16.msra.mxu0 %v1376
  %1835 = vmatprep.subr.bf16.mxu0 0
  %1836 = vmatpush1.bf16.msra.mxu0 %v1377
  %1837 = vmatprep.subr.bf16.mxu0 0
  %1838 = vmatpush1.bf16.msra.mxu0 %v1378
  %1839 = vmatprep.subr.bf16.mxu0 0
  %1840 = vmatpush1.bf16.msra.mxu0 %v1379
  %1841 = vmatprep.subr.bf16.mxu0 0
  %1842 = vmatpush1.bf16.msra.mxu0 %v1380
  %1843 = vmatprep.subr.bf16.mxu0 0
  %1844 = vmatpush1.bf16.msra.mxu0 %v1381
  %1845 = vmatprep.subr.bf16.mxu0 0
  %1846 = vmatpush1.bf16.msra.mxu0 %v1382
  %1847 = vmatprep.mubr.bf16.mxu0 %v490
  %1848 = vmatmul.mubr.bf16.gmra.mrb[0].mxu0 %v489
  %v1849 = vpop.f32.mrb[0].mxu0
  %v1850 = vadd.f32 %v1810, %v1849
  %v1851 = vpop.f32.mrb[0].mxu0
  %v1852 = vpop.f32.mrb[0].mxu0
  %v1853 = vpop.f32.mrb[0].mxu0
  %1854 = vdwg.mxu0
  %1855 = vmatprep.subr.bf16.mxu0 0
  %1856 = vmatpush1.bf16.msra.mxu0 %v1383
  %1857 = vmatprep.subr.bf16.mxu0 0
  %1858 = vmatpush1.bf16.msra.mxu0 %v1384
  %1859 = vmatprep.subr.bf16.mxu0 0
  %1860 = vmatpush1.bf16.msra.mxu0 %v1385
  %1861 = vmatprep.subr.bf16.mxu0 0
  %1862 = vmatpush1.bf16.msra.mxu0 %v1386
  %1863 = vmatprep.subr.bf16.mxu0 0
  %1864 = vmatpush1.bf16.msra.mxu0 %v1387
  %1865 = vmatprep.subr.bf16.mxu0 0
  %1866 = vmatpush1.bf16.msra.mxu0 %v1388
  %1867 = vmatprep.subr.bf16.mxu0 0
  %1868 = vmatpush1.bf16.msra.mxu0 %v1389
  %1869 = vmatprep.subr.bf16.mxu0 0
  %1870 = vmatpush1.bf16.msra.mxu0 %v1390
  %1871 = vmatprep.subr.bf16.mxu0 0
  %1872 = vmatpush1.bf16.msra.mxu0 %v1391
  %1873 = vmatprep.subr.bf16.mxu0 0
  %1874 = vmatpush1.bf16.msra.mxu0 %v1392
  %1875 = vmatprep.subr.bf16.mxu0 0
  %1876 = vmatpush1.bf16.msra.mxu0 %v1393
  %1877 = vmatprep.subr.bf16.mxu0 0
  %1878 = vmatpush1.bf16.msra.mxu0 %v1394
  %1879 = vmatprep.subr.bf16.mxu0 0
  %1880 = vmatpush1.bf16.msra.mxu0 %v1395
  %1881 = vmatprep.subr.bf16.mxu0 0
  %1882 = vmatpush1.bf16.msra.mxu0 %v1396
  %1883 = vmatprep.subr.bf16.mxu0 0
  %1884 = vmatpush1.bf16.msra.mxu0 %v1397
  %1885 = vmatprep.subr.bf16.mxu0 0
  %1886 = vmatpush1.bf16.msra.mxu0 %v1398
  %1887 = vmatprep.mubr.bf16.mxu0 %v492
  %1888 = vmatmul.mubr.bf16.gmra.mrb[0].mxu0 %v491
  %v1889 = vpop.f32.mrb[0].mxu0
  %v1890 = vadd.f32 %v1850, %v1889
  %v1891 = vpop.f32.mrb[0].mxu0
  %v1892 = vpop.f32.mrb[0].mxu0
  %v1893 = vpop.f32.mrb[0].mxu0
  %1894 = vdwg.mxu0
  %1895 = vmatprep.subr.bf16.mxu0 0
  %1896 = vmatpush1.bf16.msra.mxu0 %v1399
  %1897 = vmatprep.subr.bf16.mxu0 0
  %1898 = vmatpush1.bf16.msra.mxu0 %v1400
  %1899 = vmatprep.subr.bf16.mxu0 0
  %1900 = vmatpush1.bf16.msra.mxu0 %v1401
  %1901 = vmatprep.subr.bf16.mxu0 0
  %1902 = vmatpush1.bf16.msra.mxu0 %v1402
  %1903 = vmatprep.subr.bf16.mxu0 0
  %1904 = vmatpush1.bf16.msra.mxu0 %v1403
  %1905 = vmatprep.subr.bf16.mxu0 0
  %1906 = vmatpush1.bf16.msra.mxu0 %v1404
  %1907 = vmatprep.subr.bf16.mxu0 0
  %1908 = vmatpush1.bf16.msra.mxu0 %v1405
  %1909 = vmatprep.subr.bf16.mxu0 0
  %1910 = vmatpush1.bf16.msra.mxu0 %v1406
  %1911 = vmatprep.subr.bf16.mxu0 0
  %1912 = vmatpush1.bf16.msra.mxu0 %v1407
  %1913 = vmatprep.subr.bf16.mxu0 0
  %1914 = vmatpush1.bf16.msra.mxu0 %v1408
  %1915 = vmatprep.subr.bf16.mxu0 0
  %1916 = vmatpush1.bf16.msra.mxu0 %v1409
  %1917 = vmatprep.subr.bf16.mxu0 0
  %1918 = vmatpush1.bf16.msra.mxu0 %v1410
  %1919 = vmatprep.subr.bf16.mxu0 0
  %1920 = vmatpush1.bf16.msra.mxu0 %v1411
  %1921 = vmatprep.subr.bf16.mxu0 0
  %1922 = vmatpush1.bf16.msra.mxu0 %v1412
  %1923 = vmatprep.subr.bf16.mxu0 0
  %1924 = vmatpush1.bf16.msra.mxu0 %v1413
  %1925 = vmatprep.subr.bf16.mxu0 0
  %1926 = vmatpush1.bf16.msra.mxu0 %v1414
  %1927 = vmatprep.mubr.bf16.mxu0 %v494
  %1928 = vmatmul.mubr.bf16.gmra.mrb[0].mxu0 %v493
  %v1929 = vpop.f32.mrb[0].mxu0
  %v1930 = vadd.f32 %v1890, %v1929
  %v1931 = vpop.f32.mrb[0].mxu0
  %v1932 = vpop.f32.mrb[0].mxu0
  %v1933 = vpop.f32.mrb[0].mxu0
  %1934 = vdwg.mxu0
  %1935 = vmatprep.subr.bf16.mxu0 0
  %1936 = vmatpush1.bf16.msra.mxu0 %v1415
  %1937 = vmatprep.subr.bf16.mxu0 0
  %1938 = vmatpush1.bf16.msra.mxu0 %v1416
  %1939 = vmatprep.subr.bf16.mxu0 0
  %1940 = vmatpush1.bf16.msra.mxu0 %v1417
  %1941 = vmatprep.subr.bf16.mxu0 0
  %1942 = vmatpush1.bf16.msra.mxu0 %v1418
  %1943 = vmatprep.subr.bf16.mxu0 0
  %1944 = vmatpush1.bf16.msra.mxu0 %v1419
  %1945 = vmatprep.subr.bf16.mxu0 0
  %1946 = vmatpush1.bf16.msra.mxu0 %v1420
  %1947 = vmatprep.subr.bf16.mxu0 0
  %1948 = vmatpush1.bf16.msra.mxu0 %v1421
  %1949 = vmatprep.subr.bf16.mxu0 0
  %1950 = vmatpush1.bf16.msra.mxu0 %v1422
  %1951 = vmatprep.subr.bf16.mxu0 0
  %1952 = vmatpush1.bf16.msra.mxu0 %v1423
  %1953 = vmatprep.subr.bf16.mxu0 0
  %1954 = vmatpush1.bf16.msra.mxu0 %v1424
  %1955 = vmatprep.subr.bf16.mxu0 0
  %1956 = vmatpush1.bf16.msra.mxu0 %v1425
  %1957 = vmatprep.subr.bf16.mxu0 0
  %1958 = vmatpush1.bf16.msra.mxu0 %v1426
  %1959 = vmatprep.subr.bf16.mxu0 0
  %1960 = vmatpush1.bf16.msra.mxu0 %v1427
  %1961 = vmatprep.subr.bf16.mxu0 0
  %1962 = vmatpush1.bf16.msra.mxu0 %v1428
  %1963 = vmatprep.subr.bf16.mxu0 0
  %1964 = vmatpush1.bf16.msra.mxu0 %v1429
  %1965 = vmatprep.subr.bf16.mxu0 0
  %1966 = vmatpush1.bf16.msra.mxu0 %v1430
  %1967 = vmatprep.mubr.bf16.mxu0 %v496
  %1968 = vmatmul.mubr.bf16.gmra.mrb[0].mxu0 %v495
  %v1969 = vpop.f32.mrb[0].mxu0
  %v1970 = vadd.f32 %v1930, %v1969
  %v1971 = vpop.f32.mrb[0].mxu0
  %v1972 = vpop.f32.mrb[0].mxu0
  %v1973 = vpop.f32.mrb[0].mxu0
  %1974 = vdwg.mxu0
  %1975 = vmatprep.subr.bf16.mxu0 0
  %1976 = vmatpush1.bf16.msra.mxu0 %v1431
  %1977 = vmatprep.subr.bf16.mxu0 0
  %1978 = vmatpush1.bf16.msra.mxu0 %v1432
  %1979 = vmatprep.subr.bf16.mxu0 0
  %1980 = vmatpush1.bf16.msra.mxu0 %v1433
  %1981 = vmatprep.subr.bf16.mxu0 0
  %1982 = vmatpush1.bf16.msra.mxu0 %v1434
  %1983 = vmatprep.subr.bf16.mxu0 0
  %1984 = vmatpush1.bf16.msra.mxu0 %v1435
  %1985 = vmatprep.subr.bf16.mxu0 0
  %1986 = vmatpush1.bf16.msra.mxu0 %v1436
  %1987 = vmatprep.subr.bf16.mxu0 0
  %1988 = vmatpush1.bf16.msra.mxu0 %v1437
  %1989 = vmatprep.subr.bf16.mxu0 0
  %1990 = vmatpush1.bf16.msra.mxu0 %v1438
  %1991 = vmatprep.subr.bf16.mxu0 0
  %1992 = vmatpush1.bf16.msra.mxu0 %v1439
  %1993 = vmatprep.subr.bf16.mxu0 0
  %1994 = vmatpush1.bf16.msra.mxu0 %v1440
  %1995 = vmatprep.subr.bf16.mxu0 0
  %1996 = vmatpush1.bf16.msra.mxu0 %v1441
  %1997 = vmatprep.subr.bf16.mxu0 0
  %1998 = vmatpush1.bf16.msra.mxu0 %v1442
  %1999 = vmatprep.subr.bf16.mxu0 0
  %2000 = vmatpush1.bf16.msra.mxu0 %v1443
  %2001 = vmatprep.subr.bf16.mxu0 0
  %2002 = vmatpush1.bf16.msra.mxu0 %v1444
  %2003 = vmatprep.subr.bf16.mxu0 0
  %2004 = vmatpush1.bf16.msra.mxu0 %v1445
  %2005 = vmatprep.subr.bf16.mxu0 0
  %2006 = vmatpush1.bf16.msra.mxu0 %v1446
  %2007 = vmatprep.mubr.bf16.mxu0 %v498
  %2008 = vmatmul.mubr.bf16.gmra.mrb[0].mxu0 %v497
  %v2009 = vpop.f32.mrb[0].mxu0
  %v2010 = vadd.f32 %v1970, %v2009
  %v2011 = vpop.f32.mrb[0].mxu0
  %v2012 = vpop.f32.mrb[0].mxu0
  %v2013 = vpop.f32.mrb[0].mxu0
  %2014 = vdwg.mxu0
  %2015 = vmatprep.subr.bf16.mxu0 0
  %2016 = vmatpush1.bf16.msra.mxu0 %v1447
  %2017 = vmatprep.subr.bf16.mxu0 0
  %2018 = vmatpush1.bf16.msra.mxu0 %v1448
  %2019 = vmatprep.subr.bf16.mxu0 0
  %2020 = vmatpush1.bf16.msra.mxu0 %v1449
  %2021 = vmatprep.subr.bf16.mxu0 0
  %2022 = vmatpush1.bf16.msra.mxu0 %v1450
  %2023 = vmatprep.subr.bf16.mxu0 0
  %2024 = vmatpush1.bf16.msra.mxu0 %v1451
  %2025 = vmatprep.subr.bf16.mxu0 0
  %2026 = vmatpush1.bf16.msra.mxu0 %v1452
  %2027 = vmatprep.subr.bf16.mxu0 0
  %2028 = vmatpush1.bf16.msra.mxu0 %v1453
  %2029 = vmatprep.subr.bf16.mxu0 0
  %2030 = vmatpush1.bf16.msra.mxu0 %v1454
  %2031 = vmatprep.subr.bf16.mxu0 0
  %2032 = vmatpush1.bf16.msra.mxu0 %v1455
  %2033 = vmatprep.subr.bf16.mxu0 0
  %2034 = vmatpush1.bf16.msra.mxu0 %v1456
  %2035 = vmatprep.subr.bf16.mxu0 0
  %2036 = vmatpush1.bf16.msra.mxu0 %v1457
  %2037 = vmatprep.subr.bf16.mxu0 0
  %2038 = vmatpush1.bf16.msra.mxu0 %v1458
  %2039 = vmatprep.subr.bf16.mxu0 0
  %2040 = vmatpush1.bf16.msra.mxu0 %v1459
  %2041 = vmatprep.subr.bf16.mxu0 0
  %2042 = vmatpush1.bf16.msra.mxu0 %v1460
  %2043 = vmatprep.subr.bf16.mxu0 0
  %2044 = vmatpush1.bf16.msra.mxu0 %v1461
  %2045 = vmatprep.subr.bf16.mxu0 0
  %2046 = vmatpush1.bf16.msra.mxu0 %v1462
  %2047 = vmatprep.mubr.bf16.mxu0 %v500
  %2048 = vmatmul.mubr.bf16.gmra.mrb[0].mxu0 %v499
  %v2049 = vpop.f32.mrb[0].mxu0
  %v2050 = vadd.f32 %v2010, %v2049
  %v2051 = vpop.f32.mrb[0].mxu0
  %v2052 = vpop.f32.mrb[0].mxu0
  %v2053 = vpop.f32.mrb[0].mxu0
  %2054 = vdwg.mxu0
  %2055 = vmatprep.subr.bf16.mxu0 0
  %2056 = vmatpush1.bf16.msra.mxu0 %v1463
  %2057 = vmatprep.subr.bf16.mxu0 0
  %2058 = vmatpush1.bf16.msra.mxu0 %v1464
  %2059 = vmatprep.subr.bf16.mxu0 0
  %2060 = vmatpush1.bf16.msra.mxu0 %v1465
  %2061 = vmatprep.subr.bf16.mxu0 0
  %2062 = vmatpush1.bf16.msra.mxu0 %v1466
  %2063 = vmatprep.subr.bf16.mxu0 0
  %2064 = vmatpush1.bf16.msra.mxu0 %v1467
  %2065 = vmatprep.subr.bf16.mxu0 0
  %2066 = vmatpush1.bf16.msra.mxu0 %v1468
  %2067 = vmatprep.subr.bf16.mxu0 0
  %2068 = vmatpush1.bf16.msra.mxu0 %v1469
  %2069 = vmatprep.subr.bf16.mxu0 0
  %2070 = vmatpush1.bf16.msra.mxu0 %v1470
  %2071 = vmatprep.subr.bf16.mxu0 0
  %2072 = vmatpush1.bf16.msra.mxu0 %v1471
  %2073 = vmatprep.subr.bf16.mxu0 0
  %2074 = vmatpush1.bf16.msra.mxu0 %v1472
  %2075 = vmatprep.subr.bf16.mxu0 0
  %2076 = vmatpush1.bf16.msra.mxu0 %v1473
  %2077 = vmatprep.subr.bf16.mxu0 0
  %2078 = vmatpush1.bf16.msra.mxu0 %v1474
  %2079 = vmatprep.subr.bf16.mxu0 0
  %2080 = vmatpush1.bf16.msra.mxu0 %v1475
  %2081 = vmatprep.subr.bf16.mxu0 0
  %2082 = vmatpush1.bf16.msra.mxu0 %v1476
  %2083 = vmatprep.subr.bf16.mxu0 0
  %2084 = vmatpush1.bf16.msra.mxu0 %v1477
  %2085 = vmatprep.subr.bf16.mxu0 0
  %2086 = vmatpush1.bf16.msra.mxu0 %v1478
  %2087 = vmatprep.mubr.bf16.mxu0 %v502
  %2088 = vmatmul.mubr.bf16.gmra.mrb[0].mxu0 %v501
  %v2089 = vpop.f32.mrb[0].mxu0
  %v2090 = vadd.f32 %v2050, %v2089
  %v2091 = vpop.f32.mrb[0].mxu0
  %v2092 = vpop.f32.mrb[0].mxu0
  %v2093 = vpop.f32.mrb[0].mxu0
  %2094 = vdwg.mxu0
  %2095 = vmatprep.subr.bf16.mxu0 0
  %2096 = vmatpush1.bf16.msra.mxu0 %v1479
  %2097 = vmatprep.subr.bf16.mxu0 0
  %2098 = vmatpush1.bf16.msra.mxu0 %v1480
  %2099 = vmatprep.subr.bf16.mxu0 0
  %2100 = vmatpush1.bf16.msra.mxu0 %v1481
  %2101 = vmatprep.subr.bf16.mxu0 0
  %2102 = vmatpush1.bf16.msra.mxu0 %v1482
  %2103 = vmatprep.subr.bf16.mxu0 0
  %2104 = vmatpush1.bf16.msra.mxu0 %v1483
  %2105 = vmatprep.subr.bf16.mxu0 0
  %2106 = vmatpush1.bf16.msra.mxu0 %v1484
  %2107 = vmatprep.subr.bf16.mxu0 0
  %2108 = vmatpush1.bf16.msra.mxu0 %v1485
  %2109 = vmatprep.subr.bf16.mxu0 0
  %2110 = vmatpush1.bf16.msra.mxu0 %v1486
  %2111 = vmatprep.subr.bf16.mxu0 0
  %2112 = vmatpush1.bf16.msra.mxu0 %v1487
  %2113 = vmatprep.subr.bf16.mxu0 0
  %2114 = vmatpush1.bf16.msra.mxu0 %v1488
  %2115 = vmatprep.subr.bf16.mxu0 0
  %2116 = vmatpush1.bf16.msra.mxu0 %v1489
  %2117 = vmatprep.subr.bf16.mxu0 0
  %2118 = vmatpush1.bf16.msra.mxu0 %v1490
  %2119 = vmatprep.subr.bf16.mxu0 0
  %2120 = vmatpush1.bf16.msra.mxu0 %v1491
  %2121 = vmatprep.subr.bf16.mxu0 0
  %2122 = vmatpush1.bf16.msra.mxu0 %v1492
  %2123 = vmatprep.subr.bf16.mxu0 0
  %2124 = vmatpush1.bf16.msra.mxu0 %v1493
  %2125 = vmatprep.subr.bf16.mxu0 0
  %2126 = vmatpush1.bf16.msra.mxu0 %v1494
  %2127 = vmatprep.mubr.bf16.mxu0 %v504
  %2128 = vmatmul.mubr.bf16.gmra.mrb[0].mxu0 %v503
  %v2129 = vpop.f32.mrb[0].mxu0
  %v2130 = vadd.f32 %v2090, %v2129
  %v2131 = vpop.f32.mrb[0].mxu0
  %v2132 = vpop.f32.mrb[0].mxu0
  %v2133 = vpop.f32.mrb[0].mxu0
  %2134 = vdwg.mxu0
  %2135 = vmatprep.subr.bf16.mxu0 0
  %2136 = vmatpush1.bf16.msra.mxu0 %v1495
  %2137 = vmatprep.subr.bf16.mxu0 0
  %2138 = vmatpush1.bf16.msra.mxu0 %v1496
  %2139 = vmatprep.subr.bf16.mxu0 0
  %2140 = vmatpush1.bf16.msra.mxu0 %v1497
  %2141 = vmatprep.subr.bf16.mxu0 0
  %2142 = vmatpush1.bf16.msra.mxu0 %v1498
  %2143 = vmatprep.subr.bf16.mxu0 0
  %2144 = vmatpush1.bf16.msra.mxu0 %v1499
  %2145 = vmatprep.subr.bf16.mxu0 0
  %2146 = vmatpush1.bf16.msra.mxu0 %v1500
  %2147 = vmatprep.subr.bf16.mxu0 0
  %2148 = vmatpush1.bf16.msra.mxu0 %v1501
  %2149 = vmatprep.subr.bf16.mxu0 0
  %2150 = vmatpush1.bf16.msra.mxu0 %v1502
  %2151 = vmatprep.subr.bf16.mxu0 0
  %2152 = vmatpush1.bf16.msra.mxu0 %v1503
  %2153 = vmatprep.subr.bf16.mxu0 0
  %2154 = vmatpush1.bf16.msra.mxu0 %v1504
  %2155 = vmatprep.subr.bf16.mxu0 0
  %2156 = vmatpush1.bf16.msra.mxu0 %v1505
  %2157 = vmatprep.subr.bf16.mxu0 0
  %2158 = vmatpush1.bf16.msra.mxu0 %v1506
  %2159 = vmatprep.subr.bf16.mxu0 0
  %2160 = vmatpush1.bf16.msra.mxu0 %v1507
  %2161 = vmatprep.subr.bf16.mxu0 0
  %2162 = vmatpush1.bf16.msra.mxu0 %v1508
  %2163 = vmatprep.subr.bf16.mxu0 0
  %2164 = vmatpush1.bf16.msra.mxu0 %v1509
  %2165 = vmatprep.subr.bf16.mxu0 0
  %2166 = vmatpush1.bf16.msra.mxu0 %v1510
  %2167 = vmatprep.mubr.bf16.mxu0 %v506
  %2168 = vmatmul.mubr.bf16.gmra.mrb[0].mxu0 %v505
  %v2169 = vpop.f32.mrb[0].mxu0
  %v2170 = vadd.f32 %v2130, %v2169
  %v2171 = vpop.f32.mrb[0].mxu0
  %v2172 = vpop.f32.mrb[0].mxu0
  %v2173 = vpop.f32.mrb[0].mxu0
  %2174 = vdwg.mxu0
  %2175 = vmatprep.subr.bf16.mxu0 0
  %2176 = vmatpush1.bf16.msra.mxu0 %v1511
  %2177 = vmatprep.subr.bf16.mxu0 0
  %2178 = vmatpush1.bf16.msra.mxu0 %v1512
  %2179 = vmatprep.subr.bf16.mxu0 0
  %2180 = vmatpush1.bf16.msra.mxu0 %v1513
  %2181 = vmatprep.subr.bf16.mxu0 0
  %2182 = vmatpush1.bf16.msra.mxu0 %v1514
  %2183 = vmatprep.subr.bf16.mxu0 0
  %2184 = vmatpush1.bf16.msra.mxu0 %v1515
  %2185 = vmatprep.subr.bf16.mxu0 0
  %2186 = vmatpush1.bf16.msra.mxu0 %v1516
  %2187 = vmatprep.subr.bf16.mxu0 0
  %2188 = vmatpush1.bf16.msra.mxu0 %v1517
  %2189 = vmatprep.subr.bf16.mxu0 0
  %2190 = vmatpush1.bf16.msra.mxu0 %v1518
  %2191 = vmatprep.subr.bf16.mxu0 0
  %2192 = vmatpush1.bf16.msra.mxu0 %v1519
  %2193 = vmatprep.subr.bf16.mxu0 0
  %2194 = vmatpush1.bf16.msra.mxu0 %v1520
  %2195 = vmatprep.subr.bf16.mxu0 0
  %2196 = vmatpush1.bf16.msra.mxu0 %v1521
  %2197 = vmatprep.subr.bf16.mxu0 0
  %2198 = vmatpush1.bf16.msra.mxu0 %v1522
  %2199 = vmatprep.subr.bf16.mxu0 0
  %2200 = vmatpush1.bf16.msra.mxu0 %v1523
  %2201 = vmatprep.subr.bf16.mxu0 0
  %2202 = vmatpush1.bf16.msra.mxu0 %v1524
  %2203 = vmatprep.subr.bf16.mxu0 0
  %2204 = vmatpush1.bf16.msra.mxu0 %v1525
  %2205 = vmatprep.subr.bf16.mxu0 0
  %2206 = vmatpush1.bf16.msra.mxu0 %v1526
  %2207 = vmatprep.mubr.bf16.mxu0 %v508
  %2208 = vmatmul.mubr.bf16.gmra.mrb[0].mxu0 %v507
  %v2209 = vpop.f32.mrb[0].mxu0
  %v2210 = vadd.f32 %v2170, %v2209
  %v2211 = vpop.f32.mrb[0].mxu0
  %v2212 = vpop.f32.mrb[0].mxu0
  %v2213 = vpop.f32.mrb[0].mxu0
  %2214 = vdwg.mxu0
  %2215 = vmatprep.subr.bf16.mxu0 0
  %2216 = vmatpush1.bf16.msra.mxu0 %v1527
  %2217 = vmatprep.subr.bf16.mxu0 0
  %2218 = vmatpush1.bf16.msra.mxu0 %v1528
  %2219 = vmatprep.subr.bf16.mxu0 0
  %2220 = vmatpush1.bf16.msra.mxu0 %v1529
  %2221 = vmatprep.subr.bf16.mxu0 0
  %2222 = vmatpush1.bf16.msra.mxu0 %v1530
  %2223 = vmatprep.subr.bf16.mxu0 0
  %2224 = vmatpush1.bf16.msra.mxu0 %v1531
  %2225 = vmatprep.subr.bf16.mxu0 0
  %2226 = vmatpush1.bf16.msra.mxu0 %v1532
  %2227 = vmatprep.subr.bf16.mxu0 0
  %2228 = vmatpush1.bf16.msra.mxu0 %v1533
  %2229 = vmatprep.subr.bf16.mxu0 0
  %2230 = vmatpush1.bf16.msra.mxu0 %v1534
  %2231 = vmatprep.subr.bf16.mxu0 0
  %2232 = vmatpush1.bf16.msra.mxu0 0
  %2233 = vmatprep.subr.bf16.mxu0 0
  %2234 = vmatpush1.bf16.msra.mxu0 0
  %2235 = vmatprep.subr.bf16.mxu0 0
  %2236 = vmatpush1.bf16.msra.mxu0 0
  %2237 = vmatprep.subr.bf16.mxu0 0
  %2238 = vmatpush1.bf16.msra.mxu0 0
  %2239 = vmatprep.subr.bf16.mxu0 0
  %2240 = vmatpush1.bf16.msra.mxu0 0
  %2241 = vmatprep.subr.bf16.mxu0 0
  %2242 = vmatpush1.bf16.msra.mxu0 0
  %2243 = vmatprep.subr.bf16.mxu0 0
  %2244 = vmatpush1.bf16.msra.mxu0 0
  %2245 = vmatprep.subr.bf16.mxu0 0
  %2246 = vmatpush1.bf16.msra.mxu0 0
  %2247 = vmatprep.mubr.bf16.mxu0 0
  %2248 = vmatmul.mubr.bf16.gmra.mrb[0].mxu0 %v509
  %v2249 = vpop.f32.mrb[0].mxu0
  %v2250 = vadd.f32 %v2210, %v2249
  %v2251 = vpop.f32.mrb[0].mxu0
  %v2252 = vpop.f32.mrb[0].mxu0
  %v2253 = vpop.f32.mrb[0].mxu0
  %2254 = vdwg.mxu0
  %v2255 = vmax.f32 %v2250, 0.0
  %v2256 = vpack.c.bf16 %v2255, %v2255
  %v2257 = vld [vmem:[%s3] sm:$0xf]
  %v2258 = vld [vmem:[%s3 + $0x4] sm:$0xf]
  %v2259 = vld [vmem:[%s3 + $0x8] sm:$0xf]
  %v2260 = vld [vmem:[%s3 + $0xc] sm:$0xf]
  %v2261 = vld [vmem:[%s3 + $0x10] sm:$0xf]
  %v2262 = vld [vmem:[%s3 + $0x14] sm:$0xf]
  %v2263 = vld [vmem:[%s3 + $0x18] sm:$0xf]
  %v2264 = vld [vmem:[%s3 + $0x1c] sm:$0xf]
  %v2265 = vld [vmem:[%s3 + $0x20] sm:$0xf]
  %v2266 = vld [vmem:[%s3 + $0x24] sm:$0xf]
  %v2267 = vld [vmem:[%s3 + $0x28] sm:$0xf]
  %v2268 = vld [vmem:[%s3 + $0x2c] sm:$0xf]
  %v2269 = vld [vmem:[%s3 + $0x30] sm:$0xf]
  %v2270 = vld [vmem:[%s3 + $0x34] sm:$0xf]
  %v2271 = vld [vmem:[%s3 + $0x38] sm:$0xf]
  %v2272 = vld [vmem:[%s3 + $0x3c] sm:$0xf]
  %v2273 = vld [vmem:[%s4] sm:$0x1]
  %v2275 = vlaneseq
  %v2276 = vshrl.u32 %v2275, 7
  %v2277 = vsub.s32 0, %v2276
  %v2278 = vrot.slane %v2273, %v2277
  %v2296 = vunpack.c.l.b16 %v2257
  %v2297 = vunpack.c.l.b16 %v2258
  %v2298 = vunpack.c.l.b16 %v2259
  %v2299 = vunpack.c.l.b16 %v2260
  %v2300 = vunpack.c.l.b16 %v2261
  %v2301 = vunpack.c.l.b16 %v2262
  %v2302 = vunpack.c.l.b16 %v2263
  %v2303 = vunpack.c.l.b16 %v2264
  %v2304 = vunpack.c.l.b16 %v2265
  %v2305 = vunpack.c.l.b16 %v2266
  %v2306 = vunpack.c.l.b16 %v2267
  %v2307 = vunpack.c.l.b16 %v2268
  %v2308 = vunpack.c.l.b16 %v2269
  %v2309 = vunpack.c.l.b16 %v2270
  %v2310 = vunpack.c.l.b16 %v2271
  %v2311 = vunpack.c.l.b16 %v2272
  %v2312 = vpack.c.b16 %v2297, %v2296
  %v2313 = vpack.c.b16 %v2299, %v2298
  %v2314 = vpack.c.b16 %v2301, %v2300
  %v2315 = vpack.c.b16 %v2303, %v2302
  %v2316 = vpack.c.b16 %v2305, %v2304
  %v2317 = vpack.c.b16 %v2307, %v2306
  %v2318 = vpack.c.b16 %v2309, %v2308
  %v2319 = vpack.c.b16 %v2311, %v2310
  %2328 = vmatprep.subr.bf16.mxu0 0
  %2329 = vmatpush1.bf16.msra.mxu0 %v2312
  %2330 = vmatprep.subr.bf16.mxu0 0
  %2331 = vmatpush1.bf16.msra.mxu0 %v2313
  %2332 = vmatprep.subr.bf16.mxu0 0
  %2333 = vmatpush1.bf16.msra.mxu0 %v2314
  %2334 = vmatprep.subr.bf16.mxu0 0
  %2335 = vmatpush1.bf16.msra.mxu0 %v2315
  %2336 = vmatprep.subr.bf16.mxu0 0
  %2337 = vmatpush1.bf16.msra.mxu0 %v2316
  %2338 = vmatprep.subr.bf16.mxu0 0
  %2339 = vmatpush1.bf16.msra.mxu0 %v2317
  %2340 = vmatprep.subr.bf16.mxu0 0
  %2341 = vmatpush1.bf16.msra.mxu0 %v2318
  %2342 = vmatprep.subr.bf16.mxu0 0
  %2343 = vmatpush1.bf16.msra.mxu0 %v2319
  %2344 = vmatprep.subr.bf16.mxu0 0
  %2345 = vmatpush1.bf16.msra.mxu0 0
  %2346 = vmatprep.subr.bf16.mxu0 0
  %2347 = vmatpush1.bf16.msra.mxu0 0
  %2348 = vmatprep.subr.bf16.mxu0 0
  %2349 = vmatpush1.bf16.msra.mxu0 0
  %2350 = vmatprep.subr.bf16.mxu0 0
  %2351 = vmatpush1.bf16.msra.mxu0 0
  %2352 = vmatprep.subr.bf16.mxu0 0
  %2353 = vmatpush1.bf16.msra.mxu0 0
  %2354 = vmatprep.subr.bf16.mxu0 0
  %2355 = vmatpush1.bf16.msra.mxu0 0
  %2356 = vmatprep.subr.bf16.mxu0 0
  %2357 = vmatpush1.bf16.msra.mxu0 0
  %2358 = vmatprep.subr.bf16.mxu0 0
  %2359 = vmatpush1.bf16.msra.mxu0 0
  %2360 = vmatprep.mubr.bf16.mxu0 0
  %2361 = vmatmul.mubr.bf16.gmra.mrb[0].mxu0 %v2256
  %v2362 = vpop.f32.mrb[0].mxu0
  %v2363 = vadd.f32 %v2278, %v2362
  %v2364 = vpop.f32.mrb[0].mxu0
  %v2365 = vpop.f32.mrb[0].mxu0
  %v2366 = vpop.f32.mrb[0].mxu0
  %2367 = vdwg.mxu0
  %v2368 = vmax.f32 %v2363, 0.0
  %v2369 = vpack.c.bf16 %v2368, %v2368
  %v2370 = vld [vmem:[%s5] sm:$0xf]
  %v2371 = vld [vmem:[%s5 + $0x4] sm:$0xf]
  %v2372 = vld [vmem:[%s5 + $0x8] sm:$0xf]
  %v2373 = vld [vmem:[%s5 + $0xc] sm:$0xf]
  %v2374 = vld [vmem:[%s5 + $0x10] sm:$0xf]
  %v2375 = vld [vmem:[%s5 + $0x14] sm:$0xf]
  %v2376 = vld [vmem:[%s5 + $0x18] sm:$0xf]
  %v2377 = vld [vmem:[%s5 + $0x1c] sm:$0xf]
  %v2378 = vld [vmem:[%s5 + $0x20] sm:$0xf]
  %v2379 = vld [vmem:[%s5 + $0x24] sm:$0xf]
  %v2380 = vld [vmem:[%s5 + $0x28] sm:$0xf]
  %v2381 = vld [vmem:[%s5 + $0x2c] sm:$0xf]
  %v2382 = vld [vmem:[%s5 + $0x30] sm:$0xf]
  %v2383 = vld [vmem:[%s5 + $0x34] sm:$0xf]
  %v2384 = vld [vmem:[%s5 + $0x38] sm:$0xf]
  %v2385 = vld [vmem:[%s5 + $0x3c] sm:$0xf]
  %v2386 = vld [vmem:[%s6] sm:$0x1]
  %v2388 = vlaneseq
  %v2389 = vshrl.u32 %v2388, 7
  %v2390 = vsub.s32 0, %v2389
  %v2391 = vrot.slane %v2386, %v2390
  %v2409 = vunpack.c.l.b16 %v2370
  %v2410 = vunpack.c.l.b16 %v2371
  %v2411 = vunpack.c.l.b16 %v2372
  %v2412 = vunpack.c.l.b16 %v2373
  %v2413 = vunpack.c.l.b16 %v2374
  %v2414 = vunpack.c.l.b16 %v2375
  %v2415 = vunpack.c.l.b16 %v2376
  %v2416 = vunpack.c.l.b16 %v2377
  %v2417 = vunpack.c.l.b16 %v2378
  %v2418 = vunpack.c.l.b16 %v2379
  %v2419 = vunpack.c.l.b16 %v2380
  %v2420 = vunpack.c.l.b16 %v2381
  %v2421 = vunpack.c.l.b16 %v2382
  %v2422 = vunpack.c.l.b16 %v2383
  %v2423 = vunpack.c.l.b16 %v2384
  %v2424 = vunpack.c.l.b16 %v2385
  %v2425 = vpack.c.b16 %v2410, %v2409
  %v2426 = vpack.c.b16 %v2412, %v2411
  %v2427 = vpack.c.b16 %v2414, %v2413
  %v2428 = vpack.c.b16 %v2416, %v2415
  %v2429 = vpack.c.b16 %v2418, %v2417
  %v2430 = vpack.c.b16 %v2420, %v2419
  %v2431 = vpack.c.b16 %v2422, %v2421
  %v2432 = vpack.c.b16 %v2424, %v2423
  %2441 = vmatprep.subr.bf16.mxu0 0
  %2442 = vmatpush1.bf16.msra.mxu0 %v2425
  %2443 = vmatprep.subr.bf16.mxu0 0
  %2444 = vmatpush1.bf16.msra.mxu0 %v2426
  %2445 = vmatprep.subr.bf16.mxu0 0
  %2446 = vmatpush1.bf16.msra.mxu0 %v2427
  %2447 = vmatprep.subr.bf16.mxu0 0
  %2448 = vmatpush1.bf16.msra.mxu0 %v2428
  %2449 = vmatprep.subr.bf16.mxu0 0
  %2450 = vmatpush1.bf16.msra.mxu0 %v2429
  %2451 = vmatprep.subr.bf16.mxu0 0
  %2452 = vmatpush1.bf16.msra.mxu0 %v2430
  %2453 = vmatprep.subr.bf16.mxu0 0
  %2454 = vmatpush1.bf16.msra.mxu0 %v2431
  %2455 = vmatprep.subr.bf16.mxu0 0
  %2456 = vmatpush1.bf16.msra.mxu0 %v2432
  %2457 = vmatprep.subr.bf16.mxu0 0
  %2458 = vmatpush1.bf16.msra.mxu0 0
  %2459 = vmatprep.subr.bf16.mxu0 0
  %2460 = vmatpush1.bf16.msra.mxu0 0
  %2461 = vmatprep.subr.bf16.mxu0 0
  %2462 = vmatpush1.bf16.msra.mxu0 0
  %2463 = vmatprep.subr.bf16.mxu0 0
  %2464 = vmatpush1.bf16.msra.mxu0 0
  %2465 = vmatprep.subr.bf16.mxu0 0
  %2466 = vmatpush1.bf16.msra.mxu0 0
  %2467 = vmatprep.subr.bf16.mxu0 0
  %2468 = vmatpush1.bf16.msra.mxu0 0
  %2469 = vmatprep.subr.bf16.mxu0 0
  %2470 = vmatpush1.bf16.msra.mxu0 0
  %2471 = vmatprep.subr.bf16.mxu0 0
  %2472 = vmatpush1.bf16.msra.mxu0 0
  %2473 = vmatprep.mubr.bf16.mxu0 0
  %2474 = vmatmul.mubr.bf16.gmra.mrb[0].mxu0 %v2369
  %v2475 = vpop.f32.mrb[0].mxu0
  %v2476 = vadd.f32 %v2391, %v2475
  %v2477 = vpop.f32.mrb[0].mxu0
  %v2478 = vpop.f32.mrb[0].mxu0
  %v2479 = vpop.f32.mrb[0].mxu0
  %2480 = vdwg.mxu0
  %2481 = vst [vmem:[%s7] sm:$0xff] %v2476
  // Predicated region
  $region30: #{net_forward.5} parent=0 // pred_check
    _
  $region31: #{net_forward.5} parent=0 // pred_check_branch
    %2483 = sbr.rel (0) target = $region33
  $region32: #{net_forward.5} parent=0 // pred_region
    _
  $region33: #{net_forward.5} parent=0 // pred_fallthru
    _
  // Predicated region
  $region34: #{net_forward.5} parent=0 // pred_check
    _
  $region35: #{net_forward.5} parent=0 // pred_check_branch
    %2485 = sbr.rel (0) target = $region37
  $region36: #{net_forward.5} parent=0 // pred_region
    _
  $region37: #{net_forward.5} parent=0 // pred_fallthru
    _

</llo_original>
